<compile_context>
chip_gen: v5e
topology: v5e:2x2
jax: 0.10.0
libtpu: 0.0.40
codegen_flags: <defaults>
</compile_context>

<pallas_src>
import functools
import math

import numpy as np
import jax
import jax.numpy as jnp
from jax.experimental import pallas as pl
from jax.experimental.pallas import tpu as pltpu

SLOPE = 0.2     # LeakyReLU negative slope
P = 5           # zero ring carried by every padded-flat activation


def _lrelu(x):
    return jnp.where(x >= 0, x, x * SLOPE)


def _geom(H, W):
    Hp, Wp = H + 2 * P, W + 2 * P
    return Hp, Wp, Hp * Wp


def _guard_rows(reach, Wp):
    g = reach * Wp + reach
    return (g + 15) // 16 * 16   # keep the interior store sublane-aligned (bf16)


# ------------------------------ in-kernel helpers ----------------------------


def _zero_guards(buf, Mp):
    g = (buf.shape[0] - Mp) // 2
    z = jnp.zeros((g, buf.shape[1]), buf.dtype)
    buf[0:g, :] = z
    buf[g + Mp:, :] = z


def _sconv(bufs, w_ref, b_ref, *, Mp, Wp, kh, kw, dil):
    """'same' conv = kh*kw shifted GEMMs over zero-guarded VMEM buffers.

    bufs: list of (buf_ref, cin) whose channel concat is the conv input.
    w_ref: (kh*kw, sum(cin), cout) bf16.   b_ref: (1, cout) f32.
    Returns f32 (Mp, cout) on the padded grid (ring rows are garbage and must be
    masked by the caller before further use / store).
    """
    cout = w_ref.shape[-1]
    ch = (kh - 1) // 2 * dil
    cw = (kw - 1) // 2 * dil
    acc = jnp.zeros((Mp, cout), jnp.float32)
    for i in range(kh):
        for j in range(kw):
            off = (i * dil - ch) * Wp + (j * dil - cw)
            woff = 0
            for buf, cin in bufs:
                g = (buf.shape[0] - Mp) // 2
                tap = buf[g + off:g + off + Mp, 0:cin]
                acc = acc + jnp.dot(
                    tap, w_ref[i * kw + j, woff:woff + cin, :],
                    preferred_element_type=jnp.float32)
                woff += cin
    return acc + b_ref[...]


# --------------------------------- kernels -----------------------------------


def _conv_kernel(mask_ref, x_ref, w_ref, b_ref, o_ref, xbuf,
                 *, H, W, kh, kw, dil, act):
    _, Wp, Mp = _geom(H, W)
    _zero_guards(xbuf, Mp)
    g = (xbuf.shape[0] - Mp) // 2
    xbuf[g:g + Mp, :] = x_ref[0]
    y = _sconv([(xbuf, xbuf.shape[1])], w_ref, b_ref,
               Mp=Mp, Wp=Wp, kh=kh, kw=kw, dil=dil)
    if act:
        y = _lrelu(y)
    o_ref[0] = (y * mask_ref[...]).astype(o_ref.dtype)


def _rdb_kernel(*refs, H, W, has_outer):
    """Fused ResidualDenseBlock: 5 densely-connected 3x3 convs, LeakyReLUs,
    out5*0.2 + x, optionally (.)*0.2 + outer (the RRDB residual)."""
    _, Wp, Mp = _geom(H, W)
    it = iter(refs)
    mask_ref = next(it)
    x_ref = next(it)
    wb = [next(it) for _ in range(10)]              # (w, b) for c1..c5
    outer_ref = next(it) if has_outer else None
    o_ref = next(it)
    bufs = [next(it) for _ in range(5)]             # x, o1..o4 guarded buffers

    C = x_ref.shape[-1]
    G = wb[0].shape[-1]
    mask = mask_ref[...]

    for b in bufs:
        _zero_guards(b, Mp)
    gx = (bufs[0].shape[0] - Mp) // 2
    x = x_ref[0]
    bufs[0][gx:gx + Mp, :] = x

    segs = [(bufs[0], C)]
    for k in range(4):
        ok = _lrelu(_sconv(segs, wb[2 * k], wb[2 * k + 1],
                           Mp=Mp, Wp=Wp, kh=3, kw=3, dil=1))
        gk = (bufs[k + 1].shape[0] - Mp) // 2
        bufs[k + 1][gk:gk + Mp, :] = (ok * mask).astype(bufs[k + 1].dtype)
        segs.append((bufs[k + 1], G))
    o5 = _sconv(segs, wb[8], wb[9], Mp=Mp, Wp=Wp, kh=3, kw=3, dil=1)

    y = o5 * 0.2 + x.astype(jnp.float32)
    if has_outer:
        y = y * 0.2 + outer_ref[0].astype(jnp.float32)
    o_ref[0] = (y * mask).astype(o_ref.dtype)


def _rfb_kernel(*refs, H, W, nseg, res_scales, act):
    """Fused ReceptiveFieldBlock: shortcut + 4 branches + conv_linear,
    out = lin(cat(branches)) + 0.2*shortcut, then an optional chain of
    y = y*scale + residual, then optional LeakyReLU."""
    _, Wp, Mp = _geom(H, W)
    nres = len(res_scales)
    it = iter(refs)
    mask_ref = next(it)
    seg_refs = [next(it) for _ in range(nseg)]
    w_sc, b_sc = next(it), next(it)
    head_wb = [next(it) for _ in range(8)]          # b1_0, b2_0, b3_0, b4_0
    w11, b11 = next(it), next(it)
    w21, b21 = next(it), next(it)
    w22, b22 = next(it), next(it)
    w31, b31 = next(it), next(it)
    w32, b32 = next(it), next(it)
    w41, b41 = next(it), next(it)
    w42, b42 = next(it), next(it)
    w43, b43 = next(it), next(it)
    w_lin, b_lin = next(it), next(it)
    res_refs = [next(it) for _ in range(nres)]
    o_ref = next(it)
    pbuf = next(it)

    cins = [r.shape[-1] for r in seg_refs]
    bc = head_wb[0].shape[-1]
    c4a = head_wb[6].shape[-1]
    c4b = w42.shape[1]

    mask = mask_ref[...]
    _zero_guards(pbuf, Mp)
    g = (pbuf.shape[0] - Mp) // 2

    xs = [r[0] for r in seg_refs]                   # bf16 (Mp, cin_s) segments

    def head(w_ref, b_ref):
        # 1x1 conv over the (virtual) channel concat of the input segments.
        co = w_ref.shape[-1]
        acc = jnp.zeros((Mp, co), jnp.float32)
        off = 0
        for v, cs in zip(xs, cins):
            acc = acc + jnp.dot(v, w_ref[0, off:off + cs, :],
                                preferred_element_type=jnp.float32)
            off += cs
        return acc + b_ref[...]

    sc = head(w_sc, b_sc)
    h1 = _lrelu(head(head_wb[0], head_wb[1]))
    h2 = _lrelu(head(head_wb[2], head_wb[3]))
    h3 = _lrelu(head(head_wb[4], head_wb[5]))
    h4 = _lrelu(head(head_wb[6], head_wb[7]))

    def sconv_p(src, cin, w_ref, b_ref, kh, kw, dil):
        pbuf[g:g + Mp, 0:cin] = (src * mask).astype(pbuf.dtype)
        return _sconv([(pbuf, cin)], w_ref, b_ref,
                      Mp=Mp, Wp=Wp, kh=kh, kw=kw, dil=dil)

    # conv_linear(cat(b1..b4)) + bias + 0.2*shortcut, accumulated per branch.
    y = b_lin[...] + 0.2 * sc

    b1 = sconv_p(h1, bc, w11, b11, 3, 3, 1)
    y = y + jnp.dot(b1.astype(jnp.bfloat16), w_lin[0, 0:bc, :],
                    preferred_element_type=jnp.float32)

    t = _lrelu(sconv_p(h2, bc, w21, b21, 1, 3, 1))
    b2 = sconv_p(t, bc, w22, b22, 3, 3, 3)
    y = y + jnp.dot(b2.astype(jnp.bfloat16), w_lin[0, bc:2 * bc, :],
                    preferred_element_type=jnp.float32)

    t = _lrelu(sconv_p(h3, bc, w31, b31, 3, 1, 1))
    b3 = sconv_p(t, bc, w32, b32, 3, 3, 3)
    y = y + jnp.dot(b3.astype(jnp.bfloat16), w_lin[0, 2 * bc:3 * bc, :],
                    preferred_element_type=jnp.float32)

    t = _lrelu(sconv_p(h4, c4a, w41, b41, 1, 3, 1))
    t = _lrelu(sconv_p(t, c4b, w42, b42, 3, 1, 1))
    b4 = sconv_p(t, bc, w43, b43, 3, 3, 5)
    y = y + jnp.dot(b4.astype(jnp.bfloat16), w_lin[0, 3 * bc:4 * bc, :],
                    preferred_element_type=jnp.float32)

    for r_ref, s in zip(res_refs, res_scales):
        y = y * s + r_ref[0].astype(jnp.float32)
    if act:
        y = _lrelu(y)
    o_ref[0] = (y * mask).astype(o_ref.dtype)


# --------------------------------- wrappers ----------------------------------


def _const_spec(a):
    nd = a.ndim
    return pl.BlockSpec(a.shape, lambda n, _nd=nd: (0,) * _nd)


def _act_spec(a):
    blk = (1,) + tuple(a.shape[1:])
    return pl.BlockSpec(blk, lambda n: (n, 0, 0))


@functools.partial(jax.jit, static_argnames=("H", "W", "kh", "kw", "dil", "act"))
def conv_call(p, x, mask, *, H, W, kh=3, kw=3, dil=1, act=False):
    N, Mp, cin = x.shape
    cout = p["w"].shape[-1]
    _, Wp, _ = _geom(H, W)
    reach = max((kh - 1) // 2, (kw - 1) // 2) * dil
    g = _guard_rows(reach, Wp)
    kern = functools.partial(_conv_kernel, H=H, W=W, kh=kh, kw=kw, dil=dil, act=act)
    return pl.pallas_call(
        kern,
        grid=(N,),
        in_specs=[_const_spec(mask), _act_spec(x),
                  _const_spec(p["w"]), _const_spec(p["b"])],
        out_specs=pl.BlockSpec((1, Mp, cout), lambda n: (n, 0, 0)),
        out_shape=jax.ShapeDtypeStruct((N, Mp, cout), jnp.bfloat16),
        scratch_shapes=[pltpu.VMEM((Mp + 2 * g, cin), jnp.bfloat16)],
        compiler_params=pltpu.CompilerParams(dimension_semantics=("parallel",)),
    )(mask, x, p["w"], p["b"])


@functools.partial(jax.jit, static_argnames=("H", "W"))
def rdb_call(p, x, mask, outer=None, *, H, W):
    N, Mp, C = x.shape
    G = p["c1"]["w"].shape[-1]
    _, Wp, _ = _geom(H, W)
    g = _guard_rows(1, Wp)
    has_outer = outer is not None
    args = [mask, x]
    specs = [_const_spec(mask), _act_spec(x)]
    for k in ("c1", "c2", "c3", "c4", "c5"):
        args += [p[k]["w"], p[k]["b"]]
        specs += [_const_spec(p[k]["w"]), _const_spec(p[k]["b"])]
    if has_outer:
        args.append(outer)
        specs.append(_act_spec(outer))
    kern = functools.partial(_rdb_kernel, H=H, W=W, has_outer=has_outer)
    scratch = [pltpu.VMEM((Mp + 2 * g, C), jnp.bfloat16)]
    scratch += [pltpu.VMEM((Mp + 2 * g, G), jnp.bfloat16) for _ in range(4)]
    return pl.pallas_call(
        kern, grid=(N,),
        in_specs=specs,
        out_specs=pl.BlockSpec((1, Mp, C), lambda n: (n, 0, 0)),
        out_shape=jax.ShapeDtypeStruct((N, Mp, C), jnp.bfloat16),
        scratch_shapes=scratch,
        compiler_params=pltpu.CompilerParams(dimension_semantics=("parallel",)),
    )(*args)


_RFB_KEYS = ("shortcut", "b1_0", "b2_0", "b3_0", "b4_0",
             "b1_1", "b2_1", "b2_2", "b3_1", "b3_2",
             "b4_1", "b4_2", "b4_3", "lin")


@functools.partial(jax.jit, static_argnames=("H", "W", "res_scales", "act"))
def rfb_call(p, segs, mask, residuals=(), *, H, W, res_scales=(), act=False):
    segs = tuple(segs)
    residuals = tuple(residuals)
    N, Mp, _ = segs[0].shape
    cout = p["shortcut"]["w"].shape[-1]
    bc = p["b1_0"]["w"].shape[-1]
    _, Wp, _ = _geom(H, W)
    g = _guard_rows(5, Wp)

    args = [mask] + list(segs)
    specs = [_const_spec(mask)] + [_act_spec(s) for s in segs]
    for k in _RFB_KEYS:
        args += [p[k]["w"], p[k]["b"]]
        specs += [_const_spec(p[k]["w"]), _const_spec(p[k]["b"])]
    for r in residuals:
        args.append(r)
        specs.append(_act_spec(r))

    kern = functools.partial(_rfb_kernel, H=H, W=W, nseg=len(segs),
                             res_scales=tuple(res_scales), act=act)
    return pl.pallas_call(
        kern, grid=(N,),
        in_specs=specs,
        out_specs=pl.BlockSpec((1, Mp, cout), lambda n: (n, 0, 0)),
        out_shape=jax.ShapeDtypeStruct((N, Mp, cout), jnp.bfloat16),
        scratch_shapes=[pltpu.VMEM((Mp + 2 * g, bc), jnp.bfloat16)],
        compiler_params=pltpu.CompilerParams(dimension_semantics=("parallel",)),
    )(*args)


# --------------------------------- parameters --------------------------------

_rng = np.random.default_rng(0)


def _conv_params(cin, cout, kh, kw):
    fan_in = cin * kh * kw
    w = _rng.standard_normal((kh * kw, cin, cout)) * (0.1 / math.sqrt(fan_in))
    b = np.zeros((1, cout), np.float32)
    return {"w": jnp.asarray(w, jnp.bfloat16), "b": jnp.asarray(b, jnp.float32)}


def make_rfb(cin, cout):
    bc = cin // 4
    return {
        "shortcut": _conv_params(cin, cout, 1, 1),
        "b1_0": _conv_params(cin, bc, 1, 1),
        "b1_1": _conv_params(bc, bc, 3, 3),
        "b2_0": _conv_params(cin, bc, 1, 1),
        "b2_1": _conv_params(bc, bc, 1, 3),
        "b2_2": _conv_params(bc, bc, 3, 3),
        "b3_0": _conv_params(cin, bc, 1, 1),
        "b3_1": _conv_params(bc, bc, 3, 1),
        "b3_2": _conv_params(bc, bc, 3, 3),
        "b4_0": _conv_params(cin, bc // 2, 1, 1),
        "b4_1": _conv_params(bc // 2, bc // 4 * 3, 1, 3),
        "b4_2": _conv_params(bc // 4 * 3, bc, 3, 1),
        "b4_3": _conv_params(bc, bc, 3, 3),
        "lin": _conv_params(4 * bc, cout, 1, 1),
    }


def make_rdb(channels, growth):
    return {"c1": _conv_params(channels + 0 * growth, growth, 3, 3),
            "c2": _conv_params(channels + 1 * growth, growth, 3, 3),
            "c3": _conv_params(channels + 2 * growth, growth, 3, 3),
            "c4": _conv_params(channels + 3 * growth, growth, 3, 3),
            "c5": _conv_params(channels + 4 * growth, channels, 3, 3)}


def make_rrdb(channels, growth):
    return {"rdb1": make_rdb(channels, growth),
            "rdb2": make_rdb(channels, growth),
            "rdb3": make_rdb(channels, growth)}


def make_rfdb(channels, growth):
    return {"rfb1": make_rfb(channels + 0 * growth, growth),
            "rfb2": make_rfb(channels + 1 * growth, growth),
            "rfb3": make_rfb(channels + 2 * growth, growth),
            "rfb4": make_rfb(channels + 3 * growth, growth),
            "rfb5": make_rfb(channels + 4 * growth, channels)}


def make_rrfdb(channels, growth):
    return {"rfdb1": make_rfdb(channels, growth),
            "rfdb2": make_rfdb(channels, growth),
            "rfdb3": make_rfdb(channels, growth)}


def make_model(in_nc, out_nc):
    return {
        "conv1": _conv_params(in_nc, 64, 3, 3),
        "trunk_a": [make_rrdb(64, 32) for _ in range(16)],
        "trunk_rfb": [make_rrfdb(64, 32) for _ in range(8)],
        "conv2": make_rfb(64, 64),
        "ups": {"rfb1": make_rfb(64, 64),
                "conv": _conv_params(64, 64 * 4, 3, 3),
                "rfb2": make_rfb(64, 64)},
        "conv3": _conv_params(64, 64, 3, 3),
        "conv4": _conv_params(64, out_nc, 3, 3),
    }


# ------------------------------ layout glue -----------------------------------


def to_padded_flat(x_nhwc):
    n, h, w, c = x_nhwc.shape
    xp = jnp.pad(x_nhwc, ((0, 0), (P, P), (P, P), (0, 0)))
    return xp.reshape(n, (h + 2 * P) * (w + 2 * P), c)


def from_padded_flat(xf, H, W):
    n, _, c = xf.shape
    x = xf.reshape(n, H + 2 * P, W + 2 * P, c)
    return x[:, P:P + H, P:P + W, :]


@functools.lru_cache(maxsize=None)
def make_mask(H, W):
    Hp, Wp = H + 2 * P, W + 2 * P
    m = np.zeros((Hp, Wp), np.float32)
    m[P:P + H, P:P + W] = 1.0
    return jnp.asarray(m.reshape(Hp * Wp, 1))


def _pixel_shuffle_nhwc(x, r):
    n, h, w, c = x.shape
    co = c // (r * r)
    x = x.reshape(n, h, w, co, r, r)
    x = jnp.transpose(x, (0, 1, 4, 2, 5, 3))
    return x.reshape(n, h * r, w * r, co)


# -------------------------------- forwards -----------------------------------


def rrdb_forward(p, x, mask, H, W):
    x0 = x
    out = rdb_call(p["rdb1"], x0, mask, H=H, W=W)
    out = rdb_call(p["rdb2"], out, mask, H=H, W=W)
    out = rdb_call(p["rdb3"], out, mask, x0, H=H, W=W)   # RRDB residual fused
    return out


def rfdb_forward(p, x, mask, H, W, outer=None):
    segs = [x]
    r1 = rfb_call(p["rfb1"], tuple(segs), mask, H=H, W=W, act=True)
    segs.append(r1)
    r2 = rfb_call(p["rfb2"], tuple(segs), mask, H=H, W=W, act=True)
    segs.append(r2)
    r3 = rfb_call(p["rfb3"], tuple(segs), mask, H=H, W=W, act=True)
    segs.append(r3)
    r4 = rfb_call(p["rfb4"], tuple(segs), mask, H=H, W=W, act=True)
    segs.append(r4)
    if outer is None:
        residuals, scales = (x,), (0.2,)
    else:                               # also fuse the RRFDB outer residual
        residuals, scales = (x, outer), (0.2, 0.2)
    return rfb_call(p["rfb5"], tuple(segs), mask, residuals,
                    H=H, W=W, res_scales=scales, act=False)


def rrfdb_forward(p, x, mask, H, W):
    x0 = x
    out = rfdb_forward(p["rfdb1"], x0, mask, H, W)
    out = rfdb_forward(p["rfdb2"], out, mask, H, W)
    out = rfdb_forward(p["rfdb3"], out, mask, H, W, outer=x0)
    return out


def upsampling_forward(p, xf, H, W):
    # nearest x2 (JAX glue on the tight tensor)
    x = from_padded_flat(xf, H, W)
    x = jnp.repeat(jnp.repeat(x, 2, axis=1), 2, axis=2)
    H, W = 2 * H, 2 * W
    m = make_mask(H, W)
    xf = to_padded_flat(x)
    xf = rfb_call(p["rfb1"], (xf,), m, H=H, W=W, act=True)
    xf = conv_call(p["conv"], xf, m, H=H, W=W, act=False)        # 64 -> 256
    x = _pixel_shuffle_nhwc(from_padded_flat(xf, H, W), 2)
    H, W = 2 * H, 2 * W
    m = make_mask(H, W)
    xf = to_padded_flat(x)
    xf = rfb_call(p["rfb2"], (xf,), m, H=H, W=W, act=True)
    return xf, H, W, m


def rfb_rrdb_forward(params, x_nhwc):
    N, H, W, _ = x_nhwc.shape
    mask = make_mask(H, W)
    xf = to_padded_flat(x_nhwc.astype(jnp.bfloat16))

    out1 = conv_call(params["conv1"], xf, mask, H=H, W=W)
    out = out1
    for p in params["trunk_a"]:
        out = rrdb_forward(p, out, mask, H, W)
    for p in params["trunk_rfb"]:
        out = rrfdb_forward(p, out, mask, H, W)

    # out2 = conv2(out_rfb); out = out1 + out2   (residual fused into epilogue)
    out = rfb_call(params["conv2"], (out,), mask, (out1,),
                   H=H, W=W, res_scales=(1.0,), act=False)
    # out = conv2(out)   -- conv2 applied a second time, as in the reference
    out = rfb_call(params["conv2"], (out,), mask, H=H, W=W, act=False)

    out, H, W, mask = upsampling_forward(params["ups"], out, H, W)
    out = conv_call(params["conv3"], out, mask, H=H, W=W, act=True)
    out = conv_call(params["conv4"], out, mask, H=H, W=W, act=False)
    return from_padded_flat(out, H, W)


# ----------------------------------- main -------------------------------------

if __name__ == "__main__":
    in_nc, out_nc = 3, 3
    params = make_model(in_nc, out_nc)

    key = jax.random.PRNGKey(0)
    x_nchw = jax.random.normal(key, (2, in_nc, 8, 8), jnp.float32)  # NCHW input
    x = jnp.transpose(x_nchw, (0, 2, 3, 1))                          # -> NHWC

    out = rfb_rrdb_forward(params, x)
    out_nchw = jnp.transpose(out, (0, 3, 1, 2)).astype(jnp.float32)  # -> NCHW
    jax.block_until_ready(out_nchw)

    assert out_nchw.shape == (2, out_nc, 32, 32), out_nchw.shape     # x4 upsampling
    print("KERNEL_OK")
</pallas_src>

<mosaic_0001>
module attributes {stable_mosaic.version = 11 : i64} {
  func.func @_conv_kernel(%arg0: i32, %arg1: memref<324x1xf32, #tpu.memory_space<vmem>>, %arg2: memref<1x324x3xbf16, #tpu.memory_space<vmem>>, %arg3: memref<9x3x64xbf16, #tpu.memory_space<vmem>>, %arg4: memref<1x64xf32, #tpu.memory_space<vmem>>, %arg5: memref<1x324x64xbf16, #tpu.memory_space<vmem>>, %arg6: memref<388x3xbf16, #tpu.memory_space<vmem>>) attributes {dimension_semantics = [#tpu.dimension_semantics<parallel>], iteration_bounds = array<i64: 2>, scalar_prefetch = 0 : i64, scratch_operands = 1 : i64, tpu.core_type = #tpu.core_type<tc>, window_params = [{pipeline_mode = #tpu.pipeline_mode<synchronous>, transform_indices = @transform_0, window_bounds = array<i64: 324, 1>}, {transform_indices = @transform_1, window_bounds = array<i64: 1, 324, 3>}, {pipeline_mode = #tpu.pipeline_mode<synchronous>, transform_indices = @transform_2, window_bounds = array<i64: 9, 3, 64>}, {pipeline_mode = #tpu.pipeline_mode<synchronous>, transform_indices = @transform_3, window_bounds = array<i64: 1, 64>}, {transform_indices = @transform_4, window_bounds = array<i64: 1, 324, 64>}]} {
    %cst = arith.constant 0.000000e+00 : bf16
    %0 = vector.broadcast %cst : bf16 to vector<32x3xbf16>
    %c0 = arith.constant 0 : index
    %c0_0 = arith.constant 0 : index
    %1 = vector.load %arg6[%c0, %c0_0] : memref<388x3xbf16, #tpu.memory_space<vmem>>, vector<32x3xbf16>
    tpu.vector_store %arg6[%c0, %c0_0], %0 {strides = array<i32>} : memref<388x3xbf16, #tpu.memory_space<vmem>>, vector<32x3xbf16>,
    %c356 = arith.constant 356 : index
    %c0_1 = arith.constant 0 : index
    %2 = vector.load %arg6[%c356, %c0_1] : memref<388x3xbf16, #tpu.memory_space<vmem>>, vector<32x3xbf16>
    tpu.vector_store %arg6[%c356, %c0_1], %0 {strides = array<i32>} : memref<388x3xbf16, #tpu.memory_space<vmem>>, vector<32x3xbf16>,
    %c0_2 = arith.constant 0 : index
    %c0_3 = arith.constant 0 : index
    %c0_4 = arith.constant 0 : index
    %3 = vector.load %arg2[%c0_2, %c0_3, %c0_4] : memref<1x324x3xbf16, #tpu.memory_space<vmem>>, vector<1x324x3xbf16>
    %4 = vector.shape_cast %3 : vector<1x324x3xbf16> to vector<324x3xbf16>
    %c32 = arith.constant 32 : index
    %c0_5 = arith.constant 0 : index
    %5 = vector.load %arg6[%c32, %c0_5] : memref<388x3xbf16, #tpu.memory_space<vmem>>, vector<324x3xbf16>
    tpu.vector_store %arg6[%c32, %c0_5], %4 {strides = array<i32>} : memref<388x3xbf16, #tpu.memory_space<vmem>>, vector<324x3xbf16>,
    %cst_6 = arith.constant 0.000000e+00 : f32
    %6 = vector.broadcast %cst_6 : f32 to vector<324x64xf32>
    %c13 = arith.constant 13 : index
    %c0_7 = arith.constant 0 : index
    %7 = vector.load %arg6[%c13, %c0_7] : memref<388x3xbf16, #tpu.memory_space<vmem>>, vector<324x3xbf16>
    %c0_8 = arith.constant 0 : index
    %c0_9 = arith.constant 0 : index
    %c0_10 = arith.constant 0 : index
    %8 = vector.load %arg3[%c0_8, %c0_9, %c0_10] : memref<9x3x64xbf16, #tpu.memory_space<vmem>>, vector<1x3x64xbf16>
    %9 = vector.shape_cast %8 : vector<1x3x64xbf16> to vector<3x64xbf16>
    %cst_11 = arith.constant dense<0.000000e+00> : vector<324x64xf32>
    %10 = tpu.matmul %7, %9, %cst_11 {dimension_numbers = #tpu.dot_dimension_numbers<[1], [0], [0], [1], [0, 0, 1, 1], [], []>} : vector<324x3xbf16>, vector<3x64xbf16>, vector<324x64xf32> -> vector<324x64xf32>
    %11 = arith.addf %6, %10 : vector<324x64xf32>
    %c14 = arith.constant 14 : index
    %c0_12 = arith.constant 0 : index
    %12 = vector.load %arg6[%c14, %c0_12] : memref<388x3xbf16, #tpu.memory_space<vmem>>, vector<324x3xbf16>
    %c1 = arith.constant 1 : index
    %c0_13 = arith.constant 0 : index
    %c0_14 = arith.constant 0 : index
    %13 = vector.load %arg3[%c1, %c0_13, %c0_14] : memref<9x3x64xbf16, #tpu.memory_space<vmem>>, vector<1x3x64xbf16>
    %14 = vector.shape_cast %13 : vector<1x3x64xbf16> to vector<3x64xbf16>
    %cst_15 = arith.constant dense<0.000000e+00> : vector<324x64xf32>
    %15 = tpu.matmul %12, %14, %cst_15 {dimension_numbers = #tpu.dot_dimension_numbers<[1], [0], [0], [1], [0, 0, 1, 1], [], []>} : vector<324x3xbf16>, vector<3x64xbf16>, vector<324x64xf32> -> vector<324x64xf32>
    %16 = arith.addf %11, %15 : vector<324x64xf32>
    %c15 = arith.constant 15 : index
    %c0_16 = arith.constant 0 : index
    %17 = vector.load %arg6[%c15, %c0_16] : memref<388x3xbf16, #tpu.memory_space<vmem>>, vector<324x3xbf16>
    %c2 = arith.constant 2 : index
    %c0_17 = arith.constant 0 : index
    %c0_18 = arith.constant 0 : index
    %18 = vector.load %arg3[%c2, %c0_17, %c0_18] : memref<9x3x64xbf16, #tpu.memory_space<vmem>>, vector<1x3x64xbf16>
    %19 = vector.shape_cast %18 : vector<1x3x64xbf16> to vector<3x64xbf16>
    %cst_19 = arith.constant dense<0.000000e+00> : vector<324x64xf32>
    %20 = tpu.matmul %17, %19, %cst_19 {dimension_numbers = #tpu.dot_dimension_numbers<[1], [0], [0], [1], [0, 0, 1, 1], [], []>} : vector<324x3xbf16>, vector<3x64xbf16>, vector<324x64xf32> -> vector<324x64xf32>
    %21 = arith.addf %16, %20 : vector<324x64xf32>
    %c31 = arith.constant 31 : index
    %c0_20 = arith.constant 0 : index
    %22 = vector.load %arg6[%c31, %c0_20] : memref<388x3xbf16, #tpu.memory_space<vmem>>, vector<324x3xbf16>
    %c3 = arith.constant 3 : index
    %c0_21 = arith.constant 0 : index
    %c0_22 = arith.constant 0 : index
    %23 = vector.load %arg3[%c3, %c0_21, %c0_22] : memref<9x3x64xbf16, #tpu.memory_space<vmem>>, vector<1x3x64xbf16>
    %24 = vector.shape_cast %23 : vector<1x3x64xbf16> to vector<3x64xbf16>
    %cst_23 = arith.constant dense<0.000000e+00> : vector<324x64xf32>
    %25 = tpu.matmul %22, %24, %cst_23 {dimension_numbers = #tpu.dot_dimension_numbers<[1], [0], [0], [1], [0, 0, 1, 1], [], []>} : vector<324x3xbf16>, vector<3x64xbf16>, vector<324x64xf32> -> vector<324x64xf32>
    %26 = arith.addf %21, %25 : vector<324x64xf32>
    %c32_24 = arith.constant 32 : index
    %c0_25 = arith.constant 0 : index
    %27 = vector.load %arg6[%c32_24, %c0_25] : memref<388x3xbf16, #tpu.memory_space<vmem>>, vector<324x3xbf16>
    %c4 = arith.constant 4 : index
    %c0_26 = arith.constant 0 : index
    %c0_27 = arith.constant 0 : index
    %28 = vector.load %arg3[%c4, %c0_26, %c0_27] : memref<9x3x64xbf16, #tpu.memory_space<vmem>>, vector<1x3x64xbf16>
    %29 = vector.shape_cast %28 : vector<1x3x64xbf16> to vector<3x64xbf16>
    %cst_28 = arith.constant dense<0.000000e+00> : vector<324x64xf32>
    %30 = tpu.matmul %27, %29, %cst_28 {dimension_numbers = #tpu.dot_dimension_numbers<[1], [0], [0], [1], [0, 0, 1, 1], [], []>} : vector<324x3xbf16>, vector<3x64xbf16>, vector<324x64xf32> -> vector<324x64xf32>
    %31 = arith.addf %26, %30 : vector<324x64xf32>
    %c33 = arith.constant 33 : index
    %c0_29 = arith.constant 0 : index
    %32 = vector.load %arg6[%c33, %c0_29] : memref<388x3xbf16, #tpu.memory_space<vmem>>, vector<324x3xbf16>
    %c5 = arith.constant 5 : index
    %c0_30 = arith.constant 0 : index
    %c0_31 = arith.constant 0 : index
    %33 = vector.load %arg3[%c5, %c0_30, %c0_31] : memref<9x3x64xbf16, #tpu.memory_space<vmem>>, vector<1x3x64xbf16>
    %34 = vector.shape_cast %33 : vector<1x3x64xbf16> to vector<3x64xbf16>
    %cst_32 = arith.constant dense<0.000000e+00> : vector<324x64xf32>
    %35 = tpu.matmul %32, %34, %cst_32 {dimension_numbers = #tpu.dot_dimension_numbers<[1], [0], [0], [1], [0, 0, 1, 1], [], []>} : vector<324x3xbf16>, vector<3x64xbf16>, vector<324x64xf32> -> vector<324x64xf32>
    %36 = arith.addf %31, %35 : vector<324x64xf32>
    %c49 = arith.constant 49 : index
    %c0_33 = arith.constant 0 : index
    %37 = vector.load %arg6[%c49, %c0_33] : memref<388x3xbf16, #tpu.memory_space<vmem>>, vector<324x3xbf16>
    %c6 = arith.constant 6 : index
    %c0_34 = arith.constant 0 : index
    %c0_35 = arith.constant 0 : index
    %38 = vector.load %arg3[%c6, %c0_34, %c0_35] : memref<9x3x64xbf16, #tpu.memory_space<vmem>>, vector<1x3x64xbf16>
    %39 = vector.shape_cast %38 : vector<1x3x64xbf16> to vector<3x64xbf16>
    %cst_36 = arith.constant dense<0.000000e+00> : vector<324x64xf32>
    %40 = tpu.matmul %37, %39, %cst_36 {dimension_numbers = #tpu.dot_dimension_numbers<[1], [0], [0], [1], [0, 0, 1, 1], [], []>} : vector<324x3xbf16>, vector<3x64xbf16>, vector<324x64xf32> -> vector<324x64xf32>
    %41 = arith.addf %36, %40 : vector<324x64xf32>
    %c50 = arith.constant 50 : index
    %c0_37 = arith.constant 0 : index
    %42 = vector.load %arg6[%c50, %c0_37] : memref<388x3xbf16, #tpu.memory_space<vmem>>, vector<324x3xbf16>
    %c7 = arith.constant 7 : index
    %c0_38 = arith.constant 0 : index
    %c0_39 = arith.constant 0 : index
    %43 = vector.load %arg3[%c7, %c0_38, %c0_39] : memref<9x3x64xbf16, #tpu.memory_space<vmem>>, vector<1x3x64xbf16>
    %44 = vector.shape_cast %43 : vector<1x3x64xbf16> to vector<3x64xbf16>
    %cst_40 = arith.constant dense<0.000000e+00> : vector<324x64xf32>
    %45 = tpu.matmul %42, %44, %cst_40 {dimension_numbers = #tpu.dot_dimension_numbers<[1], [0], [0], [1], [0, 0, 1, 1], [], []>} : vector<324x3xbf16>, vector<3x64xbf16>, vector<324x64xf32> -> vector<324x64xf32>
    %46 = arith.addf %41, %45 : vector<324x64xf32>
    %c51 = arith.constant 51 : index
    %c0_41 = arith.constant 0 : index
    %47 = vector.load %arg6[%c51, %c0_41] : memref<388x3xbf16, #tpu.memory_space<vmem>>, vector<324x3xbf16>
    %c8 = arith.constant 8 : index
    %c0_42 = arith.constant 0 : index
    %c0_43 = arith.constant 0 : index
    %48 = vector.load %arg3[%c8, %c0_42, %c0_43] : memref<9x3x64xbf16, #tpu.memory_space<vmem>>, vector<1x3x64xbf16>
    %49 = vector.shape_cast %48 : vector<1x3x64xbf16> to vector<3x64xbf16>
    %cst_44 = arith.constant dense<0.000000e+00> : vector<324x64xf32>
    %50 = tpu.matmul %47, %49, %cst_44 {dimension_numbers = #tpu.dot_dimension_numbers<[1], [0], [0], [1], [0, 0, 1, 1], [], []>} : vector<324x3xbf16>, vector<3x64xbf16>, vector<324x64xf32> -> vector<324x64xf32>
    %51 = arith.addf %46, %50 : vector<324x64xf32>
    %c0_45 = arith.constant 0 : index
    %c0_46 = arith.constant 0 : index
    %52 = vector.load %arg4[%c0_45, %c0_46] : memref<1x64xf32, #tpu.memory_space<vmem>>, vector<1x64xf32>
    %53 = vector.broadcast %52 : vector<1x64xf32> to vector<324x64xf32>
    %54 = arith.addf %51, %53 : vector<324x64xf32>
    %c0_47 = arith.constant 0 : index
    %c0_48 = arith.constant 0 : index
    %55 = vector.load %arg1[%c0_47, %c0_48] : memref<324x1xf32, #tpu.memory_space<vmem>>, vector<324x1xf32>
    %56 = vector.broadcast %55 : vector<324x1xf32> to vector<324x64xf32>
    %57 = arith.mulf %54, %56 : vector<324x64xf32>
    %58 = arith.truncf %57 : vector<324x64xf32> to vector<324x64xbf16>
    %c0_49 = arith.constant 0 : index
    %c0_50 = arith.constant 0 : index
    %c0_51 = arith.constant 0 : index
    %59 = vector.load %arg5[%c0_49, %c0_50, %c0_51] : memref<1x324x64xbf16, #tpu.memory_space<vmem>>, vector<1x324x64xbf16>
    %60 = vector.shape_cast %59 : vector<1x324x64xbf16> to vector<324x64xbf16>
    %61 = vector.shape_cast %58 : vector<324x64xbf16> to vector<1x324x64xbf16>
    tpu.vector_store %arg5[%c0_49, %c0_50, %c0_51], %61 {strides = array<i32>} : memref<1x324x64xbf16, #tpu.memory_space<vmem>>, vector<1x324x64xbf16>,
    return
  }
  func.func @transform_0(%arg0: i32) -> (i32, i32) {
    %c0_i32 = arith.constant 0 : i32
    %c0_i32_0 = arith.constant 0 : i32
    %c0_i32_1 = arith.constant 0 : i32
    return %c0_i32, %c0_i32_0 : i32, i32
  }
  func.func @transform_1(%arg0: i32) -> (i32, i32, i32) {
    %c0_i32 = arith.constant 0 : i32
    %c0_i32_0 = arith.constant 0 : i32
    %c0_i32_1 = arith.constant 0 : i32
    return %arg0, %c0_i32, %c0_i32_0 : i32, i32, i32
  }
  func.func @transform_2(%arg0: i32) -> (i32, i32, i32) {
    %c0_i32 = arith.constant 0 : i32
    %c0_i32_0 = arith.constant 0 : i32
    %c0_i32_1 = arith.constant 0 : i32
    %c0_i32_2 = arith.constant 0 : i32
    return %c0_i32, %c0_i32_0, %c0_i32_1 : i32, i32, i32
  }
  func.func @transform_3(%arg0: i32) -> (i32, i32) {
    %c0_i32 = arith.constant 0 : i32
    %c0_i32_0 = arith.constant 0 : i32
    %c0_i32_1 = arith.constant 0 : i32
    return %c0_i32, %c0_i32_0 : i32, i32
  }
  func.func @transform_4(%arg0: i32) -> (i32, i32, i32) {
    %c0_i32 = arith.constant 0 : i32
    %c0_i32_0 = arith.constant 0 : i32
    %c0_i32_1 = arith.constant 0 : i32
    return %arg0, %c0_i32, %c0_i32_0 : i32, i32, i32
  }
}

</mosaic_0001>

<llo_original>
// kernel: conv_call.1
$region0: #{conv_call.1}
  #allocation0 [shape = 'u32[]', space=smem, size = 0x4, offset = 0x4, fixed_abs, tag = 'smem constant byte address 0x4 - core index']
  #allocation1 [shape = 'u32[72,128]{1,0:T(1,128)}', space=vmem, size = 0x9000, scoped, tag = 'internal scratch']
  #allocation2 [shape = 'bf16[388,3]{1,0:T(8,128)(2,1)}', space=vmem, size = 0x18800, scoped, tag = 'scratch operand']
  %s0 = inlined_call_operand.vmem [shape: f32[324,1], index: 0, kind: input, shape index: {}]
  %s1 = inlined_call_operand.vmem [shape: bf16[2,324,3], index: 1, kind: input, shape index: {}]
  %s2 = inlined_call_operand.vmem [shape: bf16[9,3,64], index: 2, kind: input, shape index: {}]
  %s3 = inlined_call_operand.vmem [shape: f32[1,64], index: 3, kind: input, shape index: {}]
  %s4 = inlined_call_operand.vmem [shape: bf16[2,324,64], index: 4, kind: output, shape index: {}]
  %s5 = sld [smem:[#allocation0]]
  $region49: #{conv_call.1} parent=0
    _
  %s7 = ssub.s32 1, %s5
  %s8 = scalar_select 0, %s7, %s5
  loop: start=0, step=1, limit=4
  $region2: #{conv_call.1} parent=0 // loop_pre_header
    _
  $region3: #{conv_call.1} parent=0 // loop_header
    %s10 = sphi 0, %s14
    %p11 = scmp.ge.s32.totalorder %s10, 4
    %s18 = sphi 0, %s18
    %s20 = sphi 0, %s18
    %s21 = sphi 0, %s20
    %s35 = sphi 0, %s21
    %s41 = sphi 0, %s43
    %s44 = sphi 0, %s41
    %s45 = sphi 0, %s44
    %s61 = sphi 0, %s45
    %s65 = sphi 0, %s65
    %s67 = sphi 0, %s65
    %s68 = sphi 0, %s67
    %s82 = sphi 0, %s68
    %s86 = sphi 0, %s86
    %s88 = sphi 0, %s86
    %s89 = sphi 0, %s88
    %s103 = sphi 0, %s89
    %s109 = sphi 0, %s111
    %s112 = sphi 0, %s109
    %s113 = sphi 0, %s112
    %s129 = sphi 0, %s113
  $region4: #{conv_call.1} parent=0 // loop_header_branch
    %13 = sbr.rel (%p11) target = $region8
  $region5: #{conv_call.1} parent=0 // loop_body
    %s15 = ssub.s32 %s10, 1
    %s16 = ssub.s32 %s10, 2
    %s17 = sadd.s32 %s10, 1
    %s19 = sadd.s32 %s18, 1
    %p22 = scmp.eq.s32.totalorder %s10, 1
    %p23 = scmp.ne.s32.totalorder %s18, %s20
    %p24 = scmp.eq.s32.totalorder %s10, 0
    %p25 = por %p23, %p24
    %p26 = scmp.ne.s32.totalorder %s18, %s20
    %p27 = scmp.eq.s32.totalorder %s15, 1
    %p28 = por %p26, %p27
    %p29 = scmp.ne.s32.totalorder %s20, %s21
    %p30 = scmp.eq.s32.totalorder %s15, 0
    %p31 = por %p29, %p30
    %p32 = scmp.ne.s32.totalorder %s20, %s21
    %p33 = scmp.eq.s32.totalorder %s16, 1
    %p34 = por %p32, %p33
    %p36 = scmp.ne.s32.totalorder %s21, %s35
    %p37 = scmp.eq.s32.totalorder %s16, 0
    %p38 = por %p36, %p37
    %s39 = ssub.s32 %s10, %s17
    %p40 = scmp.eq.s32.totalorder %s39, 0
    %s42 = sadd.s32 %s41, 1
    %s43 = scalar_select %p40, %s41, %s42
    %p46 = pneg %p40
    %p47 = scmp.eq.s32.totalorder %s10, 1
    %p48 = por %p46, %p47
    %p49 = scmp.ne.s32.totalorder %s41, %s44
    %p50 = scmp.eq.s32.totalorder %s10, 0
    %p51 = por %p49, %p50
    %p52 = scmp.ne.s32.totalorder %s41, %s44
    %p53 = scmp.eq.s32.totalorder %s15, 1
    %p54 = por %p52, %p53
    %p55 = scmp.ne.s32.totalorder %s44, %s45
    %p56 = scmp.eq.s32.totalorder %s15, 0
    %p57 = por %p55, %p56
    %p58 = scmp.ne.s32.totalorder %s44, %s45
    %p59 = scmp.eq.s32.totalorder %s16, 1
    %p60 = por %p58, %p59
    %p62 = scmp.ne.s32.totalorder %s45, %s61
    %p63 = scmp.eq.s32.totalorder %s16, 0
    %p64 = por %p62, %p63
    %s66 = sadd.s32 %s65, 1
    %p69 = scmp.eq.s32.totalorder %s10, 1
    %p70 = scmp.ne.s32.totalorder %s65, %s67
    %p71 = scmp.eq.s32.totalorder %s10, 0
    %p72 = por %p70, %p71
    %p73 = scmp.ne.s32.totalorder %s65, %s67
    %p74 = scmp.eq.s32.totalorder %s15, 1
    %p75 = por %p73, %p74
    %p76 = scmp.ne.s32.totalorder %s67, %s68
    %p77 = scmp.eq.s32.totalorder %s15, 0
    %p78 = por %p76, %p77
    %p79 = scmp.ne.s32.totalorder %s67, %s68
    %p80 = scmp.eq.s32.totalorder %s16, 1
    %p81 = por %p79, %p80
    %p83 = scmp.ne.s32.totalorder %s68, %s82
    %p84 = scmp.eq.s32.totalorder %s16, 0
    %p85 = por %p83, %p84
    %s87 = sadd.s32 %s86, 1
    %p90 = scmp.eq.s32.totalorder %s10, 1
    %p91 = scmp.ne.s32.totalorder %s86, %s88
    %p92 = scmp.eq.s32.totalorder %s10, 0
    %p93 = por %p91, %p92
    %p94 = scmp.ne.s32.totalorder %s86, %s88
    %p95 = scmp.eq.s32.totalorder %s15, 1
    %p96 = por %p94, %p95
    %p97 = scmp.ne.s32.totalorder %s88, %s89
    %p98 = scmp.eq.s32.totalorder %s15, 0
    %p99 = por %p97, %p98
    %p100 = scmp.ne.s32.totalorder %s88, %s89
    %p101 = scmp.eq.s32.totalorder %s16, 1
    %p102 = por %p100, %p101
    %p104 = scmp.ne.s32.totalorder %s89, %s103
    %p105 = scmp.eq.s32.totalorder %s16, 0
    %p106 = por %p104, %p105
    %s107 = ssub.s32 %s10, %s17
    %p108 = scmp.eq.s32.totalorder %s107, 0
    %s110 = sadd.s32 %s109, 1
    %s111 = scalar_select %p108, %s109, %s110
    %p114 = pneg %p108
    %p115 = scmp.eq.s32.totalorder %s10, 1
    %p116 = por %p114, %p115
    %p117 = scmp.ne.s32.totalorder %s109, %s112
    %p118 = scmp.eq.s32.totalorder %s10, 0
    %p119 = por %p117, %p118
    %p120 = scmp.ne.s32.totalorder %s109, %s112
    %p121 = scmp.eq.s32.totalorder %s15, 1
    %p122 = por %p120, %p121
    %p123 = scmp.ne.s32.totalorder %s112, %s113
    %p124 = scmp.eq.s32.totalorder %s15, 0
    %p125 = por %p123, %p124
    %p126 = scmp.ne.s32.totalorder %s112, %s113
    %p127 = scmp.eq.s32.totalorder %s16, 1
    %p128 = por %p126, %p127
    %p130 = scmp.ne.s32.totalorder %s113, %s129
    %p131 = scmp.eq.s32.totalorder %s16, 0
    %p132 = por %p130, %p131
    %p133 = scmp.le.s32.totalorder 1, %s10
    %p134 = scmp.lt.s32.totalorder %s10, 3
    %p135 = pnand %p133, %p134
    %p136 = pneg %p135
    // Predicated region
    $region9: #{conv_call.1} parent=5 // pred_check
      _
    $region10: #{conv_call.1} parent=5 // pred_check_branch
      %138 = sbr.rel (%p135) target = $region12
    $region11: #{conv_call.1} parent=5 // pred_region
      %s139 = ssub.s32 %s10, 1
      // Predicated region
      $region13: #{conv_call.1} parent=11 // pred_check
        %p140 = pneg %p31
      $region14: #{conv_call.1} parent=11 // pred_check_branch
        %142 = sbr.rel (%p140) target = $region16
      $region15: #{conv_call.1} parent=11 // pred_region
        _
      $region16: #{conv_call.1} parent=11 // pred_fallthru
        _
      // Predicated region
      $region17: #{conv_call.1} parent=11 // pred_check
        %p143 = pneg %p78
      $region18: #{conv_call.1} parent=11 // pred_check_branch
        %145 = sbr.rel (%p143) target = $region20
      $region19: #{conv_call.1} parent=11 // pred_region
        _
      $region20: #{conv_call.1} parent=11 // pred_fallthru
        _
      // Predicated region
      $region21: #{conv_call.1} parent=11 // pred_check
        %p146 = pneg %p99
      $region22: #{conv_call.1} parent=11 // pred_check_branch
        %148 = sbr.rel (%p146) target = $region24
      $region23: #{conv_call.1} parent=11 // pred_region
        _
      $region24: #{conv_call.1} parent=11 // pred_fallthru
        _
    $region12: #{conv_call.1} parent=5 // pred_fallthru
      _
    %p149 = scmp.lt.s32.totalorder %s10, 2
    // Predicated region
    $region25: #{conv_call.1} parent=5 // pred_check
      %p150 = pneg %p149
    $region26: #{conv_call.1} parent=5 // pred_check_branch
      %152 = sbr.rel (%p150) target = $region28
    $region27: #{conv_call.1} parent=5 // pred_region
      // Predicated region
      $region29: #{conv_call.1} parent=27 // pred_check
        %p153 = pneg %p51
      $region30: #{conv_call.1} parent=27 // pred_check_branch
        %155 = sbr.rel (%p153) target = $region32
      $region31: #{conv_call.1} parent=27 // pred_region
        %p156 = scmp.lt.s32.totalorder %s10, 1
        %s157 = scalar_select %p156, %s10, 1
        %s158 = smul.addr %s157, 41
        %s159 = smul.addr %s158, 4
        %s160 = scalar_lea.vmem %s1, %s159
      $region32: #{conv_call.1} parent=27 // pred_fallthru
        _
    $region28: #{conv_call.1} parent=5 // pred_fallthru
      _
    %p161 = scmp.le.s32.totalorder 1, %s10
    %p162 = scmp.lt.s32.totalorder %s10, 3
    %p163 = pnand %p161, %p162
    %p164 = pneg %p163
    // Predicated region
    $region33: #{conv_call.1} parent=5 // pred_check
      _
    $region34: #{conv_call.1} parent=5 // pred_check_branch
      %166 = sbr.rel (%p163) target = $region36
    $region35: #{conv_call.1} parent=5 // pred_region
      %s167 = ssub.s32 %s10, 1
      %p168 = pneg %p31
      %p169 = pneg %p28
      %p170 = scmp.lt.s32.totalorder %s15, 1
      %s171 = scalar_select %p170, %s15, 1
      %s172 = smul.addr %s171, 41
      %s173 = smul.addr %s172, 4
      %s174 = scalar_lea.vmem %s1, %s173
      %p175 = pneg %p57
      %p176 = pneg %p54
      %p177 = pneg %p78
      %p178 = pneg %p75
      %p179 = pneg %p99
      %p180 = pneg %p96
      %p181 = pneg %p125
      %p182 = pneg %p122
      %p183 = scmp.lt.s32.totalorder %s15, 1
      %s184 = scalar_select %p183, %s15, 1
      %s185 = smul.addr %s184, 41
      %s186 = smul.addr %s185, 4
      %s187 = scalar_lea.vmem %s4, %s186
      %p188 = scmp.lt.s32.totalorder %s15, 1
      %s189 = scalar_select %p188, %s15, 1
      %s190 = smul.addr %s189, 41
      %s191 = smul.addr %s190, 4
      %s192 = scalar_lea.vmem %s1, %s191
      %p193 = scmp.lt.s32.totalorder %s15, 1
      %s194 = scalar_select %p193, %s15, 1
      %s195 = smul.addr %s194, 41
      %s196 = smul.addr %s195, 4
      %s197 = scalar_lea.vmem %s4, %s196
      %vm199 = vcmask 19456
      %200 = vst.msk [vmem:[#allocation2] sm:$0xf] %vm199, 0
      %201 = vst.msk [vmem:[#allocation2 + $0x4] sm:$0xf] %vm199, 0
      %202 = vst.msk [vmem:[#allocation2 + $0x8] sm:$0xf] %vm199, 0
      %203 = vst.msk [vmem:[#allocation2 + $0xc] sm:$0xf] %vm199, 0
      %vm204 = vcmask 19458
      %205 = vst.msk [vmem:[#allocation2 + $0xb0] sm:$0xc] %vm204, 0
      %206 = vst.msk [vmem:[#allocation2 + $0xb4] sm:$0xf] %vm199, 0
      %207 = vst.msk [vmem:[#allocation2 + $0xb8] sm:$0xf] %vm199, 0
      %208 = vst.msk [vmem:[#allocation2 + $0xbc] sm:$0xf] %vm199, 0
      %vm209 = vcmask 17408
      %210 = vst.msk [vmem:[#allocation2 + $0xc0] sm:$0x3] %vm209, 0
      %v211 = vld [vmem:[%s192] sm:$0xf]
      %v212 = vld [vmem:[%s192 + $0x4] sm:$0xf]
      %v213 = vld [vmem:[%s192 + $0x8] sm:$0xf]
      %v214 = vld [vmem:[%s192 + $0xc] sm:$0xf]
      %v215 = vld [vmem:[%s192 + $0x10] sm:$0xf]
      %v216 = vld [vmem:[%s192 + $0x14] sm:$0xf]
      %v217 = vld [vmem:[%s192 + $0x18] sm:$0xf]
      %v218 = vld [vmem:[%s192 + $0x1c] sm:$0xf]
      %v219 = vld [vmem:[%s192 + $0x20] sm:$0xf]
      %v220 = vld [vmem:[%s192 + $0x24] sm:$0xf]
      %v221 = vld [vmem:[%s192 + $0x28] sm:$0xf]
      %v222 = vld [vmem:[%s192 + $0x2c] sm:$0xf]
      %v223 = vld [vmem:[%s192 + $0x30] sm:$0xf]
      %v224 = vld [vmem:[%s192 + $0x34] sm:$0xf]
      %v225 = vld [vmem:[%s192 + $0x38] sm:$0xf]
      %v226 = vld [vmem:[%s192 + $0x3c] sm:$0xf]
      %v227 = vld [vmem:[%s192 + $0x40] sm:$0xf]
      %v228 = vld [vmem:[%s192 + $0x44] sm:$0xf]
      %v229 = vld [vmem:[%s192 + $0x48] sm:$0xf]
      %v230 = vld [vmem:[%s192 + $0x4c] sm:$0xf]
      %v231 = vld [vmem:[%s192 + $0x50] sm:$0xf]
      %v232 = vld [vmem:[%s192 + $0x54] sm:$0xf]
      %v233 = vld [vmem:[%s192 + $0x58] sm:$0xf]
      %v234 = vld [vmem:[%s192 + $0x5c] sm:$0xf]
      %v235 = vld [vmem:[%s192 + $0x60] sm:$0xf]
      %v236 = vld [vmem:[%s192 + $0x64] sm:$0xf]
      %v237 = vld [vmem:[%s192 + $0x68] sm:$0xf]
      %v238 = vld [vmem:[%s192 + $0x6c] sm:$0xf]
      %v239 = vld [vmem:[%s192 + $0x70] sm:$0xf]
      %v240 = vld [vmem:[%s192 + $0x74] sm:$0xf]
      %v241 = vld [vmem:[%s192 + $0x78] sm:$0xf]
      %v242 = vld [vmem:[%s192 + $0x7c] sm:$0xf]
      %v243 = vld [vmem:[%s192 + $0x80] sm:$0xf]
      %v244 = vld [vmem:[%s192 + $0x84] sm:$0xf]
      %v245 = vld [vmem:[%s192 + $0x88] sm:$0xf]
      %v246 = vld [vmem:[%s192 + $0x8c] sm:$0xf]
      %v247 = vld [vmem:[%s192 + $0x90] sm:$0xf]
      %v248 = vld [vmem:[%s192 + $0x94] sm:$0xf]
      %v249 = vld [vmem:[%s192 + $0x98] sm:$0xf]
      %v250 = vld [vmem:[%s192 + $0x9c] sm:$0xf]
      %v251 = vld [vmem:[%s192 + $0xa0] sm:$0x3]
      %252 = vst.msk [vmem:[#allocation2 + $0x10] sm:$0xf] %vm199, %v211
      %253 = vst.msk [vmem:[#allocation2 + $0x14] sm:$0xf] %vm199, %v212
      %254 = vst.msk [vmem:[#allocation2 + $0x18] sm:$0xf] %vm199, %v213
      %255 = vst.msk [vmem:[#allocation2 + $0x1c] sm:$0xf] %vm199, %v214
      %256 = vst.msk [vmem:[#allocation2 + $0x20] sm:$0xf] %vm199, %v215
      %257 = vst.msk [vmem:[#allocation2 + $0x24] sm:$0xf] %vm199, %v216
      %258 = vst.msk [vmem:[#allocation2 + $0x28] sm:$0xf] %vm199, %v217
      %259 = vst.msk [vmem:[#allocation2 + $0x2c] sm:$0xf] %vm199, %v218
      %260 = vst.msk [vmem:[#allocation2 + $0x30] sm:$0xf] %vm199, %v219
      %261 = vst.msk [vmem:[#allocation2 + $0x34] sm:$0xf] %vm199, %v220
      %262 = vst.msk [vmem:[#allocation2 + $0x38] sm:$0xf] %vm199, %v221
      %263 = vst.msk [vmem:[#allocation2 + $0x3c] sm:$0xf] %vm199, %v222
      %264 = vst.msk [vmem:[#allocation2 + $0x40] sm:$0xf] %vm199, %v223
      %265 = vst.msk [vmem:[#allocation2 + $0x44] sm:$0xf] %vm199, %v224
      %266 = vst.msk [vmem:[#allocation2 + $0x48] sm:$0xf] %vm199, %v225
      %267 = vst.msk [vmem:[#allocation2 + $0x4c] sm:$0xf] %vm199, %v226
      %268 = vst.msk [vmem:[#allocation2 + $0x50] sm:$0xf] %vm199, %v227
      %269 = vst.msk [vmem:[#allocation2 + $0x54] sm:$0xf] %vm199, %v228
      %270 = vst.msk [vmem:[#allocation2 + $0x58] sm:$0xf] %vm199, %v229
      %271 = vst.msk [vmem:[#allocation2 + $0x5c] sm:$0xf] %vm199, %v230
      %272 = vst.msk [vmem:[#allocation2 + $0x60] sm:$0xf] %vm199, %v231
      %273 = vst.msk [vmem:[#allocation2 + $0x64] sm:$0xf] %vm199, %v232
      %274 = vst.msk [vmem:[#allocation2 + $0x68] sm:$0xf] %vm199, %v233
      %275 = vst.msk [vmem:[#allocation2 + $0x6c] sm:$0xf] %vm199, %v234
      %276 = vst.msk [vmem:[#allocation2 + $0x70] sm:$0xf] %vm199, %v235
      %277 = vst.msk [vmem:[#allocation2 + $0x74] sm:$0xf] %vm199, %v236
      %278 = vst.msk [vmem:[#allocation2 + $0x78] sm:$0xf] %vm199, %v237
      %279 = vst.msk [vmem:[#allocation2 + $0x7c] sm:$0xf] %vm199, %v238
      %280 = vst.msk [vmem:[#allocation2 + $0x80] sm:$0xf] %vm199, %v239
      %281 = vst.msk [vmem:[#allocation2 + $0x84] sm:$0xf] %vm199, %v240
      %282 = vst.msk [vmem:[#allocation2 + $0x88] sm:$0xf] %vm199, %v241
      %283 = vst.msk [vmem:[#allocation2 + $0x8c] sm:$0xf] %vm199, %v242
      %284 = vst.msk [vmem:[#allocation2 + $0x90] sm:$0xf] %vm199, %v243
      %285 = vst.msk [vmem:[#allocation2 + $0x94] sm:$0xf] %vm199, %v244
      %286 = vst.msk [vmem:[#allocation2 + $0x98] sm:$0xf] %vm199, %v245
      %287 = vst.msk [vmem:[#allocation2 + $0x9c] sm:$0xf] %vm199, %v246
      %288 = vst.msk [vmem:[#allocation2 + $0xa0] sm:$0xf] %vm199, %v247
      %289 = vst.msk [vmem:[#allocation2 + $0xa4] sm:$0xf] %vm199, %v248
      %290 = vst.msk [vmem:[#allocation2 + $0xa8] sm:$0xf] %vm199, %v249
      %291 = vst.msk [vmem:[#allocation2 + $0xac] sm:$0xf] %vm199, %v250
      %292 = vst.msk [vmem:[#allocation2 + $0xb0] sm:$0x3] %vm209, %v251
      %v293 = vld [vmem:[#allocation2 + $0x4] sm:$0xc]
      %v294 = vld [vmem:[#allocation2 + $0x8] sm:$0xf]
      %v295 = vld [vmem:[#allocation2 + $0xc] sm:$0xf]
      %v296 = vld [vmem:[#allocation2 + $0x10] sm:$0xf]
      %v297 = vld [vmem:[#allocation2 + $0x14] sm:$0xf]
      %v298 = vld [vmem:[#allocation2 + $0x18] sm:$0xf]
      %v299 = vld [vmem:[#allocation2 + $0x1c] sm:$0xf]
      %v300 = vld [vmem:[#allocation2 + $0x20] sm:$0xf]
      %v301 = vld [vmem:[#allocation2 + $0x24] sm:$0xf]
      %v302 = vld [vmem:[#allocation2 + $0x28] sm:$0xf]
      %v303 = vld [vmem:[#allocation2 + $0x2c] sm:$0xf]
      %v304 = vld [vmem:[#allocation2 + $0x30] sm:$0xf]
      %v305 = vld [vmem:[#allocation2 + $0x34] sm:$0xf]
      %v306 = vld [vmem:[#allocation2 + $0x38] sm:$0xf]
      %v307 = vld [vmem:[#allocation2 + $0x3c] sm:$0xf]
      %v308 = vld [vmem:[#allocation2 + $0x40] sm:$0xf]
      %v309 = vld [vmem:[#allocation2 + $0x44] sm:$0xf]
      %v310 = vld [vmem:[#allocation2 + $0x48] sm:$0xf]
      %v311 = vld [vmem:[#allocation2 + $0x4c] sm:$0xf]
      %v312 = vld [vmem:[#allocation2 + $0x50] sm:$0xf]
      %v313 = vld [vmem:[#allocation2 + $0x54] sm:$0xf]
      %v314 = vld [vmem:[#allocation2 + $0x58] sm:$0xf]
      %v315 = vld [vmem:[#allocation2 + $0x5c] sm:$0xf]
      %v316 = vld [vmem:[#allocation2 + $0x60] sm:$0xf]
      %v317 = vld [vmem:[#allocation2 + $0x64] sm:$0xf]
      %v318 = vld [vmem:[#allocation2 + $0x68] sm:$0xf]
      %v319 = vld [vmem:[#allocation2 + $0x6c] sm:$0xf]
      %v320 = vld [vmem:[#allocation2 + $0x70] sm:$0xf]
      %v321 = vld [vmem:[#allocation2 + $0x74] sm:$0xf]
      %v322 = vld [vmem:[#allocation2 + $0x78] sm:$0xf]
      %v323 = vld [vmem:[#allocation2 + $0x7c] sm:$0xf]
      %v324 = vld [vmem:[#allocation2 + $0x80] sm:$0xf]
      %v325 = vld [vmem:[#allocation2 + $0x84] sm:$0xf]
      %v326 = vld [vmem:[#allocation2 + $0x88] sm:$0xf]
      %v327 = vld [vmem:[#allocation2 + $0x8c] sm:$0xf]
      %v328 = vld [vmem:[#allocation2 + $0x90] sm:$0xf]
      %v329 = vld [vmem:[#allocation2 + $0x94] sm:$0xf]
      %v330 = vld [vmem:[#allocation2 + $0x98] sm:$0xf]
      %v331 = vld [vmem:[#allocation2 + $0x9c] sm:$0xf]
      %v332 = vld [vmem:[#allocation2 + $0xa0] sm:$0xf]
      %v333 = vld [vmem:[#allocation2 + $0xa4] sm:$0xf]
      %v334 = vld [vmem:[#allocation2 + $0xa8] sm:$0x1]
      %v335 = vld [vmem:[%s2] sm:$0x3]
      %v336 = vld [vmem:[#allocation2 + $0x4] sm:$0x8]
      %s337 = scalar_lea.vmem %s2, 2
      %v338 = vld [vmem:[%s337] sm:$0x3]
      %v381 = vunpack.c.l.b16 %v336
      %v382 = vunpack.c.l.b16 %v294
      %v383 = vunpack.c.l.b16 %v295
      %v384 = vunpack.c.l.b16 %v296
      %v385 = vunpack.c.l.b16 %v297
      %v386 = vunpack.c.l.b16 %v298
      %v387 = vunpack.c.l.b16 %v299
      %v388 = vunpack.c.l.b16 %v300
      %v389 = vunpack.c.l.b16 %v301
      %v390 = vunpack.c.l.b16 %v302
      %v391 = vunpack.c.l.b16 %v303
      %v392 = vunpack.c.l.b16 %v304
      %v393 = vunpack.c.l.b16 %v305
      %v394 = vunpack.c.l.b16 %v306
      %v395 = vunpack.c.l.b16 %v307
      %v396 = vunpack.c.l.b16 %v308
      %v397 = vunpack.c.l.b16 %v309
      %v398 = vunpack.c.l.b16 %v310
      %v399 = vunpack.c.l.b16 %v311
      %v400 = vunpack.c.l.b16 %v312
      %v401 = vunpack.c.l.b16 %v313
      %v402 = vunpack.c.l.b16 %v314
      %v403 = vunpack.c.l.b16 %v315
      %v404 = vunpack.c.l.b16 %v316
      %v405 = vunpack.c.l.b16 %v317
      %v406 = vunpack.c.l.b16 %v318
      %v407 = vunpack.c.l.b16 %v319
      %v408 = vunpack.c.l.b16 %v320
      %v409 = vunpack.c.l.b16 %v321
      %v410 = vunpack.c.l.b16 %v322
      %v411 = vunpack.c.l.b16 %v323
      %v412 = vunpack.c.l.b16 %v324
      %v413 = vunpack.c.l.b16 %v325
      %v414 = vunpack.c.l.b16 %v326
      %v415 = vunpack.c.l.b16 %v327
      %v416 = vunpack.c.l.b16 %v328
      %v417 = vunpack.c.l.b16 %v329
      %v418 = vunpack.c.l.b16 %v330
      %v419 = vunpack.c.l.b16 %v331
      %v420 = vunpack.c.l.b16 %v332
      %v421 = vunpack.c.l.b16 %v333
      %v422 = vunpack.c.l.b16 %v334
      %v423 = vpack.c.b16 %v382, %v381
      %v424 = vpack.c.b16 %v384, %v383
      %v425 = vpack.c.b16 %v386, %v385
      %v426 = vpack.c.b16 %v388, %v387
      %v427 = vpack.c.b16 %v390, %v389
      %v428 = vpack.c.b16 %v392, %v391
      %v429 = vpack.c.b16 %v394, %v393
      %v430 = vpack.c.b16 %v396, %v395
      %v431 = vpack.c.b16 %v398, %v397
      %v432 = vpack.c.b16 %v400, %v399
      %v433 = vpack.c.b16 %v402, %v401
      %v434 = vpack.c.b16 %v404, %v403
      %v435 = vpack.c.b16 %v406, %v405
      %v436 = vpack.c.b16 %v408, %v407
      %v437 = vpack.c.b16 %v410, %v409
      %v438 = vpack.c.b16 %v412, %v411
      %v439 = vpack.c.b16 %v414, %v413
      %v440 = vpack.c.b16 %v416, %v415
      %v441 = vpack.c.b16 %v418, %v417
      %v442 = vpack.c.b16 %v420, %v419
      %v443 = vpack.c.b16 %v422, %v421
      %vm444 = vcmask 1044480
      %v445 = vrot.slane %v423, 3
      %v446 = vrot.slane %v424, 3
      %v447 = vsel %vm444, %v445, %v446
      %v448 = vrot.slane %v425, 3
      %v449 = vsel %vm444, %v446, %v448
      %v450 = vrot.slane %v426, 3
      %v451 = vsel %vm444, %v448, %v450
      %v452 = vrot.slane %v427, 3
      %v453 = vsel %vm444, %v450, %v452
      %v454 = vrot.slane %v428, 3
      %v455 = vsel %vm444, %v452, %v454
      %v456 = vrot.slane %v429, 3
      %v457 = vsel %vm444, %v454, %v456
      %v458 = vrot.slane %v430, 3
      %v459 = vsel %vm444, %v456, %v458
      %v460 = vrot.slane %v431, 3
      %v461 = vsel %vm444, %v458, %v460
      %v462 = vrot.slane %v432, 3
      %v463 = vsel %vm444, %v460, %v462
      %v464 = vrot.slane %v433, 3
      %v465 = vsel %vm444, %v462, %v464
      %v466 = vrot.slane %v434, 3
      %v467 = vsel %vm444, %v464, %v466
      %v468 = vrot.slane %v435, 3
      %v469 = vsel %vm444, %v466, %v468
      %v470 = vrot.slane %v436, 3
      %v471 = vsel %vm444, %v468, %v470
      %v472 = vrot.slane %v437, 3
      %v473 = vsel %vm444, %v470, %v472
      %v474 = vrot.slane %v438, 3
      %v475 = vsel %vm444, %v472, %v474
      %v476 = vrot.slane %v439, 3
      %v477 = vsel %vm444, %v474, %v476
      %v478 = vrot.slane %v440, 3
      %v479 = vsel %vm444, %v476, %v478
      %v480 = vrot.slane %v441, 3
      %v481 = vsel %vm444, %v478, %v480
      %v482 = vrot.slane %v442, 3
      %v483 = vsel %vm444, %v480, %v482
      %v484 = vrot.slane %v443, 3
      %v485 = vsel %vm444, %v482, %v484
      %vm486 = vcmask 23552
      %v488 = vsel %vm486, %v447, 0
      %v491 = vsel %vm486, %v449, 0
      %v494 = vsel %vm486, %v451, 0
      %v497 = vsel %vm486, %v453, 0
      %v500 = vsel %vm486, %v455, 0
      %v503 = vsel %vm486, %v457, 0
      %v506 = vsel %vm486, %v459, 0
      %v509 = vsel %vm486, %v461, 0
      %v512 = vsel %vm486, %v463, 0
      %v515 = vsel %vm486, %v465, 0
      %v518 = vsel %vm486, %v467, 0
      %v521 = vsel %vm486, %v469, 0
      %v524 = vsel %vm486, %v471, 0
      %v527 = vsel %vm486, %v473, 0
      %v530 = vsel %vm486, %v475, 0
      %v533 = vsel %vm486, %v477, 0
      %v536 = vsel %vm486, %v479, 0
      %v539 = vsel %vm486, %v481, 0
      %v542 = vsel %vm486, %v483, 0
      %v545 = vsel %vm486, %v485, 0
      %v548 = vsel %vm486, %v484, 0
      %vm550 = vcmask 1040384
      %vm551 = vcmask 1041408
      %v552 = vsel %vm550, 4294967295, 65535
      %v553 = vsel %vm551, %v552, 0
      %v555 = vand.u32 %v338, %v553
      %557 = vmatpush.bf16.msra.mxu0 0
      %558 = vmatpush.bf16.msra.mxu0 0
      %559 = vmatpush.bf16.msra.mxu0 0
      %560 = vmatpush.bf16.msra.mxu0 0
      %561 = vmatpush.bf16.msra.mxu0 0
      %562 = vmatpush.bf16.msra.mxu0 0
      %563 = vmatpush.bf16.msra.mxu0 0
      %564 = vmatpush.bf16.msra.mxu0 %v555
      %565 = vmatmul.bf16.gmra.mxu0 %v488
      %v566 = vpop.f32.mrf.mxu0
      %v567 = vadd.f32 0.0, %v566
      %v568 = vpop.f32.mrf.mxu0
      %v569 = vadd.f32 0.0, %v568
      %570 = vmatmul.bf16.gmra.mxu0 %v491
      %v571 = vpop.f32.mrf.mxu0
      %v572 = vadd.f32 0.0, %v571
      %v573 = vpop.f32.mrf.mxu0
      %v574 = vadd.f32 0.0, %v573
      %575 = vmatmul.bf16.gmra.mxu0 %v494
      %v576 = vpop.f32.mrf.mxu0
      %v577 = vadd.f32 0.0, %v576
      %v578 = vpop.f32.mrf.mxu0
      %v579 = vadd.f32 0.0, %v578
      %580 = vmatmul.bf16.gmra.mxu0 %v497
      %v581 = vpop.f32.mrf.mxu0
      %v582 = vadd.f32 0.0, %v581
      %v583 = vpop.f32.mrf.mxu0
      %v584 = vadd.f32 0.0, %v583
      %585 = vmatmul.bf16.gmra.mxu0 %v500
      %v586 = vpop.f32.mrf.mxu0
      %v587 = vadd.f32 0.0, %v586
      %v588 = vpop.f32.mrf.mxu0
      %v589 = vadd.f32 0.0, %v588
      %590 = vmatmul.bf16.gmra.mxu0 %v503
      %v591 = vpop.f32.mrf.mxu0
      %v592 = vadd.f32 0.0, %v591
      %v593 = vpop.f32.mrf.mxu0
      %v594 = vadd.f32 0.0, %v593
      %595 = vmatmul.bf16.gmra.mxu0 %v506
      %v596 = vpop.f32.mrf.mxu0
      %v597 = vadd.f32 0.0, %v596
      %v598 = vpop.f32.mrf.mxu0
      %v599 = vadd.f32 0.0, %v598
      %600 = vmatmul.bf16.gmra.mxu0 %v509
      %v601 = vpop.f32.mrf.mxu0
      %v602 = vadd.f32 0.0, %v601
      %v603 = vpop.f32.mrf.mxu0
      %v604 = vadd.f32 0.0, %v603
      %605 = vmatmul.bf16.gmra.mxu0 %v512
      %v606 = vpop.f32.mrf.mxu0
      %v607 = vadd.f32 0.0, %v606
      %v608 = vpop.f32.mrf.mxu0
      %v609 = vadd.f32 0.0, %v608
      %610 = vmatmul.bf16.gmra.mxu0 %v515
      %v611 = vpop.f32.mrf.mxu0
      %v612 = vadd.f32 0.0, %v611
      %v613 = vpop.f32.mrf.mxu0
      %v614 = vadd.f32 0.0, %v613
      %615 = vmatmul.bf16.gmra.mxu0 %v518
      %v616 = vpop.f32.mrf.mxu0
      %v617 = vadd.f32 0.0, %v616
      %v618 = vpop.f32.mrf.mxu0
      %v619 = vadd.f32 0.0, %v618
      %620 = vmatmul.bf16.gmra.mxu0 %v521
      %v621 = vpop.f32.mrf.mxu0
      %v622 = vadd.f32 0.0, %v621
      %v623 = vpop.f32.mrf.mxu0
      %v624 = vadd.f32 0.0, %v623
      %625 = vmatmul.bf16.gmra.mxu0 %v524
      %v626 = vpop.f32.mrf.mxu0
      %v627 = vadd.f32 0.0, %v626
      %v628 = vpop.f32.mrf.mxu0
      %v629 = vadd.f32 0.0, %v628
      %630 = vmatmul.bf16.gmra.mxu0 %v527
      %v631 = vpop.f32.mrf.mxu0
      %v632 = vadd.f32 0.0, %v631
      %v633 = vpop.f32.mrf.mxu0
      %v634 = vadd.f32 0.0, %v633
      %635 = vmatmul.bf16.gmra.mxu0 %v530
      %v636 = vpop.f32.mrf.mxu0
      %v637 = vadd.f32 0.0, %v636
      %v638 = vpop.f32.mrf.mxu0
      %v639 = vadd.f32 0.0, %v638
      %640 = vmatmul.bf16.gmra.mxu0 %v533
      %v641 = vpop.f32.mrf.mxu0
      %v642 = vadd.f32 0.0, %v641
      %v643 = vpop.f32.mrf.mxu0
      %v644 = vadd.f32 0.0, %v643
      %645 = vmatmul.bf16.gmra.mxu0 %v536
      %v646 = vpop.f32.mrf.mxu0
      %v647 = vadd.f32 0.0, %v646
      %v648 = vpop.f32.mrf.mxu0
      %v649 = vadd.f32 0.0, %v648
      %650 = vmatmul.bf16.gmra.mxu0 %v539
      %v651 = vpop.f32.mrf.mxu0
      %v652 = vadd.f32 0.0, %v651
      %v653 = vpop.f32.mrf.mxu0
      %v654 = vadd.f32 0.0, %v653
      %655 = vmatmul.bf16.gmra.mxu0 %v542
      %v656 = vpop.f32.mrf.mxu0
      %v657 = vadd.f32 0.0, %v656
      %v658 = vpop.f32.mrf.mxu0
      %v659 = vadd.f32 0.0, %v658
      %660 = vmatmul.bf16.gmra.mxu0 %v545
      %v661 = vpop.f32.mrf.mxu0
      %v662 = vadd.f32 0.0, %v661
      %v663 = vpop.f32.mrf.mxu0
      %v664 = vadd.f32 0.0, %v663
      %665 = vmatmul.bf16.gmra.mxu0 %v548
      %v666 = vpop.f32.mrf.mxu0
      %v667 = vadd.f32 0.0, %v666
      %v668 = vpop.f32.mrf.mxu0
      %669 = vdwg.mxu0
      %v671 = vunpack.c.l.b16 %v293
      %v672 = vpack.c.b16 %v382, %v671
      %vm673 = vsmask.f32 5376
      %v675 = vshrl.u32 %v672, 16
      %v677 = vrot.slane %v675, 2
      %v678 = vshll.u32 %v672, 16
      %v680 = vrot.slane %v678, 3
      %v681 = vor.u32 %v677, %v680
      %v683 = vshrl.u32 %v424, 16
      %v685 = vrot.slane %v683, 2
      %v686 = vshll.u32 %v424, 16
      %v688 = vrot.slane %v686, 3
      %v689 = vor.u32 %v685, %v688
      %v690 = vsel %vm673, %v681, %v689
      %v692 = vshrl.u32 %v425, 16
      %v694 = vrot.slane %v692, 2
      %v695 = vshll.u32 %v425, 16
      %v697 = vrot.slane %v695, 3
      %v698 = vor.u32 %v694, %v697
      %v699 = vsel %vm673, %v689, %v698
      %v701 = vshrl.u32 %v426, 16
      %v703 = vrot.slane %v701, 2
      %v704 = vshll.u32 %v426, 16
      %v706 = vrot.slane %v704, 3
      %v707 = vor.u32 %v703, %v706
      %v708 = vsel %vm673, %v698, %v707
      %v710 = vshrl.u32 %v427, 16
      %v712 = vrot.slane %v710, 2
      %v713 = vshll.u32 %v427, 16
      %v715 = vrot.slane %v713, 3
      %v716 = vor.u32 %v712, %v715
      %v717 = vsel %vm673, %v707, %v716
      %v719 = vshrl.u32 %v428, 16
      %v721 = vrot.slane %v719, 2
      %v722 = vshll.u32 %v428, 16
      %v724 = vrot.slane %v722, 3
      %v725 = vor.u32 %v721, %v724
      %v726 = vsel %vm673, %v716, %v725
      %v728 = vshrl.u32 %v429, 16
      %v730 = vrot.slane %v728, 2
      %v731 = vshll.u32 %v429, 16
      %v733 = vrot.slane %v731, 3
      %v734 = vor.u32 %v730, %v733
      %v735 = vsel %vm673, %v725, %v734
      %v737 = vshrl.u32 %v430, 16
      %v739 = vrot.slane %v737, 2
      %v740 = vshll.u32 %v430, 16
      %v742 = vrot.slane %v740, 3
      %v743 = vor.u32 %v739, %v742
      %v744 = vsel %vm673, %v734, %v743
      %v746 = vshrl.u32 %v431, 16
      %v748 = vrot.slane %v746, 2
      %v749 = vshll.u32 %v431, 16
      %v751 = vrot.slane %v749, 3
      %v752 = vor.u32 %v748, %v751
      %v753 = vsel %vm673, %v743, %v752
      %v755 = vshrl.u32 %v432, 16
      %v757 = vrot.slane %v755, 2
      %v758 = vshll.u32 %v432, 16
      %v760 = vrot.slane %v758, 3
      %v761 = vor.u32 %v757, %v760
      %v762 = vsel %vm673, %v752, %v761
      %v764 = vshrl.u32 %v433, 16
      %v766 = vrot.slane %v764, 2
      %v767 = vshll.u32 %v433, 16
      %v769 = vrot.slane %v767, 3
      %v770 = vor.u32 %v766, %v769
      %v771 = vsel %vm673, %v761, %v770
      %v773 = vshrl.u32 %v434, 16
      %v775 = vrot.slane %v773, 2
      %v776 = vshll.u32 %v434, 16
      %v778 = vrot.slane %v776, 3
      %v779 = vor.u32 %v775, %v778
      %v780 = vsel %vm673, %v770, %v779
      %v782 = vshrl.u32 %v435, 16
      %v784 = vrot.slane %v782, 2
      %v785 = vshll.u32 %v435, 16
      %v787 = vrot.slane %v785, 3
      %v788 = vor.u32 %v784, %v787
      %v789 = vsel %vm673, %v779, %v788
      %v791 = vshrl.u32 %v436, 16
      %v793 = vrot.slane %v791, 2
      %v794 = vshll.u32 %v436, 16
      %v796 = vrot.slane %v794, 3
      %v797 = vor.u32 %v793, %v796
      %v798 = vsel %vm673, %v788, %v797
      %v800 = vshrl.u32 %v437, 16
      %v802 = vrot.slane %v800, 2
      %v803 = vshll.u32 %v437, 16
      %v805 = vrot.slane %v803, 3
      %v806 = vor.u32 %v802, %v805
      %v807 = vsel %vm673, %v797, %v806
      %v809 = vshrl.u32 %v438, 16
      %v811 = vrot.slane %v809, 2
      %v812 = vshll.u32 %v438, 16
      %v814 = vrot.slane %v812, 3
      %v815 = vor.u32 %v811, %v814
      %v816 = vsel %vm673, %v806, %v815
      %v818 = vshrl.u32 %v439, 16
      %v820 = vrot.slane %v818, 2
      %v821 = vshll.u32 %v439, 16
      %v823 = vrot.slane %v821, 3
      %v824 = vor.u32 %v820, %v823
      %v825 = vsel %vm673, %v815, %v824
      %v827 = vshrl.u32 %v440, 16
      %v829 = vrot.slane %v827, 2
      %v830 = vshll.u32 %v440, 16
      %v832 = vrot.slane %v830, 3
      %v833 = vor.u32 %v829, %v832
      %v834 = vsel %vm673, %v824, %v833
      %v836 = vshrl.u32 %v441, 16
      %v838 = vrot.slane %v836, 2
      %v839 = vshll.u32 %v441, 16
      %v841 = vrot.slane %v839, 3
      %v842 = vor.u32 %v838, %v841
      %v843 = vsel %vm673, %v833, %v842
      %v845 = vshrl.u32 %v442, 16
      %v847 = vrot.slane %v845, 2
      %v848 = vshll.u32 %v442, 16
      %v850 = vrot.slane %v848, 3
      %v851 = vor.u32 %v847, %v850
      %v852 = vsel %vm673, %v842, %v851
      %v854 = vshrl.u32 %v443, 16
      %v856 = vrot.slane %v854, 2
      %v857 = vshll.u32 %v443, 16
      %v859 = vrot.slane %v857, 3
      %v860 = vor.u32 %v856, %v859
      %v861 = vsel %vm673, %v851, %v860
      %v863 = vsel %vm486, %v690, 0
      %v866 = vsel %vm486, %v699, 0
      %v869 = vsel %vm486, %v708, 0
      %v872 = vsel %vm486, %v717, 0
      %v875 = vsel %vm486, %v726, 0
      %v878 = vsel %vm486, %v735, 0
      %v881 = vsel %vm486, %v744, 0
      %v884 = vsel %vm486, %v753, 0
      %v887 = vsel %vm486, %v762, 0
      %v890 = vsel %vm486, %v771, 0
      %v893 = vsel %vm486, %v780, 0
      %v896 = vsel %vm486, %v789, 0
      %v899 = vsel %vm486, %v798, 0
      %v902 = vsel %vm486, %v807, 0
      %v905 = vsel %vm486, %v816, 0
      %v908 = vsel %vm486, %v825, 0
      %v911 = vsel %vm486, %v834, 0
      %v914 = vsel %vm486, %v843, 0
      %v917 = vsel %vm486, %v852, 0
      %v920 = vsel %vm486, %v861, 0
      %v923 = vsel %vm486, %v860, 0
      %v926 = vand.u32 %v335, %v553
      %928 = vmatpush.bf16.msra.mxu0 0
      %929 = vmatpush.bf16.msra.mxu0 0
      %930 = vmatpush.bf16.msra.mxu0 0
      %931 = vmatpush.bf16.msra.mxu0 0
      %932 = vmatpush.bf16.msra.mxu0 0
      %933 = vmatpush.bf16.msra.mxu0 0
      %934 = vmatpush.bf16.msra.mxu0 0
      %935 = vmatpush.bf16.msra.mxu0 %v926
      %936 = vmatmul.bf16.gmra.mxu0 %v863
      %v937 = vpop.f32.mrf.mxu0
      %v938 = vadd.f32 %v567, %v937
      %v939 = vpop.f32.mrf.mxu0
      %v940 = vadd.f32 %v569, %v939
      %941 = vmatmul.bf16.gmra.mxu0 %v866
      %v942 = vpop.f32.mrf.mxu0
      %v943 = vadd.f32 %v572, %v942
      %v944 = vpop.f32.mrf.mxu0
      %v945 = vadd.f32 %v574, %v944
      %946 = vmatmul.bf16.gmra.mxu0 %v869
      %v947 = vpop.f32.mrf.mxu0
      %v948 = vadd.f32 %v577, %v947
      %v949 = vpop.f32.mrf.mxu0
      %v950 = vadd.f32 %v579, %v949
      %951 = vmatmul.bf16.gmra.mxu0 %v872
      %v952 = vpop.f32.mrf.mxu0
      %v953 = vadd.f32 %v582, %v952
      %v954 = vpop.f32.mrf.mxu0
      %v955 = vadd.f32 %v584, %v954
      %956 = vmatmul.bf16.gmra.mxu0 %v875
      %v957 = vpop.f32.mrf.mxu0
      %v958 = vadd.f32 %v587, %v957
      %v959 = vpop.f32.mrf.mxu0
      %v960 = vadd.f32 %v589, %v959
      %961 = vmatmul.bf16.gmra.mxu0 %v878
      %v962 = vpop.f32.mrf.mxu0
      %v963 = vadd.f32 %v592, %v962
      %v964 = vpop.f32.mrf.mxu0
      %v965 = vadd.f32 %v594, %v964
      %966 = vmatmul.bf16.gmra.mxu0 %v881
      %v967 = vpop.f32.mrf.mxu0
      %v968 = vadd.f32 %v597, %v967
      %v969 = vpop.f32.mrf.mxu0
      %v970 = vadd.f32 %v599, %v969
      %971 = vmatmul.bf16.gmra.mxu0 %v884
      %v972 = vpop.f32.mrf.mxu0
      %v973 = vadd.f32 %v602, %v972
      %v974 = vpop.f32.mrf.mxu0
      %v975 = vadd.f32 %v604, %v974
      %976 = vmatmul.bf16.gmra.mxu0 %v887
      %v977 = vpop.f32.mrf.mxu0
      %v978 = vadd.f32 %v607, %v977
      %v979 = vpop.f32.mrf.mxu0
      %v980 = vadd.f32 %v609, %v979
      %981 = vmatmul.bf16.gmra.mxu0 %v890
      %v982 = vpop.f32.mrf.mxu0
      %v983 = vadd.f32 %v612, %v982
      %v984 = vpop.f32.mrf.mxu0
      %v985 = vadd.f32 %v614, %v984
      %986 = vmatmul.bf16.gmra.mxu0 %v893
      %v987 = vpop.f32.mrf.mxu0
      %v988 = vadd.f32 %v617, %v987
      %v989 = vpop.f32.mrf.mxu0
      %v990 = vadd.f32 %v619, %v989
      %991 = vmatmul.bf16.gmra.mxu0 %v896
      %v992 = vpop.f32.mrf.mxu0
      %v993 = vadd.f32 %v622, %v992
      %v994 = vpop.f32.mrf.mxu0
      %v995 = vadd.f32 %v624, %v994
      %996 = vmatmul.bf16.gmra.mxu0 %v899
      %v997 = vpop.f32.mrf.mxu0
      %v998 = vadd.f32 %v627, %v997
      %v999 = vpop.f32.mrf.mxu0
      %v1000 = vadd.f32 %v629, %v999
      %1001 = vmatmul.bf16.gmra.mxu0 %v902
      %v1002 = vpop.f32.mrf.mxu0
      %v1003 = vadd.f32 %v632, %v1002
      %v1004 = vpop.f32.mrf.mxu0
      %v1005 = vadd.f32 %v634, %v1004
      %1006 = vmatmul.bf16.gmra.mxu0 %v905
      %v1007 = vpop.f32.mrf.mxu0
      %v1008 = vadd.f32 %v637, %v1007
      %v1009 = vpop.f32.mrf.mxu0
      %v1010 = vadd.f32 %v639, %v1009
      %1011 = vmatmul.bf16.gmra.mxu0 %v908
      %v1012 = vpop.f32.mrf.mxu0
      %v1013 = vadd.f32 %v642, %v1012
      %v1014 = vpop.f32.mrf.mxu0
      %v1015 = vadd.f32 %v644, %v1014
      %1016 = vmatmul.bf16.gmra.mxu0 %v911
      %v1017 = vpop.f32.mrf.mxu0
      %v1018 = vadd.f32 %v647, %v1017
      %v1019 = vpop.f32.mrf.mxu0
      %v1020 = vadd.f32 %v649, %v1019
      %1021 = vmatmul.bf16.gmra.mxu0 %v914
      %v1022 = vpop.f32.mrf.mxu0
      %v1023 = vadd.f32 %v652, %v1022
      %v1024 = vpop.f32.mrf.mxu0
      %v1025 = vadd.f32 %v654, %v1024
      %1026 = vmatmul.bf16.gmra.mxu0 %v917
      %v1027 = vpop.f32.mrf.mxu0
      %v1028 = vadd.f32 %v657, %v1027
      %v1029 = vpop.f32.mrf.mxu0
      %v1030 = vadd.f32 %v659, %v1029
      %1031 = vmatmul.bf16.gmra.mxu0 %v920
      %v1032 = vpop.f32.mrf.mxu0
      %v1033 = vadd.f32 %v662, %v1032
      %v1034 = vpop.f32.mrf.mxu0
      %v1035 = vadd.f32 %v664, %v1034
      %1036 = vmatmul.bf16.gmra.mxu0 %v923
      %v1037 = vpop.f32.mrf.mxu0
      %v1038 = vadd.f32 %v667, %v1037
      %v1039 = vpop.f32.mrf.mxu0
      %1040 = vdwg.mxu0
      %v1041 = vld [vmem:[#allocation2 + $0xa8] sm:$0x3]
      %s1042 = scalar_lea.vmem %s2, 4
      %v1043 = vld [vmem:[%s1042] sm:$0x3]
      %v1045 = vunpack.c.l.b16 %v1041
      %v1046 = vpack.c.b16 %v1045, %v421
      %vm1047 = vsmask.f32 4352
      %v1049 = vshrl.u32 %v423, 16
      %v1051 = vrot.slane %v1049, 3
      %v1052 = vshll.u32 %v423, 16
      %v1054 = vrot.slane %v1052, 4
      %v1055 = vor.u32 %v1051, %v1054
      %v1056 = vrot.slane %v683, 3
      %v1057 = vrot.slane %v686, 4
      %v1058 = vor.u32 %v1056, %v1057
      %v1059 = vsel %vm1047, %v1055, %v1058
      %v1060 = vrot.slane %v692, 3
      %v1061 = vrot.slane %v695, 4
      %v1062 = vor.u32 %v1060, %v1061
      %v1063 = vsel %vm1047, %v1058, %v1062
      %v1064 = vrot.slane %v701, 3
      %v1065 = vrot.slane %v704, 4
      %v1066 = vor.u32 %v1064, %v1065
      %v1067 = vsel %vm1047, %v1062, %v1066
      %v1068 = vrot.slane %v710, 3
      %v1069 = vrot.slane %v713, 4
      %v1070 = vor.u32 %v1068, %v1069
      %v1071 = vsel %vm1047, %v1066, %v1070
      %v1072 = vrot.slane %v719, 3
      %v1073 = vrot.slane %v722, 4
      %v1074 = vor.u32 %v1072, %v1073
      %v1075 = vsel %vm1047, %v1070, %v1074
      %v1076 = vrot.slane %v728, 3
      %v1077 = vrot.slane %v731, 4
      %v1078 = vor.u32 %v1076, %v1077
      %v1079 = vsel %vm1047, %v1074, %v1078
      %v1080 = vrot.slane %v737, 3
      %v1081 = vrot.slane %v740, 4
      %v1082 = vor.u32 %v1080, %v1081
      %v1083 = vsel %vm1047, %v1078, %v1082
      %v1084 = vrot.slane %v746, 3
      %v1085 = vrot.slane %v749, 4
      %v1086 = vor.u32 %v1084, %v1085
      %v1087 = vsel %vm1047, %v1082, %v1086
      %v1088 = vrot.slane %v755, 3
      %v1089 = vrot.slane %v758, 4
      %v1090 = vor.u32 %v1088, %v1089
      %v1091 = vsel %vm1047, %v1086, %v1090
      %v1092 = vrot.slane %v764, 3
      %v1093 = vrot.slane %v767, 4
      %v1094 = vor.u32 %v1092, %v1093
      %v1095 = vsel %vm1047, %v1090, %v1094
      %v1096 = vrot.slane %v773, 3
      %v1097 = vrot.slane %v776, 4
      %v1098 = vor.u32 %v1096, %v1097
      %v1099 = vsel %vm1047, %v1094, %v1098
      %v1100 = vrot.slane %v782, 3
      %v1101 = vrot.slane %v785, 4
      %v1102 = vor.u32 %v1100, %v1101
      %v1103 = vsel %vm1047, %v1098, %v1102
      %v1104 = vrot.slane %v791, 3
      %v1105 = vrot.slane %v794, 4
      %v1106 = vor.u32 %v1104, %v1105
      %v1107 = vsel %vm1047, %v1102, %v1106
      %v1108 = vrot.slane %v800, 3
      %v1109 = vrot.slane %v803, 4
      %v1110 = vor.u32 %v1108, %v1109
      %v1111 = vsel %vm1047, %v1106, %v1110
      %v1112 = vrot.slane %v809, 3
      %v1113 = vrot.slane %v812, 4
      %v1114 = vor.u32 %v1112, %v1113
      %v1115 = vsel %vm1047, %v1110, %v1114
      %v1116 = vrot.slane %v818, 3
      %v1117 = vrot.slane %v821, 4
      %v1118 = vor.u32 %v1116, %v1117
      %v1119 = vsel %vm1047, %v1114, %v1118
      %v1120 = vrot.slane %v827, 3
      %v1121 = vrot.slane %v830, 4
      %v1122 = vor.u32 %v1120, %v1121
      %v1123 = vsel %vm1047, %v1118, %v1122
      %v1124 = vrot.slane %v836, 3
      %v1125 = vrot.slane %v839, 4
      %v1126 = vor.u32 %v1124, %v1125
      %v1127 = vsel %vm1047, %v1122, %v1126
      %v1128 = vrot.slane %v845, 3
      %v1129 = vrot.slane %v848, 4
      %v1130 = vor.u32 %v1128, %v1129
      %v1131 = vsel %vm1047, %v1126, %v1130
      %v1133 = vshrl.u32 %v1046, 16
      %v1135 = vrot.slane %v1133, 3
      %v1136 = vshll.u32 %v1046, 16
      %v1138 = vrot.slane %v1136, 4
      %v1139 = vor.u32 %v1135, %v1138
      %v1140 = vsel %vm1047, %v1130, %v1139
      %v1142 = vsel %vm486, %v1059, 0
      %v1145 = vsel %vm486, %v1063, 0
      %v1148 = vsel %vm486, %v1067, 0
      %v1151 = vsel %vm486, %v1071, 0
      %v1154 = vsel %vm486, %v1075, 0
      %v1157 = vsel %vm486, %v1079, 0
      %v1160 = vsel %vm486, %v1083, 0
      %v1163 = vsel %vm486, %v1087, 0
      %v1166 = vsel %vm486, %v1091, 0
      %v1169 = vsel %vm486, %v1095, 0
      %v1172 = vsel %vm486, %v1099, 0
      %v1175 = vsel %vm486, %v1103, 0
      %v1178 = vsel %vm486, %v1107, 0
      %v1181 = vsel %vm486, %v1111, 0
      %v1184 = vsel %vm486, %v1115, 0
      %v1187 = vsel %vm486, %v1119, 0
      %v1190 = vsel %vm486, %v1123, 0
      %v1193 = vsel %vm486, %v1127, 0
      %v1196 = vsel %vm486, %v1131, 0
      %v1199 = vsel %vm486, %v1140, 0
      %v1202 = vsel %vm486, %v1139, 0
      %v1205 = vand.u32 %v1043, %v553
      %1207 = vmatpush.bf16.msra.mxu0 0
      %1208 = vmatpush.bf16.msra.mxu0 0
      %1209 = vmatpush.bf16.msra.mxu0 0
      %1210 = vmatpush.bf16.msra.mxu0 0
      %1211 = vmatpush.bf16.msra.mxu0 0
      %1212 = vmatpush.bf16.msra.mxu0 0
      %1213 = vmatpush.bf16.msra.mxu0 0
      %1214 = vmatpush.bf16.msra.mxu0 %v1205
      %1215 = vmatmul.bf16.gmra.mxu0 %v1142
      %v1216 = vpop.f32.mrf.mxu0
      %v1217 = vadd.f32 0.0, %v1216
      %v1218 = vpop.f32.mrf.mxu0
      %v1219 = vadd.f32 0.0, %v1218
      %1220 = vmatmul.bf16.gmra.mxu0 %v1145
      %v1221 = vpop.f32.mrf.mxu0
      %v1222 = vadd.f32 0.0, %v1221
      %v1223 = vpop.f32.mrf.mxu0
      %v1224 = vadd.f32 0.0, %v1223
      %1225 = vmatmul.bf16.gmra.mxu0 %v1148
      %v1226 = vpop.f32.mrf.mxu0
      %v1227 = vadd.f32 0.0, %v1226
      %v1228 = vpop.f32.mrf.mxu0
      %v1229 = vadd.f32 0.0, %v1228
      %1230 = vmatmul.bf16.gmra.mxu0 %v1151
      %v1231 = vpop.f32.mrf.mxu0
      %v1232 = vadd.f32 0.0, %v1231
      %v1233 = vpop.f32.mrf.mxu0
      %v1234 = vadd.f32 0.0, %v1233
      %1235 = vmatmul.bf16.gmra.mxu0 %v1154
      %v1236 = vpop.f32.mrf.mxu0
      %v1237 = vadd.f32 0.0, %v1236
      %v1238 = vpop.f32.mrf.mxu0
      %v1239 = vadd.f32 0.0, %v1238
      %1240 = vmatmul.bf16.gmra.mxu0 %v1157
      %v1241 = vpop.f32.mrf.mxu0
      %v1242 = vadd.f32 0.0, %v1241
      %v1243 = vpop.f32.mrf.mxu0
      %v1244 = vadd.f32 0.0, %v1243
      %1245 = vmatmul.bf16.gmra.mxu0 %v1160
      %v1246 = vpop.f32.mrf.mxu0
      %v1247 = vadd.f32 0.0, %v1246
      %v1248 = vpop.f32.mrf.mxu0
      %v1249 = vadd.f32 0.0, %v1248
      %1250 = vmatmul.bf16.gmra.mxu0 %v1163
      %v1251 = vpop.f32.mrf.mxu0
      %v1252 = vadd.f32 0.0, %v1251
      %v1253 = vpop.f32.mrf.mxu0
      %v1254 = vadd.f32 0.0, %v1253
      %1255 = vmatmul.bf16.gmra.mxu0 %v1166
      %v1256 = vpop.f32.mrf.mxu0
      %v1257 = vadd.f32 0.0, %v1256
      %v1258 = vpop.f32.mrf.mxu0
      %v1259 = vadd.f32 0.0, %v1258
      %1260 = vmatmul.bf16.gmra.mxu0 %v1169
      %v1261 = vpop.f32.mrf.mxu0
      %v1262 = vadd.f32 0.0, %v1261
      %v1263 = vpop.f32.mrf.mxu0
      %v1264 = vadd.f32 0.0, %v1263
      %1265 = vmatmul.bf16.gmra.mxu0 %v1172
      %v1266 = vpop.f32.mrf.mxu0
      %v1267 = vadd.f32 0.0, %v1266
      %v1268 = vpop.f32.mrf.mxu0
      %v1269 = vadd.f32 0.0, %v1268
      %1270 = vmatmul.bf16.gmra.mxu0 %v1175
      %v1271 = vpop.f32.mrf.mxu0
      %v1272 = vadd.f32 0.0, %v1271
      %v1273 = vpop.f32.mrf.mxu0
      %v1274 = vadd.f32 0.0, %v1273
      %1275 = vmatmul.bf16.gmra.mxu0 %v1178
      %v1276 = vpop.f32.mrf.mxu0
      %v1277 = vadd.f32 0.0, %v1276
      %v1278 = vpop.f32.mrf.mxu0
      %v1279 = vadd.f32 0.0, %v1278
      %1280 = vmatmul.bf16.gmra.mxu0 %v1181
      %v1281 = vpop.f32.mrf.mxu0
      %v1282 = vadd.f32 0.0, %v1281
      %v1283 = vpop.f32.mrf.mxu0
      %v1284 = vadd.f32 0.0, %v1283
      %1285 = vmatmul.bf16.gmra.mxu0 %v1184
      %v1286 = vpop.f32.mrf.mxu0
      %v1287 = vadd.f32 0.0, %v1286
      %v1288 = vpop.f32.mrf.mxu0
      %v1289 = vadd.f32 0.0, %v1288
      %1290 = vmatmul.bf16.gmra.mxu0 %v1187
      %v1291 = vpop.f32.mrf.mxu0
      %v1292 = vadd.f32 0.0, %v1291
      %v1293 = vpop.f32.mrf.mxu0
      %v1294 = vadd.f32 0.0, %v1293
      %1295 = vmatmul.bf16.gmra.mxu0 %v1190
      %v1296 = vpop.f32.mrf.mxu0
      %v1297 = vadd.f32 0.0, %v1296
      %v1298 = vpop.f32.mrf.mxu0
      %v1299 = vadd.f32 0.0, %v1298
      %1300 = vmatmul.bf16.gmra.mxu0 %v1193
      %v1301 = vpop.f32.mrf.mxu0
      %v1302 = vadd.f32 0.0, %v1301
      %v1303 = vpop.f32.mrf.mxu0
      %v1304 = vadd.f32 0.0, %v1303
      %1305 = vmatmul.bf16.gmra.mxu0 %v1196
      %v1306 = vpop.f32.mrf.mxu0
      %v1307 = vadd.f32 0.0, %v1306
      %v1308 = vpop.f32.mrf.mxu0
      %v1309 = vadd.f32 0.0, %v1308
      %1310 = vmatmul.bf16.gmra.mxu0 %v1199
      %v1311 = vpop.f32.mrf.mxu0
      %v1312 = vadd.f32 0.0, %v1311
      %v1313 = vpop.f32.mrf.mxu0
      %v1314 = vadd.f32 0.0, %v1313
      %1315 = vmatmul.bf16.gmra.mxu0 %v1202
      %v1316 = vpop.f32.mrf.mxu0
      %v1317 = vadd.f32 0.0, %v1316
      %v1318 = vpop.f32.mrf.mxu0
      %1319 = vdwg.mxu0
      %v1320 = vadd.f32 %v938, %v1217
      %v1321 = vadd.f32 %v940, %v1219
      %v1322 = vadd.f32 %v943, %v1222
      %v1323 = vadd.f32 %v945, %v1224
      %v1324 = vadd.f32 %v948, %v1227
      %v1325 = vadd.f32 %v950, %v1229
      %v1326 = vadd.f32 %v953, %v1232
      %v1327 = vadd.f32 %v955, %v1234
      %v1328 = vadd.f32 %v958, %v1237
      %v1329 = vadd.f32 %v960, %v1239
      %v1330 = vadd.f32 %v963, %v1242
      %v1331 = vadd.f32 %v965, %v1244
      %v1332 = vadd.f32 %v968, %v1247
      %v1333 = vadd.f32 %v970, %v1249
      %v1334 = vadd.f32 %v973, %v1252
      %v1335 = vadd.f32 %v975, %v1254
      %v1336 = vadd.f32 %v978, %v1257
      %v1337 = vadd.f32 %v980, %v1259
      %v1338 = vadd.f32 %v983, %v1262
      %v1339 = vadd.f32 %v985, %v1264
      %v1340 = vadd.f32 %v988, %v1267
      %v1341 = vadd.f32 %v990, %v1269
      %v1342 = vadd.f32 %v993, %v1272
      %v1343 = vadd.f32 %v995, %v1274
      %v1344 = vadd.f32 %v998, %v1277
      %v1345 = vadd.f32 %v1000, %v1279
      %v1346 = vadd.f32 %v1003, %v1282
      %v1347 = vadd.f32 %v1005, %v1284
      %v1348 = vadd.f32 %v1008, %v1287
      %v1349 = vadd.f32 %v1010, %v1289
      %v1350 = vadd.f32 %v1013, %v1292
      %v1351 = vadd.f32 %v1015, %v1294
      %v1352 = vadd.f32 %v1018, %v1297
      %v1353 = vadd.f32 %v1020, %v1299
      %v1354 = vadd.f32 %v1023, %v1302
      %v1355 = vadd.f32 %v1025, %v1304
      %v1356 = vadd.f32 %v1028, %v1307
      %v1357 = vadd.f32 %v1030, %v1309
      %v1358 = vadd.f32 %v1033, %v1312
      %v1359 = vadd.f32 %v1035, %v1314
      %v1360 = vadd.f32 %v1038, %v1317
      %v1361 = vld [vmem:[#allocation2 + $0xc] sm:$0x8]
      %v1362 = vld [vmem:[#allocation2 + $0x10] sm:$0xf]
      %v1363 = vld [vmem:[#allocation2 + $0x14] sm:$0xf]
      %v1364 = vld [vmem:[#allocation2 + $0x18] sm:$0xf]
      %v1365 = vld [vmem:[#allocation2 + $0x1c] sm:$0xf]
      %v1366 = vld [vmem:[#allocation2 + $0x20] sm:$0xf]
      %v1367 = vld [vmem:[#allocation2 + $0x24] sm:$0xf]
      %v1368 = vld [vmem:[#allocation2 + $0x28] sm:$0xf]
      %v1369 = vld [vmem:[#allocation2 + $0x2c] sm:$0xf]
      %v1370 = vld [vmem:[#allocation2 + $0x30] sm:$0xf]
      %v1371 = vld [vmem:[#allocation2 + $0x34] sm:$0xf]
      %v1372 = vld [vmem:[#allocation2 + $0x38] sm:$0xf]
      %v1373 = vld [vmem:[#allocation2 + $0x3c] sm:$0xf]
      %v1374 = vld [vmem:[#allocation2 + $0x40] sm:$0xf]
      %v1375 = vld [vmem:[#allocation2 + $0x44] sm:$0xf]
      %v1376 = vld [vmem:[#allocation2 + $0x48] sm:$0xf]
      %v1377 = vld [vmem:[#allocation2 + $0x4c] sm:$0xf]
      %v1378 = vld [vmem:[#allocation2 + $0x50] sm:$0xf]
      %v1379 = vld [vmem:[#allocation2 + $0x54] sm:$0xf]
      %v1380 = vld [vmem:[#allocation2 + $0x58] sm:$0xf]
      %v1381 = vld [vmem:[#allocation2 + $0x5c] sm:$0xf]
      %v1382 = vld [vmem:[#allocation2 + $0x60] sm:$0xf]
      %v1383 = vld [vmem:[#allocation2 + $0x64] sm:$0xf]
      %v1384 = vld [vmem:[#allocation2 + $0x68] sm:$0xf]
      %v1385 = vld [vmem:[#allocation2 + $0x6c] sm:$0xf]
      %v1386 = vld [vmem:[#allocation2 + $0x70] sm:$0xf]
      %v1387 = vld [vmem:[#allocation2 + $0x74] sm:$0xf]
      %v1388 = vld [vmem:[#allocation2 + $0x78] sm:$0xf]
      %v1389 = vld [vmem:[#allocation2 + $0x7c] sm:$0xf]
      %v1390 = vld [vmem:[#allocation2 + $0x80] sm:$0xf]
      %v1391 = vld [vmem:[#allocation2 + $0x84] sm:$0xf]
      %v1392 = vld [vmem:[#allocation2 + $0x88] sm:$0xf]
      %v1393 = vld [vmem:[#allocation2 + $0x8c] sm:$0xf]
      %v1394 = vld [vmem:[#allocation2 + $0x90] sm:$0xf]
      %v1395 = vld [vmem:[#allocation2 + $0x94] sm:$0xf]
      %v1396 = vld [vmem:[#allocation2 + $0x98] sm:$0xf]
      %v1397 = vld [vmem:[#allocation2 + $0x9c] sm:$0xf]
      %v1398 = vld [vmem:[#allocation2 + $0xa0] sm:$0xf]
      %v1399 = vld [vmem:[#allocation2 + $0xa4] sm:$0xf]
      %v1400 = vld [vmem:[#allocation2 + $0xa8] sm:$0xf]
      %v1401 = vld [vmem:[#allocation2 + $0xac] sm:$0xf]
      %v1402 = vld [vmem:[#allocation2 + $0xb0] sm:$0x3]
      %s1403 = scalar_lea.vmem %s2, 6
      %v1404 = vld [vmem:[%s1403] sm:$0x3]
      %v1447 = vunpack.c.l.b16 %v1361
      %v1448 = vunpack.c.l.b16 %v1362
      %v1449 = vunpack.c.l.b16 %v1363
      %v1450 = vunpack.c.l.b16 %v1364
      %v1451 = vunpack.c.l.b16 %v1365
      %v1452 = vunpack.c.l.b16 %v1366
      %v1453 = vunpack.c.l.b16 %v1367
      %v1454 = vunpack.c.l.b16 %v1368
      %v1455 = vunpack.c.l.b16 %v1369
      %v1456 = vunpack.c.l.b16 %v1370
      %v1457 = vunpack.c.l.b16 %v1371
      %v1458 = vunpack.c.l.b16 %v1372
      %v1459 = vunpack.c.l.b16 %v1373
      %v1460 = vunpack.c.l.b16 %v1374
      %v1461 = vunpack.c.l.b16 %v1375
      %v1462 = vunpack.c.l.b16 %v1376
      %v1463 = vunpack.c.l.b16 %v1377
      %v1464 = vunpack.c.l.b16 %v1378
      %v1465 = vunpack.c.l.b16 %v1379
      %v1466 = vunpack.c.l.b16 %v1380
      %v1467 = vunpack.c.l.b16 %v1381
      %v1468 = vunpack.c.l.b16 %v1382
      %v1469 = vunpack.c.l.b16 %v1383
      %v1470 = vunpack.c.l.b16 %v1384
      %v1471 = vunpack.c.l.b16 %v1385
      %v1472 = vunpack.c.l.b16 %v1386
      %v1473 = vunpack.c.l.b16 %v1387
      %v1474 = vunpack.c.l.b16 %v1388
      %v1475 = vunpack.c.l.b16 %v1389
      %v1476 = vunpack.c.l.b16 %v1390
      %v1477 = vunpack.c.l.b16 %v1391
      %v1478 = vunpack.c.l.b16 %v1392
      %v1479 = vunpack.c.l.b16 %v1393
      %v1480 = vunpack.c.l.b16 %v1394
      %v1481 = vunpack.c.l.b16 %v1395
      %v1482 = vunpack.c.l.b16 %v1396
      %v1483 = vunpack.c.l.b16 %v1397
      %v1484 = vunpack.c.l.b16 %v1398
      %v1485 = vunpack.c.l.b16 %v1399
      %v1486 = vunpack.c.l.b16 %v1400
      %v1487 = vunpack.c.l.b16 %v1401
      %v1488 = vunpack.c.l.b16 %v1402
      %v1489 = vpack.c.b16 %v1448, %v1447
      %v1490 = vpack.c.b16 %v1450, %v1449
      %v1491 = vpack.c.b16 %v1452, %v1451
      %v1492 = vpack.c.b16 %v1454, %v1453
      %v1493 = vpack.c.b16 %v1456, %v1455
      %v1494 = vpack.c.b16 %v1458, %v1457
      %v1495 = vpack.c.b16 %v1460, %v1459
      %v1496 = vpack.c.b16 %v1462, %v1461
      %v1497 = vpack.c.b16 %v1464, %v1463
      %v1498 = vpack.c.b16 %v1466, %v1465
      %v1499 = vpack.c.b16 %v1468, %v1467
      %v1500 = vpack.c.b16 %v1470, %v1469
      %v1501 = vpack.c.b16 %v1472, %v1471
      %v1502 = vpack.c.b16 %v1474, %v1473
      %v1503 = vpack.c.b16 %v1476, %v1475
      %v1504 = vpack.c.b16 %v1478, %v1477
      %v1505 = vpack.c.b16 %v1480, %v1479
      %v1506 = vpack.c.b16 %v1482, %v1481
      %v1507 = vpack.c.b16 %v1484, %v1483
      %v1508 = vpack.c.b16 %v1486, %v1485
      %v1509 = vpack.c.b16 %v1488, %v1487
      %v1511 = vshrl.u32 %v1489, 16
      %v1513 = vrot.slane %v1511, 3
      %v1514 = vshll.u32 %v1489, 16
      %v1516 = vrot.slane %v1514, 4
      %v1517 = vor.u32 %v1513, %v1516
      %v1519 = vshrl.u32 %v1490, 16
      %v1521 = vrot.slane %v1519, 3
      %v1522 = vshll.u32 %v1490, 16
      %v1524 = vrot.slane %v1522, 4
      %v1525 = vor.u32 %v1521, %v1524
      %v1526 = vsel %vm1047, %v1517, %v1525
      %v1528 = vshrl.u32 %v1491, 16
      %v1530 = vrot.slane %v1528, 3
      %v1531 = vshll.u32 %v1491, 16
      %v1533 = vrot.slane %v1531, 4
      %v1534 = vor.u32 %v1530, %v1533
      %v1535 = vsel %vm1047, %v1525, %v1534
      %v1537 = vshrl.u32 %v1492, 16
      %v1539 = vrot.slane %v1537, 3
      %v1540 = vshll.u32 %v1492, 16
      %v1542 = vrot.slane %v1540, 4
      %v1543 = vor.u32 %v1539, %v1542
      %v1544 = vsel %vm1047, %v1534, %v1543
      %v1546 = vshrl.u32 %v1493, 16
      %v1548 = vrot.slane %v1546, 3
      %v1549 = vshll.u32 %v1493, 16
      %v1551 = vrot.slane %v1549, 4
      %v1552 = vor.u32 %v1548, %v1551
      %v1553 = vsel %vm1047, %v1543, %v1552
      %v1555 = vshrl.u32 %v1494, 16
      %v1557 = vrot.slane %v1555, 3
      %v1558 = vshll.u32 %v1494, 16
      %v1560 = vrot.slane %v1558, 4
      %v1561 = vor.u32 %v1557, %v1560
      %v1562 = vsel %vm1047, %v1552, %v1561
      %v1564 = vshrl.u32 %v1495, 16
      %v1566 = vrot.slane %v1564, 3
      %v1567 = vshll.u32 %v1495, 16
      %v1569 = vrot.slane %v1567, 4
      %v1570 = vor.u32 %v1566, %v1569
      %v1571 = vsel %vm1047, %v1561, %v1570
      %v1573 = vshrl.u32 %v1496, 16
      %v1575 = vrot.slane %v1573, 3
      %v1576 = vshll.u32 %v1496, 16
      %v1578 = vrot.slane %v1576, 4
      %v1579 = vor.u32 %v1575, %v1578
      %v1580 = vsel %vm1047, %v1570, %v1579
      %v1582 = vshrl.u32 %v1497, 16
      %v1584 = vrot.slane %v1582, 3
      %v1585 = vshll.u32 %v1497, 16
      %v1587 = vrot.slane %v1585, 4
      %v1588 = vor.u32 %v1584, %v1587
      %v1589 = vsel %vm1047, %v1579, %v1588
      %v1591 = vshrl.u32 %v1498, 16
      %v1593 = vrot.slane %v1591, 3
      %v1594 = vshll.u32 %v1498, 16
      %v1596 = vrot.slane %v1594, 4
      %v1597 = vor.u32 %v1593, %v1596
      %v1598 = vsel %vm1047, %v1588, %v1597
      %v1600 = vshrl.u32 %v1499, 16
      %v1602 = vrot.slane %v1600, 3
      %v1603 = vshll.u32 %v1499, 16
      %v1605 = vrot.slane %v1603, 4
      %v1606 = vor.u32 %v1602, %v1605
      %v1607 = vsel %vm1047, %v1597, %v1606
      %v1609 = vshrl.u32 %v1500, 16
      %v1611 = vrot.slane %v1609, 3
      %v1612 = vshll.u32 %v1500, 16
      %v1614 = vrot.slane %v1612, 4
      %v1615 = vor.u32 %v1611, %v1614
      %v1616 = vsel %vm1047, %v1606, %v1615
      %v1618 = vshrl.u32 %v1501, 16
      %v1620 = vrot.slane %v1618, 3
      %v1621 = vshll.u32 %v1501, 16
      %v1623 = vrot.slane %v1621, 4
      %v1624 = vor.u32 %v1620, %v1623
      %v1625 = vsel %vm1047, %v1615, %v1624
      %v1627 = vshrl.u32 %v1502, 16
      %v1629 = vrot.slane %v1627, 3
      %v1630 = vshll.u32 %v1502, 16
      %v1632 = vrot.slane %v1630, 4
      %v1633 = vor.u32 %v1629, %v1632
      %v1634 = vsel %vm1047, %v1624, %v1633
      %v1636 = vshrl.u32 %v1503, 16
      %v1638 = vrot.slane %v1636, 3
      %v1639 = vshll.u32 %v1503, 16
      %v1641 = vrot.slane %v1639, 4
      %v1642 = vor.u32 %v1638, %v1641
      %v1643 = vsel %vm1047, %v1633, %v1642
      %v1645 = vshrl.u32 %v1504, 16
      %v1647 = vrot.slane %v1645, 3
      %v1648 = vshll.u32 %v1504, 16
      %v1650 = vrot.slane %v1648, 4
      %v1651 = vor.u32 %v1647, %v1650
      %v1652 = vsel %vm1047, %v1642, %v1651
      %v1654 = vshrl.u32 %v1505, 16
      %v1656 = vrot.slane %v1654, 3
      %v1657 = vshll.u32 %v1505, 16
      %v1659 = vrot.slane %v1657, 4
      %v1660 = vor.u32 %v1656, %v1659
      %v1661 = vsel %vm1047, %v1651, %v1660
      %v1663 = vshrl.u32 %v1506, 16
      %v1665 = vrot.slane %v1663, 3
      %v1666 = vshll.u32 %v1506, 16
      %v1668 = vrot.slane %v1666, 4
      %v1669 = vor.u32 %v1665, %v1668
      %v1670 = vsel %vm1047, %v1660, %v1669
      %v1672 = vshrl.u32 %v1507, 16
      %v1674 = vrot.slane %v1672, 3
      %v1675 = vshll.u32 %v1507, 16
      %v1677 = vrot.slane %v1675, 4
      %v1678 = vor.u32 %v1674, %v1677
      %v1679 = vsel %vm1047, %v1669, %v1678
      %v1681 = vshrl.u32 %v1508, 16
      %v1683 = vrot.slane %v1681, 3
      %v1684 = vshll.u32 %v1508, 16
      %v1686 = vrot.slane %v1684, 4
      %v1687 = vor.u32 %v1683, %v1686
      %v1688 = vsel %vm1047, %v1678, %v1687
      %v1690 = vshrl.u32 %v1509, 16
      %v1692 = vrot.slane %v1690, 3
      %v1693 = vshll.u32 %v1509, 16
      %v1695 = vrot.slane %v1693, 4
      %v1696 = vor.u32 %v1692, %v1695
      %v1697 = vsel %vm1047, %v1687, %v1696
      %v1699 = vsel %vm486, %v1526, 0
      %v1702 = vsel %vm486, %v1535, 0
      %v1705 = vsel %vm486, %v1544, 0
      %v1708 = vsel %vm486, %v1553, 0
      %v1711 = vsel %vm486, %v1562, 0
      %v1714 = vsel %vm486, %v1571, 0
      %v1717 = vsel %vm486, %v1580, 0
      %v1720 = vsel %vm486, %v1589, 0
      %v1723 = vsel %vm486, %v1598, 0
      %v1726 = vsel %vm486, %v1607, 0
      %v1729 = vsel %vm486, %v1616, 0
      %v1732 = vsel %vm486, %v1625, 0
      %v1735 = vsel %vm486, %v1634, 0
      %v1738 = vsel %vm486, %v1643, 0
      %v1741 = vsel %vm486, %v1652, 0
      %v1744 = vsel %vm486, %v1661, 0
      %v1747 = vsel %vm486, %v1670, 0
      %v1750 = vsel %vm486, %v1679, 0
      %v1753 = vsel %vm486, %v1688, 0
      %v1756 = vsel %vm486, %v1697, 0
      %v1759 = vsel %vm486, %v1696, 0
      %v1762 = vand.u32 %v1404, %v553
      %1764 = vmatpush.bf16.msra.mxu0 0
      %1765 = vmatpush.bf16.msra.mxu0 0
      %1766 = vmatpush.bf16.msra.mxu0 0
      %1767 = vmatpush.bf16.msra.mxu0 0
      %1768 = vmatpush.bf16.msra.mxu0 0
      %1769 = vmatpush.bf16.msra.mxu0 0
      %1770 = vmatpush.bf16.msra.mxu0 0
      %1771 = vmatpush.bf16.msra.mxu0 %v1762
      %1772 = vmatmul.bf16.gmra.mxu0 %v1699
      %v1773 = vpop.f32.mrf.mxu0
      %v1774 = vadd.f32 0.0, %v1773
      %v1775 = vpop.f32.mrf.mxu0
      %v1776 = vadd.f32 0.0, %v1775
      %1777 = vmatmul.bf16.gmra.mxu0 %v1702
      %v1778 = vpop.f32.mrf.mxu0
      %v1779 = vadd.f32 0.0, %v1778
      %v1780 = vpop.f32.mrf.mxu0
      %v1781 = vadd.f32 0.0, %v1780
      %1782 = vmatmul.bf16.gmra.mxu0 %v1705
      %v1783 = vpop.f32.mrf.mxu0
      %v1784 = vadd.f32 0.0, %v1783
      %v1785 = vpop.f32.mrf.mxu0
      %v1786 = vadd.f32 0.0, %v1785
      %1787 = vmatmul.bf16.gmra.mxu0 %v1708
      %v1788 = vpop.f32.mrf.mxu0
      %v1789 = vadd.f32 0.0, %v1788
      %v1790 = vpop.f32.mrf.mxu0
      %v1791 = vadd.f32 0.0, %v1790
      %1792 = vmatmul.bf16.gmra.mxu0 %v1711
      %v1793 = vpop.f32.mrf.mxu0
      %v1794 = vadd.f32 0.0, %v1793
      %v1795 = vpop.f32.mrf.mxu0
      %v1796 = vadd.f32 0.0, %v1795
      %1797 = vmatmul.bf16.gmra.mxu0 %v1714
      %v1798 = vpop.f32.mrf.mxu0
      %v1799 = vadd.f32 0.0, %v1798
      %v1800 = vpop.f32.mrf.mxu0
      %v1801 = vadd.f32 0.0, %v1800
      %1802 = vmatmul.bf16.gmra.mxu0 %v1717
      %v1803 = vpop.f32.mrf.mxu0
      %v1804 = vadd.f32 0.0, %v1803
      %v1805 = vpop.f32.mrf.mxu0
      %v1806 = vadd.f32 0.0, %v1805
      %1807 = vmatmul.bf16.gmra.mxu0 %v1720
      %v1808 = vpop.f32.mrf.mxu0
      %v1809 = vadd.f32 0.0, %v1808
      %v1810 = vpop.f32.mrf.mxu0
      %v1811 = vadd.f32 0.0, %v1810
      %1812 = vmatmul.bf16.gmra.mxu0 %v1723
      %v1813 = vpop.f32.mrf.mxu0
      %v1814 = vadd.f32 0.0, %v1813
      %v1815 = vpop.f32.mrf.mxu0
      %v1816 = vadd.f32 0.0, %v1815
      %1817 = vmatmul.bf16.gmra.mxu0 %v1726
      %v1818 = vpop.f32.mrf.mxu0
      %v1819 = vadd.f32 0.0, %v1818
      %v1820 = vpop.f32.mrf.mxu0
      %v1821 = vadd.f32 0.0, %v1820
      %1822 = vmatmul.bf16.gmra.mxu0 %v1729
      %v1823 = vpop.f32.mrf.mxu0
      %v1824 = vadd.f32 0.0, %v1823
      %v1825 = vpop.f32.mrf.mxu0
      %v1826 = vadd.f32 0.0, %v1825
      %1827 = vmatmul.bf16.gmra.mxu0 %v1732
      %v1828 = vpop.f32.mrf.mxu0
      %v1829 = vadd.f32 0.0, %v1828
      %v1830 = vpop.f32.mrf.mxu0
      %v1831 = vadd.f32 0.0, %v1830
      %1832 = vmatmul.bf16.gmra.mxu0 %v1735
      %v1833 = vpop.f32.mrf.mxu0
      %v1834 = vadd.f32 0.0, %v1833
      %v1835 = vpop.f32.mrf.mxu0
      %v1836 = vadd.f32 0.0, %v1835
      %1837 = vmatmul.bf16.gmra.mxu0 %v1738
      %v1838 = vpop.f32.mrf.mxu0
      %v1839 = vadd.f32 0.0, %v1838
      %v1840 = vpop.f32.mrf.mxu0
      %v1841 = vadd.f32 0.0, %v1840
      %1842 = vmatmul.bf16.gmra.mxu0 %v1741
      %v1843 = vpop.f32.mrf.mxu0
      %v1844 = vadd.f32 0.0, %v1843
      %v1845 = vpop.f32.mrf.mxu0
      %v1846 = vadd.f32 0.0, %v1845
      %1847 = vmatmul.bf16.gmra.mxu0 %v1744
      %v1848 = vpop.f32.mrf.mxu0
      %v1849 = vadd.f32 0.0, %v1848
      %v1850 = vpop.f32.mrf.mxu0
      %v1851 = vadd.f32 0.0, %v1850
      %1852 = vmatmul.bf16.gmra.mxu0 %v1747
      %v1853 = vpop.f32.mrf.mxu0
      %v1854 = vadd.f32 0.0, %v1853
      %v1855 = vpop.f32.mrf.mxu0
      %v1856 = vadd.f32 0.0, %v1855
      %1857 = vmatmul.bf16.gmra.mxu0 %v1750
      %v1858 = vpop.f32.mrf.mxu0
      %v1859 = vadd.f32 0.0, %v1858
      %v1860 = vpop.f32.mrf.mxu0
      %v1861 = vadd.f32 0.0, %v1860
      %1862 = vmatmul.bf16.gmra.mxu0 %v1753
      %v1863 = vpop.f32.mrf.mxu0
      %v1864 = vadd.f32 0.0, %v1863
      %v1865 = vpop.f32.mrf.mxu0
      %v1866 = vadd.f32 0.0, %v1865
      %1867 = vmatmul.bf16.gmra.mxu0 %v1756
      %v1868 = vpop.f32.mrf.mxu0
      %v1869 = vadd.f32 0.0, %v1868
      %v1870 = vpop.f32.mrf.mxu0
      %v1871 = vadd.f32 0.0, %v1870
      %1872 = vmatmul.bf16.gmra.mxu0 %v1759
      %v1873 = vpop.f32.mrf.mxu0
      %v1874 = vadd.f32 0.0, %v1873
      %v1875 = vpop.f32.mrf.mxu0
      %1876 = vdwg.mxu0
      %v1877 = vadd.f32 %v1320, %v1774
      %v1878 = vadd.f32 %v1321, %v1776
      %v1879 = vadd.f32 %v1322, %v1779
      %v1880 = vadd.f32 %v1323, %v1781
      %v1881 = vadd.f32 %v1324, %v1784
      %v1882 = vadd.f32 %v1325, %v1786
      %v1883 = vadd.f32 %v1326, %v1789
      %v1884 = vadd.f32 %v1327, %v1791
      %v1885 = vadd.f32 %v1328, %v1794
      %v1886 = vadd.f32 %v1329, %v1796
      %v1887 = vadd.f32 %v1330, %v1799
      %v1888 = vadd.f32 %v1331, %v1801
      %v1889 = vadd.f32 %v1332, %v1804
      %v1890 = vadd.f32 %v1333, %v1806
      %v1891 = vadd.f32 %v1334, %v1809
      %v1892 = vadd.f32 %v1335, %v1811
      %v1893 = vadd.f32 %v1336, %v1814
      %v1894 = vadd.f32 %v1337, %v1816
      %v1895 = vadd.f32 %v1338, %v1819
      %v1896 = vadd.f32 %v1339, %v1821
      %v1897 = vadd.f32 %v1340, %v1824
      %v1898 = vadd.f32 %v1341, %v1826
      %v1899 = vadd.f32 %v1342, %v1829
      %v1900 = vadd.f32 %v1343, %v1831
      %v1901 = vadd.f32 %v1344, %v1834
      %v1902 = vadd.f32 %v1345, %v1836
      %v1903 = vadd.f32 %v1346, %v1839
      %v1904 = vadd.f32 %v1347, %v1841
      %v1905 = vadd.f32 %v1348, %v1844
      %v1906 = vadd.f32 %v1349, %v1846
      %v1907 = vadd.f32 %v1350, %v1849
      %v1908 = vadd.f32 %v1351, %v1851
      %v1909 = vadd.f32 %v1352, %v1854
      %v1910 = vadd.f32 %v1353, %v1856
      %v1911 = vadd.f32 %v1354, %v1859
      %v1912 = vadd.f32 %v1355, %v1861
      %v1913 = vadd.f32 %v1356, %v1864
      %v1914 = vadd.f32 %v1357, %v1866
      %v1915 = vadd.f32 %v1358, %v1869
      %v1916 = vadd.f32 %v1359, %v1871
      %v1917 = vadd.f32 %v1360, %v1874
      %s1918 = scalar_lea.vmem %s2, 8
      %v1919 = vld [vmem:[%s1918] sm:$0x3]
      %v1920 = vpack.c.b16 %v1449, %v1448
      %v1921 = vpack.c.b16 %v1451, %v1450
      %v1922 = vpack.c.b16 %v1453, %v1452
      %v1923 = vpack.c.b16 %v1455, %v1454
      %v1924 = vpack.c.b16 %v1457, %v1456
      %v1925 = vpack.c.b16 %v1459, %v1458
      %v1926 = vpack.c.b16 %v1461, %v1460
      %v1927 = vpack.c.b16 %v1463, %v1462
      %v1928 = vpack.c.b16 %v1465, %v1464
      %v1929 = vpack.c.b16 %v1467, %v1466
      %v1930 = vpack.c.b16 %v1469, %v1468
      %v1931 = vpack.c.b16 %v1471, %v1470
      %v1932 = vpack.c.b16 %v1473, %v1472
      %v1933 = vpack.c.b16 %v1475, %v1474
      %v1934 = vpack.c.b16 %v1477, %v1476
      %v1935 = vpack.c.b16 %v1479, %v1478
      %v1936 = vpack.c.b16 %v1481, %v1480
      %v1937 = vpack.c.b16 %v1483, %v1482
      %v1938 = vpack.c.b16 %v1485, %v1484
      %v1939 = vpack.c.b16 %v1487, %v1486
      %v1940 = vpack.c.b16 %v1488, %v1488
      %v1942 = vsel %vm486, %v1920, 0
      %v1945 = vsel %vm486, %v1921, 0
      %v1948 = vsel %vm486, %v1922, 0
      %v1951 = vsel %vm486, %v1923, 0
      %v1954 = vsel %vm486, %v1924, 0
      %v1957 = vsel %vm486, %v1925, 0
      %v1960 = vsel %vm486, %v1926, 0
      %v1963 = vsel %vm486, %v1927, 0
      %v1966 = vsel %vm486, %v1928, 0
      %v1969 = vsel %vm486, %v1929, 0
      %v1972 = vsel %vm486, %v1930, 0
      %v1975 = vsel %vm486, %v1931, 0
      %v1978 = vsel %vm486, %v1932, 0
      %v1981 = vsel %vm486, %v1933, 0
      %v1984 = vsel %vm486, %v1934, 0
      %v1987 = vsel %vm486, %v1935, 0
      %v1990 = vsel %vm486, %v1936, 0
      %v1993 = vsel %vm486, %v1937, 0
      %v1996 = vsel %vm486, %v1938, 0
      %v1999 = vsel %vm486, %v1939, 0
      %v2002 = vsel %vm486, %v1940, 0
      %v2005 = vand.u32 %v1919, %v553
      %2007 = vmatpush.bf16.msra.mxu0 0
      %2008 = vmatpush.bf16.msra.mxu0 0
      %2009 = vmatpush.bf16.msra.mxu0 0
      %2010 = vmatpush.bf16.msra.mxu0 0
      %2011 = vmatpush.bf16.msra.mxu0 0
      %2012 = vmatpush.bf16.msra.mxu0 0
      %2013 = vmatpush.bf16.msra.mxu0 0
      %2014 = vmatpush.bf16.msra.mxu0 %v2005
      %2015 = vmatmul.bf16.gmra.mxu0 %v1942
      %v2016 = vpop.f32.mrf.mxu0
      %v2017 = vadd.f32 0.0, %v2016
      %v2018 = vpop.f32.mrf.mxu0
      %v2019 = vadd.f32 0.0, %v2018
      %2020 = vmatmul.bf16.gmra.mxu0 %v1945
      %v2021 = vpop.f32.mrf.mxu0
      %v2022 = vadd.f32 0.0, %v2021
      %v2023 = vpop.f32.mrf.mxu0
      %v2024 = vadd.f32 0.0, %v2023
      %2025 = vmatmul.bf16.gmra.mxu0 %v1948
      %v2026 = vpop.f32.mrf.mxu0
      %v2027 = vadd.f32 0.0, %v2026
      %v2028 = vpop.f32.mrf.mxu0
      %v2029 = vadd.f32 0.0, %v2028
      %2030 = vmatmul.bf16.gmra.mxu0 %v1951
      %v2031 = vpop.f32.mrf.mxu0
      %v2032 = vadd.f32 0.0, %v2031
      %v2033 = vpop.f32.mrf.mxu0
      %v2034 = vadd.f32 0.0, %v2033
      %2035 = vmatmul.bf16.gmra.mxu0 %v1954
      %v2036 = vpop.f32.mrf.mxu0
      %v2037 = vadd.f32 0.0, %v2036
      %v2038 = vpop.f32.mrf.mxu0
      %v2039 = vadd.f32 0.0, %v2038
      %2040 = vmatmul.bf16.gmra.mxu0 %v1957
      %v2041 = vpop.f32.mrf.mxu0
      %v2042 = vadd.f32 0.0, %v2041
      %v2043 = vpop.f32.mrf.mxu0
      %v2044 = vadd.f32 0.0, %v2043
      %2045 = vmatmul.bf16.gmra.mxu0 %v1960
      %v2046 = vpop.f32.mrf.mxu0
      %v2047 = vadd.f32 0.0, %v2046
      %v2048 = vpop.f32.mrf.mxu0
      %v2049 = vadd.f32 0.0, %v2048
      %2050 = vmatmul.bf16.gmra.mxu0 %v1963
      %v2051 = vpop.f32.mrf.mxu0
      %v2052 = vadd.f32 0.0, %v2051
      %v2053 = vpop.f32.mrf.mxu0
      %v2054 = vadd.f32 0.0, %v2053
      %2055 = vmatmul.bf16.gmra.mxu0 %v1966
      %v2056 = vpop.f32.mrf.mxu0
      %v2057 = vadd.f32 0.0, %v2056
      %v2058 = vpop.f32.mrf.mxu0
      %v2059 = vadd.f32 0.0, %v2058
      %2060 = vmatmul.bf16.gmra.mxu0 %v1969
      %v2061 = vpop.f32.mrf.mxu0
      %v2062 = vadd.f32 0.0, %v2061
      %v2063 = vpop.f32.mrf.mxu0
      %v2064 = vadd.f32 0.0, %v2063
      %2065 = vmatmul.bf16.gmra.mxu0 %v1972
      %v2066 = vpop.f32.mrf.mxu0
      %v2067 = vadd.f32 0.0, %v2066
      %v2068 = vpop.f32.mrf.mxu0
      %v2069 = vadd.f32 0.0, %v2068
      %2070 = vmatmul.bf16.gmra.mxu0 %v1975
      %v2071 = vpop.f32.mrf.mxu0
      %v2072 = vadd.f32 0.0, %v2071
      %v2073 = vpop.f32.mrf.mxu0
      %v2074 = vadd.f32 0.0, %v2073
      %2075 = vmatmul.bf16.gmra.mxu0 %v1978
      %v2076 = vpop.f32.mrf.mxu0
      %v2077 = vadd.f32 0.0, %v2076
      %v2078 = vpop.f32.mrf.mxu0
      %v2079 = vadd.f32 0.0, %v2078
      %2080 = vmatmul.bf16.gmra.mxu0 %v1981
      %v2081 = vpop.f32.mrf.mxu0
      %v2082 = vadd.f32 0.0, %v2081
      %v2083 = vpop.f32.mrf.mxu0
      %v2084 = vadd.f32 0.0, %v2083
      %2085 = vmatmul.bf16.gmra.mxu0 %v1984
      %v2086 = vpop.f32.mrf.mxu0
      %v2087 = vadd.f32 0.0, %v2086
      %v2088 = vpop.f32.mrf.mxu0
      %v2089 = vadd.f32 0.0, %v2088
      %2090 = vmatmul.bf16.gmra.mxu0 %v1987
      %v2091 = vpop.f32.mrf.mxu0
      %v2092 = vadd.f32 0.0, %v2091
      %v2093 = vpop.f32.mrf.mxu0
      %v2094 = vadd.f32 0.0, %v2093
      %2095 = vmatmul.bf16.gmra.mxu0 %v1990
      %v2096 = vpop.f32.mrf.mxu0
      %v2097 = vadd.f32 0.0, %v2096
      %v2098 = vpop.f32.mrf.mxu0
      %v2099 = vadd.f32 0.0, %v2098
      %2100 = vmatmul.bf16.gmra.mxu0 %v1993
      %v2101 = vpop.f32.mrf.mxu0
      %v2102 = vadd.f32 0.0, %v2101
      %v2103 = vpop.f32.mrf.mxu0
      %v2104 = vadd.f32 0.0, %v2103
      %2105 = vmatmul.bf16.gmra.mxu0 %v1996
      %v2106 = vpop.f32.mrf.mxu0
      %v2107 = vadd.f32 0.0, %v2106
      %v2108 = vpop.f32.mrf.mxu0
      %v2109 = vadd.f32 0.0, %v2108
      %2110 = vmatmul.bf16.gmra.mxu0 %v1999
      %v2111 = vpop.f32.mrf.mxu0
      %v2112 = vadd.f32 0.0, %v2111
      %v2113 = vpop.f32.mrf.mxu0
      %v2114 = vadd.f32 0.0, %v2113
      %2115 = vmatmul.bf16.gmra.mxu0 %v2002
      %v2116 = vpop.f32.mrf.mxu0
      %v2117 = vadd.f32 0.0, %v2116
      %v2118 = vpop.f32.mrf.mxu0
      %2119 = vdwg.mxu0
      %v2120 = vadd.f32 %v1877, %v2017
      %v2121 = vadd.f32 %v1878, %v2019
      %v2122 = vadd.f32 %v1879, %v2022
      %v2123 = vadd.f32 %v1880, %v2024
      %v2124 = vadd.f32 %v1881, %v2027
      %v2125 = vadd.f32 %v1882, %v2029
      %v2126 = vadd.f32 %v1883, %v2032
      %v2127 = vadd.f32 %v1884, %v2034
      %v2128 = vadd.f32 %v1885, %v2037
      %v2129 = vadd.f32 %v1886, %v2039
      %v2130 = vadd.f32 %v1887, %v2042
      %v2131 = vadd.f32 %v1888, %v2044
      %v2132 = vadd.f32 %v1889, %v2047
      %v2133 = vadd.f32 %v1890, %v2049
      %v2134 = vadd.f32 %v1891, %v2052
      %v2135 = vadd.f32 %v1892, %v2054
      %v2136 = vadd.f32 %v1893, %v2057
      %v2137 = vadd.f32 %v1894, %v2059
      %v2138 = vadd.f32 %v1895, %v2062
      %v2139 = vadd.f32 %v1896, %v2064
      %v2140 = vadd.f32 %v1897, %v2067
      %v2141 = vadd.f32 %v1898, %v2069
      %v2142 = vadd.f32 %v1899, %v2072
      %v2143 = vadd.f32 %v1900, %v2074
      %v2144 = vadd.f32 %v1901, %v2077
      %v2145 = vadd.f32 %v1902, %v2079
      %v2146 = vadd.f32 %v1903, %v2082
      %v2147 = vadd.f32 %v1904, %v2084
      %v2148 = vadd.f32 %v1905, %v2087
      %v2149 = vadd.f32 %v1906, %v2089
      %v2150 = vadd.f32 %v1907, %v2092
      %v2151 = vadd.f32 %v1908, %v2094
      %v2152 = vadd.f32 %v1909, %v2097
      %v2153 = vadd.f32 %v1910, %v2099
      %v2154 = vadd.f32 %v1911, %v2102
      %v2155 = vadd.f32 %v1912, %v2104
      %v2156 = vadd.f32 %v1913, %v2107
      %v2157 = vadd.f32 %v1914, %v2109
      %v2158 = vadd.f32 %v1915, %v2112
      %v2159 = vadd.f32 %v1916, %v2114
      %v2160 = vadd.f32 %v1917, %v2117
      %v2161 = vld [vmem:[#allocation2 + $0xb0] sm:$0x7]
      %s2162 = scalar_lea.vmem %s2, 10
      %v2163 = vld [vmem:[%s2162] sm:$0x3]
      %v2165 = vunpack.c.l.b16 %v2161
      %v2166 = vpack.c.b16 %v2165, %v2165
      %vm2167 = vsmask.f32 7424
      %v2168 = vshrl.u32 %v1920, 16
      %v2170 = vshll.u32 %v1920, 16
      %v2172 = vrot.slane %v2170, 1
      %v2173 = vor.u32 %v2168, %v2172
      %v2174 = vshll.u32 %v1921, 16
      %v2176 = vrot.slane %v2174, 1
      %v2177 = vsel %vm2167, %v2173, %v2176
      %v2178 = vshrl.u32 %v1921, 16
      %v2180 = vor.u32 %v2178, %v2176
      %v2181 = vshll.u32 %v1922, 16
      %v2183 = vrot.slane %v2181, 1
      %v2184 = vsel %vm2167, %v2180, %v2183
      %v2185 = vshrl.u32 %v1922, 16
      %v2187 = vor.u32 %v2185, %v2183
      %v2188 = vshll.u32 %v1923, 16
      %v2190 = vrot.slane %v2188, 1
      %v2191 = vsel %vm2167, %v2187, %v2190
      %v2192 = vshrl.u32 %v1923, 16
      %v2194 = vor.u32 %v2192, %v2190
      %v2195 = vshll.u32 %v1924, 16
      %v2197 = vrot.slane %v2195, 1
      %v2198 = vsel %vm2167, %v2194, %v2197
      %v2199 = vshrl.u32 %v1924, 16
      %v2201 = vor.u32 %v2199, %v2197
      %v2202 = vshll.u32 %v1925, 16
      %v2204 = vrot.slane %v2202, 1
      %v2205 = vsel %vm2167, %v2201, %v2204
      %v2206 = vshrl.u32 %v1925, 16
      %v2208 = vor.u32 %v2206, %v2204
      %v2209 = vshll.u32 %v1926, 16
      %v2211 = vrot.slane %v2209, 1
      %v2212 = vsel %vm2167, %v2208, %v2211
      %v2213 = vshrl.u32 %v1926, 16
      %v2215 = vor.u32 %v2213, %v2211
      %v2216 = vshll.u32 %v1927, 16
      %v2218 = vrot.slane %v2216, 1
      %v2219 = vsel %vm2167, %v2215, %v2218
      %v2220 = vshrl.u32 %v1927, 16
      %v2222 = vor.u32 %v2220, %v2218
      %v2223 = vshll.u32 %v1928, 16
      %v2225 = vrot.slane %v2223, 1
      %v2226 = vsel %vm2167, %v2222, %v2225
      %v2227 = vshrl.u32 %v1928, 16
      %v2229 = vor.u32 %v2227, %v2225
      %v2230 = vshll.u32 %v1929, 16
      %v2232 = vrot.slane %v2230, 1
      %v2233 = vsel %vm2167, %v2229, %v2232
      %v2234 = vshrl.u32 %v1929, 16
      %v2236 = vor.u32 %v2234, %v2232
      %v2237 = vshll.u32 %v1930, 16
      %v2239 = vrot.slane %v2237, 1
      %v2240 = vsel %vm2167, %v2236, %v2239
      %v2241 = vshrl.u32 %v1930, 16
      %v2243 = vor.u32 %v2241, %v2239
      %v2244 = vshll.u32 %v1931, 16
      %v2246 = vrot.slane %v2244, 1
      %v2247 = vsel %vm2167, %v2243, %v2246
      %v2248 = vshrl.u32 %v1931, 16
      %v2250 = vor.u32 %v2248, %v2246
      %v2251 = vshll.u32 %v1932, 16
      %v2253 = vrot.slane %v2251, 1
      %v2254 = vsel %vm2167, %v2250, %v2253
      %v2255 = vshrl.u32 %v1932, 16
      %v2257 = vor.u32 %v2255, %v2253
      %v2258 = vshll.u32 %v1933, 16
      %v2260 = vrot.slane %v2258, 1
      %v2261 = vsel %vm2167, %v2257, %v2260
      %v2262 = vshrl.u32 %v1933, 16
      %v2264 = vor.u32 %v2262, %v2260
      %v2265 = vshll.u32 %v1934, 16
      %v2267 = vrot.slane %v2265, 1
      %v2268 = vsel %vm2167, %v2264, %v2267
      %v2269 = vshrl.u32 %v1934, 16
      %v2271 = vor.u32 %v2269, %v2267
      %v2272 = vshll.u32 %v1935, 16
      %v2274 = vrot.slane %v2272, 1
      %v2275 = vsel %vm2167, %v2271, %v2274
      %v2276 = vshrl.u32 %v1935, 16
      %v2278 = vor.u32 %v2276, %v2274
      %v2279 = vshll.u32 %v1936, 16
      %v2281 = vrot.slane %v2279, 1
      %v2282 = vsel %vm2167, %v2278, %v2281
      %v2283 = vshrl.u32 %v1936, 16
      %v2285 = vor.u32 %v2283, %v2281
      %v2286 = vshll.u32 %v1937, 16
      %v2288 = vrot.slane %v2286, 1
      %v2289 = vsel %vm2167, %v2285, %v2288
      %v2290 = vshrl.u32 %v1937, 16
      %v2292 = vor.u32 %v2290, %v2288
      %v2293 = vshll.u32 %v1938, 16
      %v2295 = vrot.slane %v2293, 1
      %v2296 = vsel %vm2167, %v2292, %v2295
      %v2297 = vshrl.u32 %v1938, 16
      %v2299 = vor.u32 %v2297, %v2295
      %v2300 = vshll.u32 %v1939, 16
      %v2302 = vrot.slane %v2300, 1
      %v2303 = vsel %vm2167, %v2299, %v2302
      %v2304 = vshrl.u32 %v1939, 16
      %v2306 = vor.u32 %v2304, %v2302
      %v2308 = vshll.u32 %v2166, 16
      %v2310 = vrot.slane %v2308, 1
      %v2311 = vsel %vm2167, %v2306, %v2310
      %v2312 = vshrl.u32 %v2166, 16
      %v2314 = vor.u32 %v2312, %v2310
      %v2316 = vsel %vm486, %v2177, 0
      %v2319 = vsel %vm486, %v2184, 0
      %v2322 = vsel %vm486, %v2191, 0
      %v2325 = vsel %vm486, %v2198, 0
      %v2328 = vsel %vm486, %v2205, 0
      %v2331 = vsel %vm486, %v2212, 0
      %v2334 = vsel %vm486, %v2219, 0
      %v2337 = vsel %vm486, %v2226, 0
      %v2340 = vsel %vm486, %v2233, 0
      %v2343 = vsel %vm486, %v2240, 0
      %v2346 = vsel %vm486, %v2247, 0
      %v2349 = vsel %vm486, %v2254, 0
      %v2352 = vsel %vm486, %v2261, 0
      %v2355 = vsel %vm486, %v2268, 0
      %v2358 = vsel %vm486, %v2275, 0
      %v2361 = vsel %vm486, %v2282, 0
      %v2364 = vsel %vm486, %v2289, 0
      %v2367 = vsel %vm486, %v2296, 0
      %v2370 = vsel %vm486, %v2303, 0
      %v2373 = vsel %vm486, %v2311, 0
      %v2376 = vsel %vm486, %v2314, 0
      %v2379 = vand.u32 %v2163, %v553
      %2381 = vmatpush.bf16.msra.mxu0 0
      %2382 = vmatpush.bf16.msra.mxu0 0
      %2383 = vmatpush.bf16.msra.mxu0 0
      %2384 = vmatpush.bf16.msra.mxu0 0
      %2385 = vmatpush.bf16.msra.mxu0 0
      %2386 = vmatpush.bf16.msra.mxu0 0
      %2387 = vmatpush.bf16.msra.mxu0 0
      %2388 = vmatpush.bf16.msra.mxu0 %v2379
      %2389 = vmatmul.bf16.gmra.mxu0 %v2316
      %v2390 = vpop.f32.mrf.mxu0
      %v2391 = vadd.f32 0.0, %v2390
      %v2392 = vpop.f32.mrf.mxu0
      %v2393 = vadd.f32 0.0, %v2392
      %2394 = vmatmul.bf16.gmra.mxu0 %v2319
      %v2395 = vpop.f32.mrf.mxu0
      %v2396 = vadd.f32 0.0, %v2395
      %v2397 = vpop.f32.mrf.mxu0
      %v2398 = vadd.f32 0.0, %v2397
      %2399 = vmatmul.bf16.gmra.mxu0 %v2322
      %v2400 = vpop.f32.mrf.mxu0
      %v2401 = vadd.f32 0.0, %v2400
      %v2402 = vpop.f32.mrf.mxu0
      %v2403 = vadd.f32 0.0, %v2402
      %2404 = vmatmul.bf16.gmra.mxu0 %v2325
      %v2405 = vpop.f32.mrf.mxu0
      %v2406 = vadd.f32 0.0, %v2405
      %v2407 = vpop.f32.mrf.mxu0
      %v2408 = vadd.f32 0.0, %v2407
      %2409 = vmatmul.bf16.gmra.mxu0 %v2328
      %v2410 = vpop.f32.mrf.mxu0
      %v2411 = vadd.f32 0.0, %v2410
      %v2412 = vpop.f32.mrf.mxu0
      %v2413 = vadd.f32 0.0, %v2412
      %2414 = vmatmul.bf16.gmra.mxu0 %v2331
      %v2415 = vpop.f32.mrf.mxu0
      %v2416 = vadd.f32 0.0, %v2415
      %v2417 = vpop.f32.mrf.mxu0
      %v2418 = vadd.f32 0.0, %v2417
      %2419 = vmatmul.bf16.gmra.mxu0 %v2334
      %v2420 = vpop.f32.mrf.mxu0
      %v2421 = vadd.f32 0.0, %v2420
      %v2422 = vpop.f32.mrf.mxu0
      %v2423 = vadd.f32 0.0, %v2422
      %2424 = vmatmul.bf16.gmra.mxu0 %v2337
      %v2425 = vpop.f32.mrf.mxu0
      %v2426 = vadd.f32 0.0, %v2425
      %v2427 = vpop.f32.mrf.mxu0
      %v2428 = vadd.f32 0.0, %v2427
      %2429 = vmatmul.bf16.gmra.mxu0 %v2340
      %v2430 = vpop.f32.mrf.mxu0
      %v2431 = vadd.f32 0.0, %v2430
      %v2432 = vpop.f32.mrf.mxu0
      %v2433 = vadd.f32 0.0, %v2432
      %2434 = vmatmul.bf16.gmra.mxu0 %v2343
      %v2435 = vpop.f32.mrf.mxu0
      %v2436 = vadd.f32 0.0, %v2435
      %v2437 = vpop.f32.mrf.mxu0
      %v2438 = vadd.f32 0.0, %v2437
      %2439 = vmatmul.bf16.gmra.mxu0 %v2346
      %v2440 = vpop.f32.mrf.mxu0
      %v2441 = vadd.f32 0.0, %v2440
      %v2442 = vpop.f32.mrf.mxu0
      %v2443 = vadd.f32 0.0, %v2442
      %2444 = vmatmul.bf16.gmra.mxu0 %v2349
      %v2445 = vpop.f32.mrf.mxu0
      %v2446 = vadd.f32 0.0, %v2445
      %v2447 = vpop.f32.mrf.mxu0
      %v2448 = vadd.f32 0.0, %v2447
      %2449 = vmatmul.bf16.gmra.mxu0 %v2352
      %v2450 = vpop.f32.mrf.mxu0
      %v2451 = vadd.f32 0.0, %v2450
      %v2452 = vpop.f32.mrf.mxu0
      %v2453 = vadd.f32 0.0, %v2452
      %2454 = vmatmul.bf16.gmra.mxu0 %v2355
      %v2455 = vpop.f32.mrf.mxu0
      %v2456 = vadd.f32 0.0, %v2455
      %v2457 = vpop.f32.mrf.mxu0
      %v2458 = vadd.f32 0.0, %v2457
      %2459 = vmatmul.bf16.gmra.mxu0 %v2358
      %v2460 = vpop.f32.mrf.mxu0
      %v2461 = vadd.f32 0.0, %v2460
      %v2462 = vpop.f32.mrf.mxu0
      %v2463 = vadd.f32 0.0, %v2462
      %2464 = vmatmul.bf16.gmra.mxu0 %v2361
      %v2465 = vpop.f32.mrf.mxu0
      %v2466 = vadd.f32 0.0, %v2465
      %v2467 = vpop.f32.mrf.mxu0
      %v2468 = vadd.f32 0.0, %v2467
      %2469 = vmatmul.bf16.gmra.mxu0 %v2364
      %v2470 = vpop.f32.mrf.mxu0
      %v2471 = vadd.f32 0.0, %v2470
      %v2472 = vpop.f32.mrf.mxu0
      %v2473 = vadd.f32 0.0, %v2472
      %2474 = vmatmul.bf16.gmra.mxu0 %v2367
      %v2475 = vpop.f32.mrf.mxu0
      %v2476 = vadd.f32 0.0, %v2475
      %v2477 = vpop.f32.mrf.mxu0
      %v2478 = vadd.f32 0.0, %v2477
      %2479 = vmatmul.bf16.gmra.mxu0 %v2370
      %v2480 = vpop.f32.mrf.mxu0
      %v2481 = vadd.f32 0.0, %v2480
      %v2482 = vpop.f32.mrf.mxu0
      %v2483 = vadd.f32 0.0, %v2482
      %2484 = vmatmul.bf16.gmra.mxu0 %v2373
      %v2485 = vpop.f32.mrf.mxu0
      %v2486 = vadd.f32 0.0, %v2485
      %v2487 = vpop.f32.mrf.mxu0
      %v2488 = vadd.f32 0.0, %v2487
      %2489 = vmatmul.bf16.gmra.mxu0 %v2376
      %v2490 = vpop.f32.mrf.mxu0
      %v2491 = vadd.f32 0.0, %v2490
      %v2492 = vpop.f32.mrf.mxu0
      %2493 = vdwg.mxu0
      %v2494 = vadd.f32 %v2120, %v2391
      %v2495 = vadd.f32 %v2121, %v2393
      %v2496 = vadd.f32 %v2122, %v2396
      %v2497 = vadd.f32 %v2123, %v2398
      %v2498 = vadd.f32 %v2124, %v2401
      %v2499 = vadd.f32 %v2125, %v2403
      %v2500 = vadd.f32 %v2126, %v2406
      %v2501 = vadd.f32 %v2127, %v2408
      %v2502 = vadd.f32 %v2128, %v2411
      %v2503 = vadd.f32 %v2129, %v2413
      %v2504 = vadd.f32 %v2130, %v2416
      %v2505 = vadd.f32 %v2131, %v2418
      %v2506 = vadd.f32 %v2132, %v2421
      %v2507 = vadd.f32 %v2133, %v2423
      %v2508 = vadd.f32 %v2134, %v2426
      %v2509 = vadd.f32 %v2135, %v2428
      %v2510 = vadd.f32 %v2136, %v2431
      %v2511 = vadd.f32 %v2137, %v2433
      %v2512 = vadd.f32 %v2138, %v2436
      %v2513 = vadd.f32 %v2139, %v2438
      %v2514 = vadd.f32 %v2140, %v2441
      %v2515 = vadd.f32 %v2141, %v2443
      %v2516 = vadd.f32 %v2142, %v2446
      %v2517 = vadd.f32 %v2143, %v2448
      %v2518 = vadd.f32 %v2144, %v2451
      %v2519 = vadd.f32 %v2145, %v2453
      %v2520 = vadd.f32 %v2146, %v2456
      %v2521 = vadd.f32 %v2147, %v2458
      %v2522 = vadd.f32 %v2148, %v2461
      %v2523 = vadd.f32 %v2149, %v2463
      %v2524 = vadd.f32 %v2150, %v2466
      %v2525 = vadd.f32 %v2151, %v2468
      %v2526 = vadd.f32 %v2152, %v2471
      %v2527 = vadd.f32 %v2153, %v2473
      %v2528 = vadd.f32 %v2154, %v2476
      %v2529 = vadd.f32 %v2155, %v2478
      %v2530 = vadd.f32 %v2156, %v2481
      %v2531 = vadd.f32 %v2157, %v2483
      %v2532 = vadd.f32 %v2158, %v2486
      %v2533 = vadd.f32 %v2159, %v2488
      %v2534 = vadd.f32 %v2160, %v2491
      %v2535 = vld [vmem:[#allocation2 + $0x18] sm:$0xf]
      %v2536 = vld [vmem:[#allocation2 + $0x1c] sm:$0xf]
      %v2537 = vld [vmem:[#allocation2 + $0x20] sm:$0xf]
      %v2538 = vld [vmem:[#allocation2 + $0x24] sm:$0xf]
      %v2539 = vld [vmem:[#allocation2 + $0x28] sm:$0xf]
      %v2540 = vld [vmem:[#allocation2 + $0x2c] sm:$0xf]
      %v2541 = vld [vmem:[#allocation2 + $0x30] sm:$0xf]
      %v2542 = vld [vmem:[#allocation2 + $0x34] sm:$0xf]
      %v2543 = vld [vmem:[#allocation2 + $0x38] sm:$0xf]
      %v2544 = vld [vmem:[#allocation2 + $0x3c] sm:$0xf]
      %v2545 = vld [vmem:[#allocation2 + $0x40] sm:$0xf]
      %v2546 = vld [vmem:[#allocation2 + $0x44] sm:$0xf]
      %v2547 = vld [vmem:[#allocation2 + $0x48] sm:$0xf]
      %v2548 = vld [vmem:[#allocation2 + $0x4c] sm:$0xf]
      %v2549 = vld [vmem:[#allocation2 + $0x50] sm:$0xf]
      %v2550 = vld [vmem:[#allocation2 + $0x54] sm:$0xf]
      %v2551 = vld [vmem:[#allocation2 + $0x58] sm:$0xf]
      %v2552 = vld [vmem:[#allocation2 + $0x5c] sm:$0xf]
      %v2553 = vld [vmem:[#allocation2 + $0x60] sm:$0xf]
      %v2554 = vld [vmem:[#allocation2 + $0x64] sm:$0xf]
      %v2555 = vld [vmem:[#allocation2 + $0x68] sm:$0xf]
      %v2556 = vld [vmem:[#allocation2 + $0x6c] sm:$0xf]
      %v2557 = vld [vmem:[#allocation2 + $0x70] sm:$0xf]
      %v2558 = vld [vmem:[#allocation2 + $0x74] sm:$0xf]
      %v2559 = vld [vmem:[#allocation2 + $0x78] sm:$0xf]
      %v2560 = vld [vmem:[#allocation2 + $0x7c] sm:$0xf]
      %v2561 = vld [vmem:[#allocation2 + $0x80] sm:$0xf]
      %v2562 = vld [vmem:[#allocation2 + $0x84] sm:$0xf]
      %v2563 = vld [vmem:[#allocation2 + $0x88] sm:$0xf]
      %v2564 = vld [vmem:[#allocation2 + $0x8c] sm:$0xf]
      %v2565 = vld [vmem:[#allocation2 + $0x90] sm:$0xf]
      %v2566 = vld [vmem:[#allocation2 + $0x94] sm:$0xf]
      %v2567 = vld [vmem:[#allocation2 + $0x98] sm:$0xf]
      %v2568 = vld [vmem:[#allocation2 + $0x9c] sm:$0xf]
      %v2569 = vld [vmem:[#allocation2 + $0xa0] sm:$0xf]
      %v2570 = vld [vmem:[#allocation2 + $0xa4] sm:$0xf]
      %v2571 = vld [vmem:[#allocation2 + $0xa8] sm:$0xf]
      %v2572 = vld [vmem:[#allocation2 + $0xac] sm:$0xf]
      %v2573 = vld [vmem:[#allocation2 + $0xb0] sm:$0xf]
      %v2574 = vld [vmem:[#allocation2 + $0xb4] sm:$0xf]
      %v2575 = vld [vmem:[#allocation2 + $0xb8] sm:$0x7]
      %s2576 = scalar_lea.vmem %s2, 12
      %v2577 = vld [vmem:[%s2576] sm:$0x3]
      %v2619 = vunpack.c.l.b16 %v2535
      %v2620 = vunpack.c.l.b16 %v2536
      %v2621 = vunpack.c.l.b16 %v2537
      %v2622 = vunpack.c.l.b16 %v2538
      %v2623 = vunpack.c.l.b16 %v2539
      %v2624 = vunpack.c.l.b16 %v2540
      %v2625 = vunpack.c.l.b16 %v2541
      %v2626 = vunpack.c.l.b16 %v2542
      %v2627 = vunpack.c.l.b16 %v2543
      %v2628 = vunpack.c.l.b16 %v2544
      %v2629 = vunpack.c.l.b16 %v2545
      %v2630 = vunpack.c.l.b16 %v2546
      %v2631 = vunpack.c.l.b16 %v2547
      %v2632 = vunpack.c.l.b16 %v2548
      %v2633 = vunpack.c.l.b16 %v2549
      %v2634 = vunpack.c.l.b16 %v2550
      %v2635 = vunpack.c.l.b16 %v2551
      %v2636 = vunpack.c.l.b16 %v2552
      %v2637 = vunpack.c.l.b16 %v2553
      %v2638 = vunpack.c.l.b16 %v2554
      %v2639 = vunpack.c.l.b16 %v2555
      %v2640 = vunpack.c.l.b16 %v2556
      %v2641 = vunpack.c.l.b16 %v2557
      %v2642 = vunpack.c.l.b16 %v2558
      %v2643 = vunpack.c.l.b16 %v2559
      %v2644 = vunpack.c.l.b16 %v2560
      %v2645 = vunpack.c.l.b16 %v2561
      %v2646 = vunpack.c.l.b16 %v2562
      %v2647 = vunpack.c.l.b16 %v2563
      %v2648 = vunpack.c.l.b16 %v2564
      %v2649 = vunpack.c.l.b16 %v2565
      %v2650 = vunpack.c.l.b16 %v2566
      %v2651 = vunpack.c.l.b16 %v2567
      %v2652 = vunpack.c.l.b16 %v2568
      %v2653 = vunpack.c.l.b16 %v2569
      %v2654 = vunpack.c.l.b16 %v2570
      %v2655 = vunpack.c.l.b16 %v2571
      %v2656 = vunpack.c.l.b16 %v2572
      %v2657 = vunpack.c.l.b16 %v2573
      %v2658 = vunpack.c.l.b16 %v2574
      %v2659 = vunpack.c.l.b16 %v2575
      %v2660 = vpack.c.b16 %v2620, %v2619
      %v2661 = vpack.c.b16 %v2622, %v2621
      %v2662 = vpack.c.b16 %v2624, %v2623
      %v2663 = vpack.c.b16 %v2626, %v2625
      %v2664 = vpack.c.b16 %v2628, %v2627
      %v2665 = vpack.c.b16 %v2630, %v2629
      %v2666 = vpack.c.b16 %v2632, %v2631
      %v2667 = vpack.c.b16 %v2634, %v2633
      %v2668 = vpack.c.b16 %v2636, %v2635
      %v2669 = vpack.c.b16 %v2638, %v2637
      %v2670 = vpack.c.b16 %v2640, %v2639
      %v2671 = vpack.c.b16 %v2642, %v2641
      %v2672 = vpack.c.b16 %v2644, %v2643
      %v2673 = vpack.c.b16 %v2646, %v2645
      %v2674 = vpack.c.b16 %v2648, %v2647
      %v2675 = vpack.c.b16 %v2650, %v2649
      %v2676 = vpack.c.b16 %v2652, %v2651
      %v2677 = vpack.c.b16 %v2654, %v2653
      %v2678 = vpack.c.b16 %v2656, %v2655
      %v2679 = vpack.c.b16 %v2658, %v2657
      %v2680 = vpack.c.b16 %v2659, %v2659
      %v2682 = vshrl.u32 %v2660, 16
      %v2684 = vshll.u32 %v2660, 16
      %v2686 = vrot.slane %v2684, 1
      %v2687 = vor.u32 %v2682, %v2686
      %v2689 = vshll.u32 %v2661, 16
      %v2691 = vrot.slane %v2689, 1
      %v2692 = vsel %vm2167, %v2687, %v2691
      %v2693 = vshrl.u32 %v2661, 16
      %v2695 = vor.u32 %v2693, %v2691
      %v2697 = vshll.u32 %v2662, 16
      %v2699 = vrot.slane %v2697, 1
      %v2700 = vsel %vm2167, %v2695, %v2699
      %v2701 = vshrl.u32 %v2662, 16
      %v2703 = vor.u32 %v2701, %v2699
      %v2705 = vshll.u32 %v2663, 16
      %v2707 = vrot.slane %v2705, 1
      %v2708 = vsel %vm2167, %v2703, %v2707
      %v2709 = vshrl.u32 %v2663, 16
      %v2711 = vor.u32 %v2709, %v2707
      %v2713 = vshll.u32 %v2664, 16
      %v2715 = vrot.slane %v2713, 1
      %v2716 = vsel %vm2167, %v2711, %v2715
      %v2717 = vshrl.u32 %v2664, 16
      %v2719 = vor.u32 %v2717, %v2715
      %v2721 = vshll.u32 %v2665, 16
      %v2723 = vrot.slane %v2721, 1
      %v2724 = vsel %vm2167, %v2719, %v2723
      %v2725 = vshrl.u32 %v2665, 16
      %v2727 = vor.u32 %v2725, %v2723
      %v2729 = vshll.u32 %v2666, 16
      %v2731 = vrot.slane %v2729, 1
      %v2732 = vsel %vm2167, %v2727, %v2731
      %v2733 = vshrl.u32 %v2666, 16
      %v2735 = vor.u32 %v2733, %v2731
      %v2737 = vshll.u32 %v2667, 16
      %v2739 = vrot.slane %v2737, 1
      %v2740 = vsel %vm2167, %v2735, %v2739
      %v2741 = vshrl.u32 %v2667, 16
      %v2743 = vor.u32 %v2741, %v2739
      %v2745 = vshll.u32 %v2668, 16
      %v2747 = vrot.slane %v2745, 1
      %v2748 = vsel %vm2167, %v2743, %v2747
      %v2749 = vshrl.u32 %v2668, 16
      %v2751 = vor.u32 %v2749, %v2747
      %v2753 = vshll.u32 %v2669, 16
      %v2755 = vrot.slane %v2753, 1
      %v2756 = vsel %vm2167, %v2751, %v2755
      %v2757 = vshrl.u32 %v2669, 16
      %v2759 = vor.u32 %v2757, %v2755
      %v2761 = vshll.u32 %v2670, 16
      %v2763 = vrot.slane %v2761, 1
      %v2764 = vsel %vm2167, %v2759, %v2763
      %v2765 = vshrl.u32 %v2670, 16
      %v2767 = vor.u32 %v2765, %v2763
      %v2769 = vshll.u32 %v2671, 16
      %v2771 = vrot.slane %v2769, 1
      %v2772 = vsel %vm2167, %v2767, %v2771
      %v2773 = vshrl.u32 %v2671, 16
      %v2775 = vor.u32 %v2773, %v2771
      %v2777 = vshll.u32 %v2672, 16
      %v2779 = vrot.slane %v2777, 1
      %v2780 = vsel %vm2167, %v2775, %v2779
      %v2781 = vshrl.u32 %v2672, 16
      %v2783 = vor.u32 %v2781, %v2779
      %v2785 = vshll.u32 %v2673, 16
      %v2787 = vrot.slane %v2785, 1
      %v2788 = vsel %vm2167, %v2783, %v2787
      %v2789 = vshrl.u32 %v2673, 16
      %v2791 = vor.u32 %v2789, %v2787
      %v2793 = vshll.u32 %v2674, 16
      %v2795 = vrot.slane %v2793, 1
      %v2796 = vsel %vm2167, %v2791, %v2795
      %v2797 = vshrl.u32 %v2674, 16
      %v2799 = vor.u32 %v2797, %v2795
      %v2801 = vshll.u32 %v2675, 16
      %v2803 = vrot.slane %v2801, 1
      %v2804 = vsel %vm2167, %v2799, %v2803
      %v2805 = vshrl.u32 %v2675, 16
      %v2807 = vor.u32 %v2805, %v2803
      %v2809 = vshll.u32 %v2676, 16
      %v2811 = vrot.slane %v2809, 1
      %v2812 = vsel %vm2167, %v2807, %v2811
      %v2813 = vshrl.u32 %v2676, 16
      %v2815 = vor.u32 %v2813, %v2811
      %v2817 = vshll.u32 %v2677, 16
      %v2819 = vrot.slane %v2817, 1
      %v2820 = vsel %vm2167, %v2815, %v2819
      %v2821 = vshrl.u32 %v2677, 16
      %v2823 = vor.u32 %v2821, %v2819
      %v2825 = vshll.u32 %v2678, 16
      %v2827 = vrot.slane %v2825, 1
      %v2828 = vsel %vm2167, %v2823, %v2827
      %v2829 = vshrl.u32 %v2678, 16
      %v2831 = vor.u32 %v2829, %v2827
      %v2833 = vshll.u32 %v2679, 16
      %v2835 = vrot.slane %v2833, 1
      %v2836 = vsel %vm2167, %v2831, %v2835
      %v2837 = vshrl.u32 %v2679, 16
      %v2839 = vor.u32 %v2837, %v2835
      %v2841 = vshll.u32 %v2680, 16
      %v2843 = vrot.slane %v2841, 1
      %v2844 = vsel %vm2167, %v2839, %v2843
      %v2845 = vshrl.u32 %v2680, 16
      %v2847 = vor.u32 %v2845, %v2843
      %v2849 = vsel %vm486, %v2692, 0
      %v2852 = vsel %vm486, %v2700, 0
      %v2855 = vsel %vm486, %v2708, 0
      %v2858 = vsel %vm486, %v2716, 0
      %v2861 = vsel %vm486, %v2724, 0
      %v2864 = vsel %vm486, %v2732, 0
      %v2867 = vsel %vm486, %v2740, 0
      %v2870 = vsel %vm486, %v2748, 0
      %v2873 = vsel %vm486, %v2756, 0
      %v2876 = vsel %vm486, %v2764, 0
      %v2879 = vsel %vm486, %v2772, 0
      %v2882 = vsel %vm486, %v2780, 0
      %v2885 = vsel %vm486, %v2788, 0
      %v2888 = vsel %vm486, %v2796, 0
      %v2891 = vsel %vm486, %v2804, 0
      %v2894 = vsel %vm486, %v2812, 0
      %v2897 = vsel %vm486, %v2820, 0
      %v2900 = vsel %vm486, %v2828, 0
      %v2903 = vsel %vm486, %v2836, 0
      %v2906 = vsel %vm486, %v2844, 0
      %v2909 = vsel %vm486, %v2847, 0
      %v2912 = vand.u32 %v2577, %v553
      %2914 = vmatpush.bf16.msra.mxu0 0
      %2915 = vmatpush.bf16.msra.mxu0 0
      %2916 = vmatpush.bf16.msra.mxu0 0
      %2917 = vmatpush.bf16.msra.mxu0 0
      %2918 = vmatpush.bf16.msra.mxu0 0
      %2919 = vmatpush.bf16.msra.mxu0 0
      %2920 = vmatpush.bf16.msra.mxu0 0
      %2921 = vmatpush.bf16.msra.mxu0 %v2912
      %2922 = vmatmul.bf16.gmra.mxu0 %v2849
      %v2923 = vpop.f32.mrf.mxu0
      %v2924 = vadd.f32 0.0, %v2923
      %v2925 = vpop.f32.mrf.mxu0
      %v2926 = vadd.f32 0.0, %v2925
      %2927 = vmatmul.bf16.gmra.mxu0 %v2852
      %v2928 = vpop.f32.mrf.mxu0
      %v2929 = vadd.f32 0.0, %v2928
      %v2930 = vpop.f32.mrf.mxu0
      %v2931 = vadd.f32 0.0, %v2930
      %2932 = vmatmul.bf16.gmra.mxu0 %v2855
      %v2933 = vpop.f32.mrf.mxu0
      %v2934 = vadd.f32 0.0, %v2933
      %v2935 = vpop.f32.mrf.mxu0
      %v2936 = vadd.f32 0.0, %v2935
      %2937 = vmatmul.bf16.gmra.mxu0 %v2858
      %v2938 = vpop.f32.mrf.mxu0
      %v2939 = vadd.f32 0.0, %v2938
      %v2940 = vpop.f32.mrf.mxu0
      %v2941 = vadd.f32 0.0, %v2940
      %2942 = vmatmul.bf16.gmra.mxu0 %v2861
      %v2943 = vpop.f32.mrf.mxu0
      %v2944 = vadd.f32 0.0, %v2943
      %v2945 = vpop.f32.mrf.mxu0
      %v2946 = vadd.f32 0.0, %v2945
      %2947 = vmatmul.bf16.gmra.mxu0 %v2864
      %v2948 = vpop.f32.mrf.mxu0
      %v2949 = vadd.f32 0.0, %v2948
      %v2950 = vpop.f32.mrf.mxu0
      %v2951 = vadd.f32 0.0, %v2950
      %2952 = vmatmul.bf16.gmra.mxu0 %v2867
      %v2953 = vpop.f32.mrf.mxu0
      %v2954 = vadd.f32 0.0, %v2953
      %v2955 = vpop.f32.mrf.mxu0
      %v2956 = vadd.f32 0.0, %v2955
      %2957 = vmatmul.bf16.gmra.mxu0 %v2870
      %v2958 = vpop.f32.mrf.mxu0
      %v2959 = vadd.f32 0.0, %v2958
      %v2960 = vpop.f32.mrf.mxu0
      %v2961 = vadd.f32 0.0, %v2960
      %2962 = vmatmul.bf16.gmra.mxu0 %v2873
      %v2963 = vpop.f32.mrf.mxu0
      %v2964 = vadd.f32 0.0, %v2963
      %v2965 = vpop.f32.mrf.mxu0
      %v2966 = vadd.f32 0.0, %v2965
      %2967 = vmatmul.bf16.gmra.mxu0 %v2876
      %v2968 = vpop.f32.mrf.mxu0
      %v2969 = vadd.f32 0.0, %v2968
      %v2970 = vpop.f32.mrf.mxu0
      %v2971 = vadd.f32 0.0, %v2970
      %2972 = vmatmul.bf16.gmra.mxu0 %v2879
      %v2973 = vpop.f32.mrf.mxu0
      %v2974 = vadd.f32 0.0, %v2973
      %v2975 = vpop.f32.mrf.mxu0
      %v2976 = vadd.f32 0.0, %v2975
      %2977 = vmatmul.bf16.gmra.mxu0 %v2882
      %v2978 = vpop.f32.mrf.mxu0
      %v2979 = vadd.f32 0.0, %v2978
      %v2980 = vpop.f32.mrf.mxu0
      %v2981 = vadd.f32 0.0, %v2980
      %2982 = vmatmul.bf16.gmra.mxu0 %v2885
      %v2983 = vpop.f32.mrf.mxu0
      %v2984 = vadd.f32 0.0, %v2983
      %v2985 = vpop.f32.mrf.mxu0
      %v2986 = vadd.f32 0.0, %v2985
      %2987 = vmatmul.bf16.gmra.mxu0 %v2888
      %v2988 = vpop.f32.mrf.mxu0
      %v2989 = vadd.f32 0.0, %v2988
      %v2990 = vpop.f32.mrf.mxu0
      %v2991 = vadd.f32 0.0, %v2990
      %2992 = vmatmul.bf16.gmra.mxu0 %v2891
      %v2993 = vpop.f32.mrf.mxu0
      %v2994 = vadd.f32 0.0, %v2993
      %v2995 = vpop.f32.mrf.mxu0
      %v2996 = vadd.f32 0.0, %v2995
      %2997 = vmatmul.bf16.gmra.mxu0 %v2894
      %v2998 = vpop.f32.mrf.mxu0
      %v2999 = vadd.f32 0.0, %v2998
      %v3000 = vpop.f32.mrf.mxu0
      %v3001 = vadd.f32 0.0, %v3000
      %3002 = vmatmul.bf16.gmra.mxu0 %v2897
      %v3003 = vpop.f32.mrf.mxu0
      %v3004 = vadd.f32 0.0, %v3003
      %v3005 = vpop.f32.mrf.mxu0
      %v3006 = vadd.f32 0.0, %v3005
      %3007 = vmatmul.bf16.gmra.mxu0 %v2900
      %v3008 = vpop.f32.mrf.mxu0
      %v3009 = vadd.f32 0.0, %v3008
      %v3010 = vpop.f32.mrf.mxu0
      %v3011 = vadd.f32 0.0, %v3010
      %3012 = vmatmul.bf16.gmra.mxu0 %v2903
      %v3013 = vpop.f32.mrf.mxu0
      %v3014 = vadd.f32 0.0, %v3013
      %v3015 = vpop.f32.mrf.mxu0
      %v3016 = vadd.f32 0.0, %v3015
      %3017 = vmatmul.bf16.gmra.mxu0 %v2906
      %v3018 = vpop.f32.mrf.mxu0
      %v3019 = vadd.f32 0.0, %v3018
      %v3020 = vpop.f32.mrf.mxu0
      %v3021 = vadd.f32 0.0, %v3020
      %3022 = vmatmul.bf16.gmra.mxu0 %v2909
      %v3023 = vpop.f32.mrf.mxu0
      %v3024 = vadd.f32 0.0, %v3023
      %v3025 = vpop.f32.mrf.mxu0
      %3026 = vdwg.mxu0
      %v3027 = vadd.f32 %v2494, %v2924
      %v3028 = vadd.f32 %v2495, %v2926
      %v3029 = vadd.f32 %v2496, %v2929
      %v3030 = vadd.f32 %v2497, %v2931
      %v3031 = vadd.f32 %v2498, %v2934
      %v3032 = vadd.f32 %v2499, %v2936
      %v3033 = vadd.f32 %v2500, %v2939
      %v3034 = vadd.f32 %v2501, %v2941
      %v3035 = vadd.f32 %v2502, %v2944
      %v3036 = vadd.f32 %v2503, %v2946
      %v3037 = vadd.f32 %v2504, %v2949
      %v3038 = vadd.f32 %v2505, %v2951
      %v3039 = vadd.f32 %v2506, %v2954
      %v3040 = vadd.f32 %v2507, %v2956
      %v3041 = vadd.f32 %v2508, %v2959
      %v3042 = vadd.f32 %v2509, %v2961
      %v3043 = vadd.f32 %v2510, %v2964
      %v3044 = vadd.f32 %v2511, %v2966
      %v3045 = vadd.f32 %v2512, %v2969
      %v3046 = vadd.f32 %v2513, %v2971
      %v3047 = vadd.f32 %v2514, %v2974
      %v3048 = vadd.f32 %v2515, %v2976
      %v3049 = vadd.f32 %v2516, %v2979
      %v3050 = vadd.f32 %v2517, %v2981
      %v3051 = vadd.f32 %v2518, %v2984
      %v3052 = vadd.f32 %v2519, %v2986
      %v3053 = vadd.f32 %v2520, %v2989
      %v3054 = vadd.f32 %v2521, %v2991
      %v3055 = vadd.f32 %v2522, %v2994
      %v3056 = vadd.f32 %v2523, %v2996
      %v3057 = vadd.f32 %v2524, %v2999
      %v3058 = vadd.f32 %v2525, %v3001
      %v3059 = vadd.f32 %v2526, %v3004
      %v3060 = vadd.f32 %v2527, %v3006
      %v3061 = vadd.f32 %v2528, %v3009
      %v3062 = vadd.f32 %v2529, %v3011
      %v3063 = vadd.f32 %v2530, %v3014
      %v3064 = vadd.f32 %v2531, %v3016
      %v3065 = vadd.f32 %v2532, %v3019
      %v3066 = vadd.f32 %v2533, %v3021
      %v3067 = vadd.f32 %v2534, %v3024
      %v3068 = vld [vmem:[#allocation2 + $0x18] sm:$0xe]
      %s3069 = scalar_lea.vmem %s2, 14
      %v3070 = vld [vmem:[%s3069] sm:$0x3]
      %v3072 = vunpack.c.l.b16 %v3068
      %v3073 = vpack.c.b16 %v2620, %v3072
      %vm3074 = vcmask 1046528
      %v3075 = vrot.slane %v3073, 1
      %v3076 = vrot.slane %v2661, 1
      %v3077 = vsel %vm3074, %v3075, %v3076
      %v3078 = vrot.slane %v2662, 1
      %v3079 = vsel %vm3074, %v3076, %v3078
      %v3080 = vrot.slane %v2663, 1
      %v3081 = vsel %vm3074, %v3078, %v3080
      %v3082 = vrot.slane %v2664, 1
      %v3083 = vsel %vm3074, %v3080, %v3082
      %v3084 = vrot.slane %v2665, 1
      %v3085 = vsel %vm3074, %v3082, %v3084
      %v3086 = vrot.slane %v2666, 1
      %v3087 = vsel %vm3074, %v3084, %v3086
      %v3088 = vrot.slane %v2667, 1
      %v3089 = vsel %vm3074, %v3086, %v3088
      %v3090 = vrot.slane %v2668, 1
      %v3091 = vsel %vm3074, %v3088, %v3090
      %v3092 = vrot.slane %v2669, 1
      %v3093 = vsel %vm3074, %v3090, %v3092
      %v3094 = vrot.slane %v2670, 1
      %v3095 = vsel %vm3074, %v3092, %v3094
      %v3096 = vrot.slane %v2671, 1
      %v3097 = vsel %vm3074, %v3094, %v3096
      %v3098 = vrot.slane %v2672, 1
      %v3099 = vsel %vm3074, %v3096, %v3098
      %v3100 = vrot.slane %v2673, 1
      %v3101 = vsel %vm3074, %v3098, %v3100
      %v3102 = vrot.slane %v2674, 1
      %v3103 = vsel %vm3074, %v3100, %v3102
      %v3104 = vrot.slane %v2675, 1
      %v3105 = vsel %vm3074, %v3102, %v3104
      %v3106 = vrot.slane %v2676, 1
      %v3107 = vsel %vm3074, %v3104, %v3106
      %v3108 = vrot.slane %v2677, 1
      %v3109 = vsel %vm3074, %v3106, %v3108
      %v3110 = vrot.slane %v2678, 1
      %v3111 = vsel %vm3074, %v3108, %v3110
      %v3112 = vrot.slane %v2679, 1
      %v3113 = vsel %vm3074, %v3110, %v3112
      %v3114 = vrot.slane %v2680, 1
      %v3115 = vsel %vm3074, %v3112, %v3114
      %v3117 = vsel %vm486, %v3077, 0
      %v3120 = vsel %vm486, %v3079, 0
      %v3123 = vsel %vm486, %v3081, 0
      %v3126 = vsel %vm486, %v3083, 0
      %v3129 = vsel %vm486, %v3085, 0
      %v3132 = vsel %vm486, %v3087, 0
      %v3135 = vsel %vm486, %v3089, 0
      %v3138 = vsel %vm486, %v3091, 0
      %v3141 = vsel %vm486, %v3093, 0
      %v3144 = vsel %vm486, %v3095, 0
      %v3147 = vsel %vm486, %v3097, 0
      %v3150 = vsel %vm486, %v3099, 0
      %v3153 = vsel %vm486, %v3101, 0
      %v3156 = vsel %vm486, %v3103, 0
      %v3159 = vsel %vm486, %v3105, 0
      %v3162 = vsel %vm486, %v3107, 0
      %v3165 = vsel %vm486, %v3109, 0
      %v3168 = vsel %vm486, %v3111, 0
      %v3171 = vsel %vm486, %v3113, 0
      %v3174 = vsel %vm486, %v3115, 0
      %v3177 = vsel %vm486, %v3114, 0
      %v3180 = vand.u32 %v3070, %v553
      %3182 = vmatpush.bf16.msra.mxu0 0
      %3183 = vmatpush.bf16.msra.mxu0 0
      %3184 = vmatpush.bf16.msra.mxu0 0
      %3185 = vmatpush.bf16.msra.mxu0 0
      %3186 = vmatpush.bf16.msra.mxu0 0
      %3187 = vmatpush.bf16.msra.mxu0 0
      %3188 = vmatpush.bf16.msra.mxu0 0
      %3189 = vmatpush.bf16.msra.mxu0 %v3180
      %3190 = vmatmul.bf16.gmra.mxu0 %v3117
      %v3191 = vpop.f32.mrf.mxu0
      %v3192 = vadd.f32 0.0, %v3191
      %v3193 = vpop.f32.mrf.mxu0
      %v3194 = vadd.f32 0.0, %v3193
      %3195 = vmatmul.bf16.gmra.mxu0 %v3120
      %v3196 = vpop.f32.mrf.mxu0
      %v3197 = vadd.f32 0.0, %v3196
      %v3198 = vpop.f32.mrf.mxu0
      %v3199 = vadd.f32 0.0, %v3198
      %3200 = vmatmul.bf16.gmra.mxu0 %v3123
      %v3201 = vpop.f32.mrf.mxu0
      %v3202 = vadd.f32 0.0, %v3201
      %v3203 = vpop.f32.mrf.mxu0
      %v3204 = vadd.f32 0.0, %v3203
      %3205 = vmatmul.bf16.gmra.mxu0 %v3126
      %v3206 = vpop.f32.mrf.mxu0
      %v3207 = vadd.f32 0.0, %v3206
      %v3208 = vpop.f32.mrf.mxu0
      %v3209 = vadd.f32 0.0, %v3208
      %3210 = vmatmul.bf16.gmra.mxu0 %v3129
      %v3211 = vpop.f32.mrf.mxu0
      %v3212 = vadd.f32 0.0, %v3211
      %v3213 = vpop.f32.mrf.mxu0
      %v3214 = vadd.f32 0.0, %v3213
      %3215 = vmatmul.bf16.gmra.mxu0 %v3132
      %v3216 = vpop.f32.mrf.mxu0
      %v3217 = vadd.f32 0.0, %v3216
      %v3218 = vpop.f32.mrf.mxu0
      %v3219 = vadd.f32 0.0, %v3218
      %3220 = vmatmul.bf16.gmra.mxu0 %v3135
      %v3221 = vpop.f32.mrf.mxu0
      %v3222 = vadd.f32 0.0, %v3221
      %v3223 = vpop.f32.mrf.mxu0
      %v3224 = vadd.f32 0.0, %v3223
      %3225 = vmatmul.bf16.gmra.mxu0 %v3138
      %v3226 = vpop.f32.mrf.mxu0
      %v3227 = vadd.f32 0.0, %v3226
      %v3228 = vpop.f32.mrf.mxu0
      %v3229 = vadd.f32 0.0, %v3228
      %3230 = vmatmul.bf16.gmra.mxu0 %v3141
      %v3231 = vpop.f32.mrf.mxu0
      %v3232 = vadd.f32 0.0, %v3231
      %v3233 = vpop.f32.mrf.mxu0
      %v3234 = vadd.f32 0.0, %v3233
      %3235 = vmatmul.bf16.gmra.mxu0 %v3144
      %v3236 = vpop.f32.mrf.mxu0
      %v3237 = vadd.f32 0.0, %v3236
      %v3238 = vpop.f32.mrf.mxu0
      %v3239 = vadd.f32 0.0, %v3238
      %3240 = vmatmul.bf16.gmra.mxu0 %v3147
      %v3241 = vpop.f32.mrf.mxu0
      %v3242 = vadd.f32 0.0, %v3241
      %v3243 = vpop.f32.mrf.mxu0
      %v3244 = vadd.f32 0.0, %v3243
      %3245 = vmatmul.bf16.gmra.mxu0 %v3150
      %v3246 = vpop.f32.mrf.mxu0
      %v3247 = vadd.f32 0.0, %v3246
      %v3248 = vpop.f32.mrf.mxu0
      %v3249 = vadd.f32 0.0, %v3248
      %3250 = vmatmul.bf16.gmra.mxu0 %v3153
      %v3251 = vpop.f32.mrf.mxu0
      %v3252 = vadd.f32 0.0, %v3251
      %v3253 = vpop.f32.mrf.mxu0
      %v3254 = vadd.f32 0.0, %v3253
      %3255 = vmatmul.bf16.gmra.mxu0 %v3156
      %v3256 = vpop.f32.mrf.mxu0
      %v3257 = vadd.f32 0.0, %v3256
      %v3258 = vpop.f32.mrf.mxu0
      %v3259 = vadd.f32 0.0, %v3258
      %3260 = vmatmul.bf16.gmra.mxu0 %v3159
      %v3261 = vpop.f32.mrf.mxu0
      %v3262 = vadd.f32 0.0, %v3261
      %v3263 = vpop.f32.mrf.mxu0
      %v3264 = vadd.f32 0.0, %v3263
      %3265 = vmatmul.bf16.gmra.mxu0 %v3162
      %v3266 = vpop.f32.mrf.mxu0
      %v3267 = vadd.f32 0.0, %v3266
      %v3268 = vpop.f32.mrf.mxu0
      %v3269 = vadd.f32 0.0, %v3268
      %3270 = vmatmul.bf16.gmra.mxu0 %v3165
      %v3271 = vpop.f32.mrf.mxu0
      %v3272 = vadd.f32 0.0, %v3271
      %v3273 = vpop.f32.mrf.mxu0
      %v3274 = vadd.f32 0.0, %v3273
      %3275 = vmatmul.bf16.gmra.mxu0 %v3168
      %v3276 = vpop.f32.mrf.mxu0
      %v3277 = vadd.f32 0.0, %v3276
      %v3278 = vpop.f32.mrf.mxu0
      %v3279 = vadd.f32 0.0, %v3278
      %3280 = vmatmul.bf16.gmra.mxu0 %v3171
      %v3281 = vpop.f32.mrf.mxu0
      %v3282 = vadd.f32 0.0, %v3281
      %v3283 = vpop.f32.mrf.mxu0
      %v3284 = vadd.f32 0.0, %v3283
      %3285 = vmatmul.bf16.gmra.mxu0 %v3174
      %v3286 = vpop.f32.mrf.mxu0
      %v3287 = vadd.f32 0.0, %v3286
      %v3288 = vpop.f32.mrf.mxu0
      %v3289 = vadd.f32 0.0, %v3288
      %3290 = vmatmul.bf16.gmra.mxu0 %v3177
      %v3291 = vpop.f32.mrf.mxu0
      %v3292 = vadd.f32 0.0, %v3291
      %v3293 = vpop.f32.mrf.mxu0
      %3294 = vdwg.mxu0
      %v3295 = vadd.f32 %v3027, %v3192
      %v3296 = vadd.f32 %v3028, %v3194
      %v3297 = vadd.f32 %v3029, %v3197
      %v3298 = vadd.f32 %v3030, %v3199
      %v3299 = vadd.f32 %v3031, %v3202
      %v3300 = vadd.f32 %v3032, %v3204
      %v3301 = vadd.f32 %v3033, %v3207
      %v3302 = vadd.f32 %v3034, %v3209
      %v3303 = vadd.f32 %v3035, %v3212
      %v3304 = vadd.f32 %v3036, %v3214
      %v3305 = vadd.f32 %v3037, %v3217
      %v3306 = vadd.f32 %v3038, %v3219
      %v3307 = vadd.f32 %v3039, %v3222
      %v3308 = vadd.f32 %v3040, %v3224
      %v3309 = vadd.f32 %v3041, %v3227
      %v3310 = vadd.f32 %v3042, %v3229
      %v3311 = vadd.f32 %v3043, %v3232
      %v3312 = vadd.f32 %v3044, %v3234
      %v3313 = vadd.f32 %v3045, %v3237
      %v3314 = vadd.f32 %v3046, %v3239
      %v3315 = vadd.f32 %v3047, %v3242
      %v3316 = vadd.f32 %v3048, %v3244
      %v3317 = vadd.f32 %v3049, %v3247
      %v3318 = vadd.f32 %v3050, %v3249
      %v3319 = vadd.f32 %v3051, %v3252
      %v3320 = vadd.f32 %v3052, %v3254
      %v3321 = vadd.f32 %v3053, %v3257
      %v3322 = vadd.f32 %v3054, %v3259
      %v3323 = vadd.f32 %v3055, %v3262
      %v3324 = vadd.f32 %v3056, %v3264
      %v3325 = vadd.f32 %v3057, %v3267
      %v3326 = vadd.f32 %v3058, %v3269
      %v3327 = vadd.f32 %v3059, %v3272
      %v3328 = vadd.f32 %v3060, %v3274
      %v3329 = vadd.f32 %v3061, %v3277
      %v3330 = vadd.f32 %v3062, %v3279
      %v3331 = vadd.f32 %v3063, %v3282
      %v3332 = vadd.f32 %v3064, %v3284
      %v3333 = vadd.f32 %v3065, %v3287
      %v3334 = vadd.f32 %v3066, %v3289
      %v3335 = vadd.f32 %v3067, %v3292
      %v3336 = vld [vmem:[#allocation2 + $0xb8] sm:$0xf]
      %s3337 = scalar_lea.vmem %s2, 16
      %v3338 = vld [vmem:[%s3337] sm:$0x3]
      %v3340 = vunpack.c.l.b16 %v3336
      %v3341 = vpack.c.b16 %v3340, %v3340
      %vm3342 = vsmask.f32 6400
      %v3344 = vshrl.u32 %v3073, 16
      %v3346 = vrot.slane %v3344, 1
      %v3347 = vshll.u32 %v3073, 16
      %v3349 = vrot.slane %v3347, 2
      %v3350 = vor.u32 %v3346, %v3349
      %v3351 = vrot.slane %v2693, 1
      %v3352 = vrot.slane %v2689, 2
      %v3353 = vor.u32 %v3351, %v3352
      %v3354 = vsel %vm3342, %v3350, %v3353
      %v3355 = vrot.slane %v2701, 1
      %v3356 = vrot.slane %v2697, 2
      %v3357 = vor.u32 %v3355, %v3356
      %v3358 = vsel %vm3342, %v3353, %v3357
      %v3359 = vrot.slane %v2709, 1
      %v3360 = vrot.slane %v2705, 2
      %v3361 = vor.u32 %v3359, %v3360
      %v3362 = vsel %vm3342, %v3357, %v3361
      %v3363 = vrot.slane %v2717, 1
      %v3364 = vrot.slane %v2713, 2
      %v3365 = vor.u32 %v3363, %v3364
      %v3366 = vsel %vm3342, %v3361, %v3365
      %v3367 = vrot.slane %v2725, 1
      %v3368 = vrot.slane %v2721, 2
      %v3369 = vor.u32 %v3367, %v3368
      %v3370 = vsel %vm3342, %v3365, %v3369
      %v3371 = vrot.slane %v2733, 1
      %v3372 = vrot.slane %v2729, 2
      %v3373 = vor.u32 %v3371, %v3372
      %v3374 = vsel %vm3342, %v3369, %v3373
      %v3375 = vrot.slane %v2741, 1
      %v3376 = vrot.slane %v2737, 2
      %v3377 = vor.u32 %v3375, %v3376
      %v3378 = vsel %vm3342, %v3373, %v3377
      %v3379 = vrot.slane %v2749, 1
      %v3380 = vrot.slane %v2745, 2
      %v3381 = vor.u32 %v3379, %v3380
      %v3382 = vsel %vm3342, %v3377, %v3381
      %v3383 = vrot.slane %v2757, 1
      %v3384 = vrot.slane %v2753, 2
      %v3385 = vor.u32 %v3383, %v3384
      %v3386 = vsel %vm3342, %v3381, %v3385
      %v3387 = vrot.slane %v2765, 1
      %v3388 = vrot.slane %v2761, 2
      %v3389 = vor.u32 %v3387, %v3388
      %v3390 = vsel %vm3342, %v3385, %v3389
      %v3391 = vrot.slane %v2773, 1
      %v3392 = vrot.slane %v2769, 2
      %v3393 = vor.u32 %v3391, %v3392
      %v3394 = vsel %vm3342, %v3389, %v3393
      %v3395 = vrot.slane %v2781, 1
      %v3396 = vrot.slane %v2777, 2
      %v3397 = vor.u32 %v3395, %v3396
      %v3398 = vsel %vm3342, %v3393, %v3397
      %v3399 = vrot.slane %v2789, 1
      %v3400 = vrot.slane %v2785, 2
      %v3401 = vor.u32 %v3399, %v3400
      %v3402 = vsel %vm3342, %v3397, %v3401
      %v3403 = vrot.slane %v2797, 1
      %v3404 = vrot.slane %v2793, 2
      %v3405 = vor.u32 %v3403, %v3404
      %v3406 = vsel %vm3342, %v3401, %v3405
      %v3407 = vrot.slane %v2805, 1
      %v3408 = vrot.slane %v2801, 2
      %v3409 = vor.u32 %v3407, %v3408
      %v3410 = vsel %vm3342, %v3405, %v3409
      %v3411 = vrot.slane %v2813, 1
      %v3412 = vrot.slane %v2809, 2
      %v3413 = vor.u32 %v3411, %v3412
      %v3414 = vsel %vm3342, %v3409, %v3413
      %v3415 = vrot.slane %v2821, 1
      %v3416 = vrot.slane %v2817, 2
      %v3417 = vor.u32 %v3415, %v3416
      %v3418 = vsel %vm3342, %v3413, %v3417
      %v3419 = vrot.slane %v2829, 1
      %v3420 = vrot.slane %v2825, 2
      %v3421 = vor.u32 %v3419, %v3420
      %v3422 = vsel %vm3342, %v3417, %v3421
      %v3423 = vrot.slane %v2837, 1
      %v3424 = vrot.slane %v2833, 2
      %v3425 = vor.u32 %v3423, %v3424
      %v3426 = vsel %vm3342, %v3421, %v3425
      %v3428 = vshrl.u32 %v3341, 16
      %v3430 = vrot.slane %v3428, 1
      %v3431 = vshll.u32 %v3341, 16
      %v3433 = vrot.slane %v3431, 2
      %v3434 = vor.u32 %v3430, %v3433
      %v3435 = vsel %vm3342, %v3425, %v3434
      %v3437 = vsel %vm486, %v3354, 0
      %v3440 = vsel %vm486, %v3358, 0
      %v3443 = vsel %vm486, %v3362, 0
      %v3446 = vsel %vm486, %v3366, 0
      %v3449 = vsel %vm486, %v3370, 0
      %v3452 = vsel %vm486, %v3374, 0
      %v3455 = vsel %vm486, %v3378, 0
      %v3458 = vsel %vm486, %v3382, 0
      %v3461 = vsel %vm486, %v3386, 0
      %v3464 = vsel %vm486, %v3390, 0
      %v3467 = vsel %vm486, %v3394, 0
      %v3470 = vsel %vm486, %v3398, 0
      %v3473 = vsel %vm486, %v3402, 0
      %v3476 = vsel %vm486, %v3406, 0
      %v3479 = vsel %vm486, %v3410, 0
      %v3482 = vsel %vm486, %v3414, 0
      %v3485 = vsel %vm486, %v3418, 0
      %v3488 = vsel %vm486, %v3422, 0
      %v3491 = vsel %vm486, %v3426, 0
      %v3494 = vsel %vm486, %v3435, 0
      %v3497 = vsel %vm486, %v3434, 0
      %v3500 = vand.u32 %v3338, %v553
      %3502 = vmatpush.bf16.msra.mxu0 0
      %3503 = vmatpush.bf16.msra.mxu0 0
      %3504 = vmatpush.bf16.msra.mxu0 0
      %3505 = vmatpush.bf16.msra.mxu0 0
      %3506 = vmatpush.bf16.msra.mxu0 0
      %3507 = vmatpush.bf16.msra.mxu0 0
      %3508 = vmatpush.bf16.msra.mxu0 0
      %3509 = vmatpush.bf16.msra.mxu0 %v3500
      %3510 = vmatmul.bf16.gmra.mxu0 %v3437
      %v3511 = vpop.f32.mrf.mxu0
      %v3512 = vadd.f32 0.0, %v3511
      %v3513 = vpop.f32.mrf.mxu0
      %v3514 = vadd.f32 0.0, %v3513
      %3515 = vmatmul.bf16.gmra.mxu0 %v3440
      %v3516 = vpop.f32.mrf.mxu0
      %v3517 = vadd.f32 0.0, %v3516
      %v3518 = vpop.f32.mrf.mxu0
      %v3519 = vadd.f32 0.0, %v3518
      %3520 = vmatmul.bf16.gmra.mxu0 %v3443
      %v3521 = vpop.f32.mrf.mxu0
      %v3522 = vadd.f32 0.0, %v3521
      %v3523 = vpop.f32.mrf.mxu0
      %v3524 = vadd.f32 0.0, %v3523
      %3525 = vmatmul.bf16.gmra.mxu0 %v3446
      %v3526 = vpop.f32.mrf.mxu0
      %v3527 = vadd.f32 0.0, %v3526
      %v3528 = vpop.f32.mrf.mxu0
      %v3529 = vadd.f32 0.0, %v3528
      %3530 = vmatmul.bf16.gmra.mxu0 %v3449
      %v3531 = vpop.f32.mrf.mxu0
      %v3532 = vadd.f32 0.0, %v3531
      %v3533 = vpop.f32.mrf.mxu0
      %v3534 = vadd.f32 0.0, %v3533
      %3535 = vmatmul.bf16.gmra.mxu0 %v3452
      %v3536 = vpop.f32.mrf.mxu0
      %v3537 = vadd.f32 0.0, %v3536
      %v3538 = vpop.f32.mrf.mxu0
      %v3539 = vadd.f32 0.0, %v3538
      %3540 = vmatmul.bf16.gmra.mxu0 %v3455
      %v3541 = vpop.f32.mrf.mxu0
      %v3542 = vadd.f32 0.0, %v3541
      %v3543 = vpop.f32.mrf.mxu0
      %v3544 = vadd.f32 0.0, %v3543
      %3545 = vmatmul.bf16.gmra.mxu0 %v3458
      %v3546 = vpop.f32.mrf.mxu0
      %v3547 = vadd.f32 0.0, %v3546
      %v3548 = vpop.f32.mrf.mxu0
      %v3549 = vadd.f32 0.0, %v3548
      %3550 = vmatmul.bf16.gmra.mxu0 %v3461
      %v3551 = vpop.f32.mrf.mxu0
      %v3552 = vadd.f32 0.0, %v3551
      %v3553 = vpop.f32.mrf.mxu0
      %v3554 = vadd.f32 0.0, %v3553
      %3555 = vmatmul.bf16.gmra.mxu0 %v3464
      %v3556 = vpop.f32.mrf.mxu0
      %v3557 = vadd.f32 0.0, %v3556
      %v3558 = vpop.f32.mrf.mxu0
      %v3559 = vadd.f32 0.0, %v3558
      %3560 = vmatmul.bf16.gmra.mxu0 %v3467
      %v3561 = vpop.f32.mrf.mxu0
      %v3562 = vadd.f32 0.0, %v3561
      %v3563 = vpop.f32.mrf.mxu0
      %v3564 = vadd.f32 0.0, %v3563
      %3565 = vmatmul.bf16.gmra.mxu0 %v3470
      %v3566 = vpop.f32.mrf.mxu0
      %v3567 = vadd.f32 0.0, %v3566
      %v3568 = vpop.f32.mrf.mxu0
      %v3569 = vadd.f32 0.0, %v3568
      %3570 = vmatmul.bf16.gmra.mxu0 %v3473
      %v3571 = vpop.f32.mrf.mxu0
      %v3572 = vadd.f32 0.0, %v3571
      %v3573 = vpop.f32.mrf.mxu0
      %v3574 = vadd.f32 0.0, %v3573
      %3575 = vmatmul.bf16.gmra.mxu0 %v3476
      %v3576 = vpop.f32.mrf.mxu0
      %v3577 = vadd.f32 0.0, %v3576
      %v3578 = vpop.f32.mrf.mxu0
      %v3579 = vadd.f32 0.0, %v3578
      %3580 = vmatmul.bf16.gmra.mxu0 %v3479
      %v3581 = vpop.f32.mrf.mxu0
      %v3582 = vadd.f32 0.0, %v3581
      %v3583 = vpop.f32.mrf.mxu0
      %v3584 = vadd.f32 0.0, %v3583
      %3585 = vmatmul.bf16.gmra.mxu0 %v3482
      %v3586 = vpop.f32.mrf.mxu0
      %v3587 = vadd.f32 0.0, %v3586
      %v3588 = vpop.f32.mrf.mxu0
      %v3589 = vadd.f32 0.0, %v3588
      %3590 = vmatmul.bf16.gmra.mxu0 %v3485
      %v3591 = vpop.f32.mrf.mxu0
      %v3592 = vadd.f32 0.0, %v3591
      %v3593 = vpop.f32.mrf.mxu0
      %v3594 = vadd.f32 0.0, %v3593
      %3595 = vmatmul.bf16.gmra.mxu0 %v3488
      %v3596 = vpop.f32.mrf.mxu0
      %v3597 = vadd.f32 0.0, %v3596
      %v3598 = vpop.f32.mrf.mxu0
      %v3599 = vadd.f32 0.0, %v3598
      %3600 = vmatmul.bf16.gmra.mxu0 %v3491
      %v3601 = vpop.f32.mrf.mxu0
      %v3602 = vadd.f32 0.0, %v3601
      %v3603 = vpop.f32.mrf.mxu0
      %v3604 = vadd.f32 0.0, %v3603
      %3605 = vmatmul.bf16.gmra.mxu0 %v3494
      %v3606 = vpop.f32.mrf.mxu0
      %v3607 = vadd.f32 0.0, %v3606
      %v3608 = vpop.f32.mrf.mxu0
      %v3609 = vadd.f32 0.0, %v3608
      %3610 = vmatmul.bf16.gmra.mxu0 %v3497
      %v3611 = vpop.f32.mrf.mxu0
      %v3612 = vadd.f32 0.0, %v3611
      %v3613 = vpop.f32.mrf.mxu0
      %3614 = vdwg.mxu0
      %v3615 = vadd.f32 %v3295, %v3512
      %v3616 = vadd.f32 %v3296, %v3514
      %v3617 = vadd.f32 %v3297, %v3517
      %v3618 = vadd.f32 %v3298, %v3519
      %v3619 = vadd.f32 %v3299, %v3522
      %v3620 = vadd.f32 %v3300, %v3524
      %v3621 = vadd.f32 %v3301, %v3527
      %v3622 = vadd.f32 %v3302, %v3529
      %v3623 = vadd.f32 %v3303, %v3532
      %v3624 = vadd.f32 %v3304, %v3534
      %v3625 = vadd.f32 %v3305, %v3537
      %v3626 = vadd.f32 %v3306, %v3539
      %v3627 = vadd.f32 %v3307, %v3542
      %v3628 = vadd.f32 %v3308, %v3544
      %v3629 = vadd.f32 %v3309, %v3547
      %v3630 = vadd.f32 %v3310, %v3549
      %v3631 = vadd.f32 %v3311, %v3552
      %v3632 = vadd.f32 %v3312, %v3554
      %v3633 = vadd.f32 %v3313, %v3557
      %v3634 = vadd.f32 %v3314, %v3559
      %v3635 = vadd.f32 %v3315, %v3562
      %v3636 = vadd.f32 %v3316, %v3564
      %v3637 = vadd.f32 %v3317, %v3567
      %v3638 = vadd.f32 %v3318, %v3569
      %v3639 = vadd.f32 %v3319, %v3572
      %v3640 = vadd.f32 %v3320, %v3574
      %v3641 = vadd.f32 %v3321, %v3577
      %v3642 = vadd.f32 %v3322, %v3579
      %v3643 = vadd.f32 %v3323, %v3582
      %v3644 = vadd.f32 %v3324, %v3584
      %v3645 = vadd.f32 %v3325, %v3587
      %v3646 = vadd.f32 %v3326, %v3589
      %v3647 = vadd.f32 %v3327, %v3592
      %v3648 = vadd.f32 %v3328, %v3594
      %v3649 = vadd.f32 %v3329, %v3597
      %v3650 = vadd.f32 %v3330, %v3599
      %v3651 = vadd.f32 %v3331, %v3602
      %v3652 = vadd.f32 %v3332, %v3604
      %v3653 = vadd.f32 %v3333, %v3607
      %v3654 = vadd.f32 %v3334, %v3609
      %v3655 = vadd.f32 %v3335, %v3612
      %v3656 = vld [vmem:[%s3] sm:$0x1]
      %v3658 = vperm.slane %v3656, 0
      %v3660 = vadd.f32 %v3615, %v3658
      %v3661 = vadd.f32 %v3616, %v3658
      %v3662 = vadd.f32 %v3617, %v3658
      %v3663 = vadd.f32 %v3618, %v3658
      %v3664 = vadd.f32 %v3619, %v3658
      %v3665 = vadd.f32 %v3620, %v3658
      %v3666 = vadd.f32 %v3621, %v3658
      %v3667 = vadd.f32 %v3622, %v3658
      %v3668 = vadd.f32 %v3623, %v3658
      %v3669 = vadd.f32 %v3624, %v3658
      %v3670 = vadd.f32 %v3625, %v3658
      %v3671 = vadd.f32 %v3626, %v3658
      %v3672 = vadd.f32 %v3627, %v3658
      %v3673 = vadd.f32 %v3628, %v3658
      %v3674 = vadd.f32 %v3629, %v3658
      %v3675 = vadd.f32 %v3630, %v3658
      %v3676 = vadd.f32 %v3631, %v3658
      %v3677 = vadd.f32 %v3632, %v3658
      %v3678 = vadd.f32 %v3633, %v3658
      %v3679 = vadd.f32 %v3634, %v3658
      %v3680 = vadd.f32 %v3635, %v3658
      %v3681 = vadd.f32 %v3636, %v3658
      %v3682 = vadd.f32 %v3637, %v3658
      %v3683 = vadd.f32 %v3638, %v3658
      %v3684 = vadd.f32 %v3639, %v3658
      %v3685 = vadd.f32 %v3640, %v3658
      %v3686 = vadd.f32 %v3641, %v3658
      %v3687 = vadd.f32 %v3642, %v3658
      %v3688 = vadd.f32 %v3643, %v3658
      %v3689 = vadd.f32 %v3644, %v3658
      %v3690 = vadd.f32 %v3645, %v3658
      %v3691 = vadd.f32 %v3646, %v3658
      %v3692 = vadd.f32 %v3647, %v3658
      %v3693 = vadd.f32 %v3648, %v3658
      %v3694 = vadd.f32 %v3649, %v3658
      %v3695 = vadd.f32 %v3650, %v3658
      %v3696 = vadd.f32 %v3651, %v3658
      %v3697 = vadd.f32 %v3652, %v3658
      %v3698 = vadd.f32 %v3653, %v3658
      %v3699 = vadd.f32 %v3654, %v3658
      %v3700 = vadd.f32 %v3655, %v3658
      %v3701 = vld [vmem:[%s0] sm:$0xff]
      %v3702 = vld [vmem:[%s0 + $0x8] sm:$0xff]
      %v3703 = vld [vmem:[%s0 + $0x10] sm:$0xff]
      %v3704 = vld [vmem:[%s0 + $0x18] sm:$0xff]
      %v3705 = vld [vmem:[%s0 + $0x20] sm:$0xff]
      %v3706 = vld [vmem:[%s0 + $0x28] sm:$0xff]
      %v3707 = vld [vmem:[%s0 + $0x30] sm:$0xff]
      %v3708 = vld [vmem:[%s0 + $0x38] sm:$0xff]
      %v3709 = vld [vmem:[%s0 + $0x40] sm:$0xff]
      %v3710 = vld [vmem:[%s0 + $0x48] sm:$0xff]
      %v3711 = vld [vmem:[%s0 + $0x50] sm:$0xff]
      %v3712 = vld [vmem:[%s0 + $0x58] sm:$0xff]
      %v3713 = vld [vmem:[%s0 + $0x60] sm:$0xff]
      %v3714 = vld [vmem:[%s0 + $0x68] sm:$0xff]
      %v3715 = vld [vmem:[%s0 + $0x70] sm:$0xff]
      %v3716 = vld [vmem:[%s0 + $0x78] sm:$0xff]
      %v3717 = vld [vmem:[%s0 + $0x80] sm:$0xff]
      %v3718 = vld [vmem:[%s0 + $0x88] sm:$0xff]
      %v3719 = vld [vmem:[%s0 + $0x90] sm:$0xff]
      %v3720 = vld [vmem:[%s0 + $0x98] sm:$0xff]
      %v3721 = vld [vmem:[%s0 + $0xa0] sm:$0xff]
      %v3722 = vld [vmem:[%s0 + $0xa8] sm:$0xff]
      %v3723 = vld [vmem:[%s0 + $0xb0] sm:$0xff]
      %v3724 = vld [vmem:[%s0 + $0xb8] sm:$0xff]
      %v3725 = vld [vmem:[%s0 + $0xc0] sm:$0xff]
      %v3726 = vld [vmem:[%s0 + $0xc8] sm:$0xff]
      %v3727 = vld [vmem:[%s0 + $0xd0] sm:$0xff]
      %v3728 = vld [vmem:[%s0 + $0xd8] sm:$0xff]
      %v3729 = vld [vmem:[%s0 + $0xe0] sm:$0xff]
      %v3730 = vld [vmem:[%s0 + $0xe8] sm:$0xff]
      %v3731 = vld [vmem:[%s0 + $0xf0] sm:$0xff]
      %v3732 = vld [vmem:[%s0 + $0xf8] sm:$0xff]
      %v3733 = vld [vmem:[%s0 + $0x100] sm:$0xff]
      %v3734 = vld [vmem:[%s0 + $0x108] sm:$0xff]
      %v3735 = vld [vmem:[%s0 + $0x110] sm:$0xff]
      %v3736 = vld [vmem:[%s0 + $0x118] sm:$0xff]
      %v3737 = vld [vmem:[%s0 + $0x120] sm:$0xff]
      %v3738 = vld [vmem:[%s0 + $0x128] sm:$0xff]
      %v3739 = vld [vmem:[%s0 + $0x130] sm:$0xff]
      %v3740 = vld [vmem:[%s0 + $0x138] sm:$0xff]
      %v3741 = vld [vmem:[%s0 + $0x140] sm:$0xf]
      %3743 = vset.pattern.permute.xlu0 0
      %3744 = vperm.xlu0 %3743, %v3701
      %v3745 = vpop.permute.xlu0 %3744
      %3748 = vset.pattern.permute.xlu0 0
      %3749 = vperm.xlu0 %3748, %v3702
      %v3750 = vpop.permute.xlu0 %3749
      %3753 = vset.pattern.permute.xlu0 0
      %3754 = vperm.xlu0 %3753, %v3703
      %v3755 = vpop.permute.xlu0 %3754
      %3758 = vset.pattern.permute.xlu0 0
      %3759 = vperm.xlu0 %3758, %v3704
      %v3760 = vpop.permute.xlu0 %3759
      %3763 = vset.pattern.permute.xlu0 0
      %3764 = vperm.xlu0 %3763, %v3705
      %v3765 = vpop.permute.xlu0 %3764
      %3768 = vset.pattern.permute.xlu0 0
      %3769 = vperm.xlu0 %3768, %v3706
      %v3770 = vpop.permute.xlu0 %3769
      %3773 = vset.pattern.permute.xlu0 0
      %3774 = vperm.xlu0 %3773, %v3707
      %v3775 = vpop.permute.xlu0 %3774
      %3778 = vset.pattern.permute.xlu0 0
      %3779 = vperm.xlu0 %3778, %v3708
      %v3780 = vpop.permute.xlu0 %3779
      %3783 = vset.pattern.permute.xlu0 0
      %3784 = vperm.xlu0 %3783, %v3709
      %v3785 = vpop.permute.xlu0 %3784
      %3788 = vset.pattern.permute.xlu0 0
      %3789 = vperm.xlu0 %3788, %v3710
      %v3790 = vpop.permute.xlu0 %3789
      %3793 = vset.pattern.permute.xlu0 0
      %3794 = vperm.xlu0 %3793, %v3711
      %v3795 = vpop.permute.xlu0 %3794
      %3798 = vset.pattern.permute.xlu0 0
      %3799 = vperm.xlu0 %3798, %v3712
      %v3800 = vpop.permute.xlu0 %3799
      %3803 = vset.pattern.permute.xlu0 0
      %3804 = vperm.xlu0 %3803, %v3713
      %v3805 = vpop.permute.xlu0 %3804
      %3808 = vset.pattern.permute.xlu0 0
      %3809 = vperm.xlu0 %3808, %v3714
      %v3810 = vpop.permute.xlu0 %3809
      %3813 = vset.pattern.permute.xlu0 0
      %3814 = vperm.xlu0 %3813, %v3715
      %v3815 = vpop.permute.xlu0 %3814
      %3818 = vset.pattern.permute.xlu0 0
      %3819 = vperm.xlu0 %3818, %v3716
      %v3820 = vpop.permute.xlu0 %3819
      %3823 = vset.pattern.permute.xlu0 0
      %3824 = vperm.xlu0 %3823, %v3717
      %v3825 = vpop.permute.xlu0 %3824
      %3828 = vset.pattern.permute.xlu0 0
      %3829 = vperm.xlu0 %3828, %v3718
      %v3830 = vpop.permute.xlu0 %3829
      %3833 = vset.pattern.permute.xlu0 0
      %3834 = vperm.xlu0 %3833, %v3719
      %v3835 = vpop.permute.xlu0 %3834
      %3838 = vset.pattern.permute.xlu0 0
      %3839 = vperm.xlu0 %3838, %v3720
      %v3840 = vpop.permute.xlu0 %3839
      %3843 = vset.pattern.permute.xlu0 0
      %3844 = vperm.xlu0 %3843, %v3721
      %v3845 = vpop.permute.xlu0 %3844
      %3848 = vset.pattern.permute.xlu0 0
      %3849 = vperm.xlu0 %3848, %v3722
      %v3850 = vpop.permute.xlu0 %3849
      %3853 = vset.pattern.permute.xlu0 0
      %3854 = vperm.xlu0 %3853, %v3723
      %v3855 = vpop.permute.xlu0 %3854
      %3858 = vset.pattern.permute.xlu0 0
      %3859 = vperm.xlu0 %3858, %v3724
      %v3860 = vpop.permute.xlu0 %3859
      %3863 = vset.pattern.permute.xlu0 0
      %3864 = vperm.xlu0 %3863, %v3725
      %v3865 = vpop.permute.xlu0 %3864
      %3868 = vset.pattern.permute.xlu0 0
      %3869 = vperm.xlu0 %3868, %v3726
      %v3870 = vpop.permute.xlu0 %3869
      %3873 = vset.pattern.permute.xlu0 0
      %3874 = vperm.xlu0 %3873, %v3727
      %v3875 = vpop.permute.xlu0 %3874
      %3878 = vset.pattern.permute.xlu0 0
      %3879 = vperm.xlu0 %3878, %v3728
      %v3880 = vpop.permute.xlu0 %3879
      %3883 = vset.pattern.permute.xlu0 0
      %3884 = vperm.xlu0 %3883, %v3729
      %v3885 = vpop.permute.xlu0 %3884
      %3888 = vset.pattern.permute.xlu0 0
      %3889 = vperm.xlu0 %3888, %v3730
      %v3890 = vpop.permute.xlu0 %3889
      %3893 = vset.pattern.permute.xlu0 0
      %3894 = vperm.xlu0 %3893, %v3731
      %v3895 = vpop.permute.xlu0 %3894
      %3898 = vset.pattern.permute.xlu0 0
      %3899 = vperm.xlu0 %3898, %v3732
      %v3900 = vpop.permute.xlu0 %3899
      %3903 = vset.pattern.permute.xlu0 0
      %3904 = vperm.xlu0 %3903, %v3733
      %v3905 = vpop.permute.xlu0 %3904
      %3908 = vset.pattern.permute.xlu0 0
      %3909 = vperm.xlu0 %3908, %v3734
      %v3910 = vpop.permute.xlu0 %3909
      %3913 = vset.pattern.permute.xlu0 0
      %3914 = vperm.xlu0 %3913, %v3735
      %v3915 = vpop.permute.xlu0 %3914
      %3918 = vset.pattern.permute.xlu0 0
      %3919 = vperm.xlu0 %3918, %v3736
      %v3920 = vpop.permute.xlu0 %3919
      %3923 = vset.pattern.permute.xlu0 0
      %3924 = vperm.xlu0 %3923, %v3737
      %v3925 = vpop.permute.xlu0 %3924
      %3928 = vset.pattern.permute.xlu0 0
      %3929 = vperm.xlu0 %3928, %v3738
      %v3930 = vpop.permute.xlu0 %3929
      %3933 = vset.pattern.permute.xlu0 0
      %3934 = vperm.xlu0 %3933, %v3739
      %v3935 = vpop.permute.xlu0 %3934
      %3938 = vset.pattern.permute.xlu0 0
      %3939 = vperm.xlu0 %3938, %v3740
      %v3940 = vpop.permute.xlu0 %3939
      %3943 = vset.pattern.permute.xlu0 0
      %3944 = vperm.xlu0 %3943, %v3741
      %v3945 = vpop.permute.xlu0 %3944
      %v3947 = vmul.f32 %v3660, %v3745
      %v3948 = vmul.f32 %v3661, %v3750
      %v3949 = vmul.f32 %v3662, %v3755
      %v3950 = vmul.f32 %v3663, %v3760
      %v3951 = vmul.f32 %v3664, %v3765
      %v3952 = vmul.f32 %v3665, %v3770
      %v3953 = vmul.f32 %v3666, %v3775
      %v3954 = vmul.f32 %v3667, %v3780
      %v3955 = vmul.f32 %v3668, %v3785
      %v3956 = vmul.f32 %v3669, %v3790
      %v3957 = vmul.f32 %v3670, %v3795
      %v3958 = vmul.f32 %v3671, %v3800
      %v3959 = vmul.f32 %v3672, %v3805
      %v3960 = vmul.f32 %v3673, %v3810
      %v3961 = vmul.f32 %v3674, %v3815
      %v3962 = vmul.f32 %v3675, %v3820
      %v3963 = vmul.f32 %v3676, %v3825
      %v3964 = vmul.f32 %v3677, %v3830
      %v3965 = vmul.f32 %v3678, %v3835
      %v3966 = vmul.f32 %v3679, %v3840
      %v3967 = vmul.f32 %v3680, %v3845
      %v3968 = vmul.f32 %v3681, %v3850
      %v3969 = vmul.f32 %v3682, %v3855
      %v3970 = vmul.f32 %v3683, %v3860
      %v3971 = vmul.f32 %v3684, %v3865
      %v3972 = vmul.f32 %v3685, %v3870
      %v3973 = vmul.f32 %v3686, %v3875
      %v3974 = vmul.f32 %v3687, %v3880
      %v3975 = vmul.f32 %v3688, %v3885
      %v3976 = vmul.f32 %v3689, %v3890
      %v3977 = vmul.f32 %v3690, %v3895
      %v3978 = vmul.f32 %v3691, %v3900
      %v3979 = vmul.f32 %v3692, %v3905
      %v3980 = vmul.f32 %v3693, %v3910
      %v3981 = vmul.f32 %v3694, %v3915
      %v3982 = vmul.f32 %v3695, %v3920
      %v3983 = vmul.f32 %v3696, %v3925
      %v3984 = vmul.f32 %v3697, %v3930
      %v3985 = vmul.f32 %v3698, %v3935
      %v3986 = vmul.f32 %v3699, %v3940
      %v3987 = vmul.f32 %v3700, %v3945
      %v3988 = vpack.c.bf16 %v3947, %v3947
      %v3989 = vpack.c.bf16 %v3948, %v3948
      %v3990 = vpack.c.bf16 %v3949, %v3949
      %v3991 = vpack.c.bf16 %v3950, %v3950
      %v3992 = vpack.c.bf16 %v3951, %v3951
      %v3993 = vpack.c.bf16 %v3952, %v3952
      %v3994 = vpack.c.bf16 %v3953, %v3953
      %v3995 = vpack.c.bf16 %v3954, %v3954
      %v3996 = vpack.c.bf16 %v3955, %v3955
      %v3997 = vpack.c.bf16 %v3956, %v3956
      %v3998 = vpack.c.bf16 %v3957, %v3957
      %v3999 = vpack.c.bf16 %v3958, %v3958
      %v4000 = vpack.c.bf16 %v3959, %v3959
      %v4001 = vpack.c.bf16 %v3960, %v3960
      %v4002 = vpack.c.bf16 %v3961, %v3961
      %v4003 = vpack.c.bf16 %v3962, %v3962
      %v4004 = vpack.c.bf16 %v3963, %v3963
      %v4005 = vpack.c.bf16 %v3964, %v3964
      %v4006 = vpack.c.bf16 %v3965, %v3965
      %v4007 = vpack.c.bf16 %v3966, %v3966
      %v4008 = vpack.c.bf16 %v3967, %v3967
      %v4009 = vpack.c.bf16 %v3968, %v3968
      %v4010 = vpack.c.bf16 %v3969, %v3969
      %v4011 = vpack.c.bf16 %v3970, %v3970
      %v4012 = vpack.c.bf16 %v3971, %v3971
      %v4013 = vpack.c.bf16 %v3972, %v3972
      %v4014 = vpack.c.bf16 %v3973, %v3973
      %v4015 = vpack.c.bf16 %v3974, %v3974
      %v4016 = vpack.c.bf16 %v3975, %v3975
      %v4017 = vpack.c.bf16 %v3976, %v3976
      %v4018 = vpack.c.bf16 %v3977, %v3977
      %v4019 = vpack.c.bf16 %v3978, %v3978
      %v4020 = vpack.c.bf16 %v3979, %v3979
      %v4021 = vpack.c.bf16 %v3980, %v3980
      %v4022 = vpack.c.bf16 %v3981, %v3981
      %v4023 = vpack.c.bf16 %v3982, %v3982
      %v4024 = vpack.c.bf16 %v3983, %v3983
      %v4025 = vpack.c.bf16 %v3984, %v3984
      %v4026 = vpack.c.bf16 %v3985, %v3985
      %v4027 = vpack.c.bf16 %v3986, %v3986
      %v4028 = vpack.c.bf16 %v3987, %v3987
      %vm4029 = vcmask 519168
      %4030 = vst.msk [vmem:[%s197] sm:$0xf] %vm4029, %v3988
      %4031 = vst.msk [vmem:[%s197 + $0x4] sm:$0xf] %vm4029, %v3989
      %4032 = vst.msk [vmem:[%s197 + $0x8] sm:$0xf] %vm4029, %v3990
      %4033 = vst.msk [vmem:[%s197 + $0xc] sm:$0xf] %vm4029, %v3991
      %4034 = vst.msk [vmem:[%s197 + $0x10] sm:$0xf] %vm4029, %v3992
      %4035 = vst.msk [vmem:[%s197 + $0x14] sm:$0xf] %vm4029, %v3993
      %4036 = vst.msk [vmem:[%s197 + $0x18] sm:$0xf] %vm4029, %v3994
      %4037 = vst.msk [vmem:[%s197 + $0x1c] sm:$0xf] %vm4029, %v3995
      %4038 = vst.msk [vmem:[%s197 + $0x20] sm:$0xf] %vm4029, %v3996
      %4039 = vst.msk [vmem:[%s197 + $0x24] sm:$0xf] %vm4029, %v3997
      %4040 = vst.msk [vmem:[%s197 + $0x28] sm:$0xf] %vm4029, %v3998
      %4041 = vst.msk [vmem:[%s197 + $0x2c] sm:$0xf] %vm4029, %v3999
      %4042 = vst.msk [vmem:[%s197 + $0x30] sm:$0xf] %vm4029, %v4000
      %4043 = vst.msk [vmem:[%s197 + $0x34] sm:$0xf] %vm4029, %v4001
      %4044 = vst.msk [vmem:[%s197 + $0x38] sm:$0xf] %vm4029, %v4002
      %4045 = vst.msk [vmem:[%s197 + $0x3c] sm:$0xf] %vm4029, %v4003
      %4046 = vst.msk [vmem:[%s197 + $0x40] sm:$0xf] %vm4029, %v4004
      %4047 = vst.msk [vmem:[%s197 + $0x44] sm:$0xf] %vm4029, %v4005
      %4048 = vst.msk [vmem:[%s197 + $0x48] sm:$0xf] %vm4029, %v4006
      %4049 = vst.msk [vmem:[%s197 + $0x4c] sm:$0xf] %vm4029, %v4007
      %4050 = vst.msk [vmem:[%s197 + $0x50] sm:$0xf] %vm4029, %v4008
      %4051 = vst.msk [vmem:[%s197 + $0x54] sm:$0xf] %vm4029, %v4009
      %4052 = vst.msk [vmem:[%s197 + $0x58] sm:$0xf] %vm4029, %v4010
      %4053 = vst.msk [vmem:[%s197 + $0x5c] sm:$0xf] %vm4029, %v4011
      %4054 = vst.msk [vmem:[%s197 + $0x60] sm:$0xf] %vm4029, %v4012
      %4055 = vst.msk [vmem:[%s197 + $0x64] sm:$0xf] %vm4029, %v4013
      %4056 = vst.msk [vmem:[%s197 + $0x68] sm:$0xf] %vm4029, %v4014
      %4057 = vst.msk [vmem:[%s197 + $0x6c] sm:$0xf] %vm4029, %v4015
      %4058 = vst.msk [vmem:[%s197 + $0x70] sm:$0xf] %vm4029, %v4016
      %4059 = vst.msk [vmem:[%s197 + $0x74] sm:$0xf] %vm4029, %v4017
      %4060 = vst.msk [vmem:[%s197 + $0x78] sm:$0xf] %vm4029, %v4018
      %4061 = vst.msk [vmem:[%s197 + $0x7c] sm:$0xf] %vm4029, %v4019
      %4062 = vst.msk [vmem:[%s197 + $0x80] sm:$0xf] %vm4029, %v4020
      %4063 = vst.msk [vmem:[%s197 + $0x84] sm:$0xf] %vm4029, %v4021
      %4064 = vst.msk [vmem:[%s197 + $0x88] sm:$0xf] %vm4029, %v4022
      %4065 = vst.msk [vmem:[%s197 + $0x8c] sm:$0xf] %vm4029, %v4023
      %4066 = vst.msk [vmem:[%s197 + $0x90] sm:$0xf] %vm4029, %v4024
      %4067 = vst.msk [vmem:[%s197 + $0x94] sm:$0xf] %vm4029, %v4025
      %4068 = vst.msk [vmem:[%s197 + $0x98] sm:$0xf] %vm4029, %v4026
      %4069 = vst.msk [vmem:[%s197 + $0x9c] sm:$0xf] %vm4029, %v4027
      %vm4070 = vcmask 517120
      %4071 = vst.msk [vmem:[%s197 + $0xa0] sm:$0x3] %vm4070, %v4028
      %p4072 = scmp.lt.s32.totalorder %s15, 1
      %s4073 = scalar_select %p4072, %s15, 1
      %s4074 = smul.addr %s4073, 41
      %s4075 = smul.addr %s4074, 4
      %s4076 = scalar_lea.vmem %s4, %s4075
      // Predicated region
      $region37: #{conv_call.1} parent=35 // pred_check
        %p4077 = pneg %p122
      $region38: #{conv_call.1} parent=35 // pred_check_branch
        %4079 = sbr.rel (%p4077) target = $region40
      $region39: #{conv_call.1} parent=35 // pred_region
        _
      $region40: #{conv_call.1} parent=35 // pred_fallthru
        _
    $region36: #{conv_call.1} parent=5 // pred_fallthru
      _
    %p4080 = scmp.le.s32.totalorder 2, %s10
    // Predicated region
    $region41: #{conv_call.1} parent=5 // pred_check
      %p4081 = pneg %p4080
    $region42: #{conv_call.1} parent=5 // pred_check_branch
      %4083 = sbr.rel (%p4081) target = $region44
    $region43: #{conv_call.1} parent=5 // pred_region
      %s4084 = ssub.s32 %s10, 2
      // Predicated region
      $region45: #{conv_call.1} parent=43 // pred_check
        %p4085 = pneg %p128
      $region46: #{conv_call.1} parent=43 // pred_check_branch
        %4087 = sbr.rel (%p4085) target = $region48
      $region47: #{conv_call.1} parent=43 // pred_region
        %p4088 = scmp.lt.s32.totalorder %s16, 1
        %s4089 = scalar_select %p4088, %s16, 1
        %s4090 = smul.addr %s4089, 41
        %s4091 = smul.addr %s4090, 4
        %s4092 = scalar_lea.vmem %s4, %s4091
      $region48: #{conv_call.1} parent=43 // pred_fallthru
        _
    $region44: #{conv_call.1} parent=5 // pred_fallthru
      _
  $region6: #{conv_call.1} parent=0 // loop_footer
    %s14 = sadd.s32 1, %s10
  $region7: #{conv_call.1} parent=0 // loop_footer_branch
    %9 = sbr.rel target = $region3
  $region8: #{conv_call.1} parent=0 // loop_exit
    _

</llo_original>
